<compile_context>
chip_gen: v6e
topology: v6e:2x2x1
jax: 0.10.0
libtpu: 0.0.40
codegen_flags: <defaults>
</compile_context>

<pallas_src>
import functools

import numpy as np
import jax
import jax.numpy as jnp
from jax.experimental import pallas as pl
from jax.experimental.pallas import tpu as pltpu


def _bn_relu_conv_kernel(x_ref, gamma_ref, beta_ref, w_ref, s_ref, o_ref, *, eps, kw, half):
    # x_ref:     (C, P)        f32, channel-major flattened input (P = N*H*W)
    # gamma_ref: (C, 1)        f32 BN weight
    # beta_ref:  (C, 1)        f32 BN bias
    # w_ref:     (KW, Cout, C) bf16 per-tap conv weights, w_ref[k] = weight[:, :, 0, k]
    # s_ref:     (KW-1, P, P)  bf16 banded shift+boundary-mask matrices (center tap omitted)
    # o_ref:     (Cout, P)     f32 output
    x = x_ref[...]

    # --- BatchNorm2d (training mode: biased batch stats over N*H*W per channel), folded affine ---
    mean = jnp.mean(x, axis=1, keepdims=True)            # (C, 1)
    xc = x - mean
    var = jnp.mean(xc * xc, axis=1, keepdims=True)       # two-pass, biased (matches PyTorch)
    scale = gamma_ref[...] * jax.lax.rsqrt(var + eps)    # (C, 1)

    # --- ReLU + cast to bf16 for the MXU ---
    y = jnp.maximum(xc * scale + beta_ref[...], 0.0).astype(jnp.bfloat16)   # (C, P)

    # --- Conv2d (1,7), pad (0,3): per tap, shift+mask via banded matmul, then (Cout,C)@(C,P) ---
    acc = None
    for k in range(kw):
        if k == half:
            t = y                                        # center tap: identity shift
        else:
            j = k if k < half else k - 1
            # exact masked shift of y along the flattened spatial axis (values stay bf16-exact)
            t = jnp.dot(y, s_ref[j], preferred_element_type=jnp.float32).astype(jnp.bfloat16)
        p = jnp.dot(w_ref[k], t, preferred_element_type=jnp.float32)        # (Cout, P) f32
        acc = p if acc is None else acc + p

    o_ref[...] = acc


@functools.partial(jax.jit, static_argnames=("eps",))
def batchnorm_relu_conv2d(x_nchw, gamma, beta, weight, eps=1e-3):
    """x_nchw: (N, C, H, W); weight: (Cout, Cin, 1, KW). Returns (N, Cout, H, W)."""
    N, C, H, W = x_nchw.shape
    Cout, Cin, KH, KW = weight.shape
    assert KH == 1 and Cin == C
    P = N * H * W
    half = (KW - 1) // 2

    # Channel-major flattening; for N == 1 the transpose only moves a size-1 dim (bitcast under jit).
    x_cm = jnp.transpose(x_nchw, (1, 0, 2, 3)).reshape(C, P).astype(jnp.float32)

    # Per-tap (Cout, Cin) weight matrices, bf16 for the MXU.
    wk = jnp.transpose(weight[:, :, 0, :], (2, 0, 1)).astype(jnp.bfloat16)   # (KW, Cout, Cin)

    # Banded shift-and-mask matrices (compile-time constants). For tap offset d = k - half:
    #   (y @ S)[c, p] = y[c, p + d] if 0 <= (p % W) + d < W else 0
    # i.e. the 1x7 conv's column shift with zero padding, with cross-row leakage masked out.
    s_np = np.zeros((KW - 1, P, P), np.float32)
    j = 0
    for k in range(KW):
        d = k - half
        if d == 0:
            continue
        for p in range(P):
            c = p % W
            if 0 <= c + d < W:
                s_np[j, p + d, p] = 1.0
        j += 1
    s_bf16 = jnp.asarray(s_np, dtype=jnp.bfloat16)

    kernel = functools.partial(_bn_relu_conv_kernel, eps=float(eps), kw=KW, half=half)

    out_cm = pl.pallas_call(
        kernel,
        out_shape=jax.ShapeDtypeStruct((Cout, P), jnp.float32),
        in_specs=[pl.BlockSpec(memory_space=pltpu.MemorySpace.VMEM)] * 5,
        out_specs=pl.BlockSpec(memory_space=pltpu.MemorySpace.VMEM),
    )(x_cm,
      gamma.reshape(C, 1).astype(jnp.float32),
      beta.reshape(C, 1).astype(jnp.float32),
      wk,
      s_bf16)

    # (Cout, N*H*W) -> (N, Cout, H, W); again a degenerate (bitcast) transpose for N == 1.
    return jnp.transpose(out_cm.reshape(Cout, N, H, W), (1, 0, 2, 3))


if __name__ == "__main__":
    key = jax.random.PRNGKey(0)
    k1, k2, k3, k4 = jax.random.split(key, 4)

    # Shapes implied by the module: x193 is (1, 160, 12, 12); conv is 160 -> 160, kernel (1, 7).
    N, C, H, W = 1, 160, 12, 12
    Cout, KW = 160, 7

    x = jax.random.normal(k1, (N, C, H, W), dtype=jnp.float32)
    gamma = 1.0 + 0.1 * jax.random.normal(k2, (C,), dtype=jnp.float32)
    beta = 0.1 * jax.random.normal(k3, (C,), dtype=jnp.float32)
    weight = jax.random.normal(k4, (Cout, C, 1, KW), dtype=jnp.float32) / jnp.sqrt(C * KW)

    out = jax.block_until_ready(batchnorm_relu_conv2d(x, gamma, beta, weight))

    # Plain-JAX f32 reference of the same forward (training-mode BN -> ReLU -> 1x7 conv, pad 3).
    mean = x.mean(axis=(0, 2, 3), keepdims=True)
    var = x.var(axis=(0, 2, 3), keepdims=True)  # biased, matches PyTorch normalization
    y = (x - mean) / jnp.sqrt(var + 1e-3) * gamma.reshape(1, C, 1, 1) + beta.reshape(1, C, 1, 1)
    y = jnp.maximum(y, 0.0)
    ref = jax.lax.conv_general_dilated(
        y, weight, window_strides=(1, 1), padding=((0, 0), (3, 3)),
        dimension_numbers=("NCHW", "OIHW", "NCHW"))

    assert out.shape == (N, Cout, H, W)
    err = float(jnp.abs(out - ref).max())
    assert jnp.allclose(out, ref, atol=2e-2, rtol=2e-2), err
    print("KERNEL_OK")
</pallas_src>

<mosaic_0001>
module attributes {stable_mosaic.version = 11 : i64} {
  func.func @_bn_relu_conv_kernel(%arg0: memref<160x144xf32, #tpu.memory_space<vmem>>, %arg1: memref<160x1xf32, #tpu.memory_space<vmem>>, %arg2: memref<160x1xf32, #tpu.memory_space<vmem>>, %arg3: memref<7x160x160xbf16, #tpu.memory_space<vmem>>, %arg4: memref<6x144x144xbf16, #tpu.memory_space<vmem>>, %arg5: memref<160x144xf32, #tpu.memory_space<vmem>>) attributes {dimension_semantics = [], scalar_prefetch = 0 : i64, scratch_operands = 0 : i64, tpu.core_type = #tpu.core_type<tc>} {
    %c0 = arith.constant 0 : index
    %c0_0 = arith.constant 0 : index
    %0 = vector.load %arg0[%c0, %c0_0] : memref<160x144xf32, #tpu.memory_space<vmem>>, vector<160x144xf32>
    %cst = arith.constant dense<0.000000e+00> : vector<160xf32>
    %1 = vector.multi_reduction <add>, %0, %cst [1] : vector<160x144xf32> to vector<160xf32>
    %2 = vector.shape_cast %1 : vector<160xf32> to vector<160x1xf32>
    %cst_1 = arith.constant 1.440000e+02 : f32
    %3 = vector.broadcast %cst_1 : f32 to vector<160x1xf32>
    %4 = arith.divf %2, %3 : vector<160x1xf32>
    %5 = vector.broadcast %4 : vector<160x1xf32> to vector<160x144xf32>
    %6 = arith.subf %0, %5 : vector<160x144xf32>
    %7 = arith.mulf %6, %6 : vector<160x144xf32>
    %cst_2 = arith.constant dense<0.000000e+00> : vector<160xf32>
    %8 = vector.multi_reduction <add>, %7, %cst_2 [1] : vector<160x144xf32> to vector<160xf32>
    %9 = vector.shape_cast %8 : vector<160xf32> to vector<160x1xf32>
    %cst_3 = arith.constant 1.440000e+02 : f32
    %10 = vector.broadcast %cst_3 : f32 to vector<160x1xf32>
    %11 = arith.divf %9, %10 : vector<160x1xf32>
    %c0_4 = arith.constant 0 : index
    %c0_5 = arith.constant 0 : index
    %12 = vector.load %arg1[%c0_4, %c0_5] : memref<160x1xf32, #tpu.memory_space<vmem>>, vector<160x1xf32>
    %cst_6 = arith.constant 1.000000e-03 : f32
    %13 = vector.broadcast %cst_6 : f32 to vector<160x1xf32>
    %14 = arith.addf %11, %13 : vector<160x1xf32>
    %15 = math.rsqrt %14 : vector<160x1xf32>
    %16 = arith.mulf %12, %15 : vector<160x1xf32>
    %17 = vector.broadcast %16 : vector<160x1xf32> to vector<160x144xf32>
    %18 = arith.mulf %6, %17 : vector<160x144xf32>
    %c0_7 = arith.constant 0 : index
    %c0_8 = arith.constant 0 : index
    %19 = vector.load %arg2[%c0_7, %c0_8] : memref<160x1xf32, #tpu.memory_space<vmem>>, vector<160x1xf32>
    %20 = vector.broadcast %19 : vector<160x1xf32> to vector<160x144xf32>
    %21 = arith.addf %18, %20 : vector<160x144xf32>
    %cst_9 = arith.constant 0.000000e+00 : f32
    %22 = vector.broadcast %cst_9 : f32 to vector<160x144xf32>
    %23 = arith.maximumf %21, %22 : vector<160x144xf32>
    %24 = arith.truncf %23 : vector<160x144xf32> to vector<160x144xbf16>
    %c0_10 = arith.constant 0 : index
    %c0_11 = arith.constant 0 : index
    %c0_12 = arith.constant 0 : index
    %25 = vector.load %arg4[%c0_10, %c0_11, %c0_12] : memref<6x144x144xbf16, #tpu.memory_space<vmem>>, vector<1x144x144xbf16>
    %26 = vector.shape_cast %25 : vector<1x144x144xbf16> to vector<144x144xbf16>
    %cst_13 = arith.constant dense<0.000000e+00> : vector<160x144xf32>
    %27 = tpu.matmul %24, %26, %cst_13 {dimension_numbers = #tpu.dot_dimension_numbers<[1], [0], [0], [1], [0, 0, 1, 1], [], []>} : vector<160x144xbf16>, vector<144x144xbf16>, vector<160x144xf32> -> vector<160x144xf32>
    %28 = arith.truncf %27 : vector<160x144xf32> to vector<160x144xbf16>
    %c0_14 = arith.constant 0 : index
    %c0_15 = arith.constant 0 : index
    %c0_16 = arith.constant 0 : index
    %29 = vector.load %arg3[%c0_14, %c0_15, %c0_16] : memref<7x160x160xbf16, #tpu.memory_space<vmem>>, vector<1x160x160xbf16>
    %30 = vector.shape_cast %29 : vector<1x160x160xbf16> to vector<160x160xbf16>
    %cst_17 = arith.constant dense<0.000000e+00> : vector<160x144xf32>
    %31 = tpu.matmul %30, %28, %cst_17 {dimension_numbers = #tpu.dot_dimension_numbers<[1], [0], [0], [1], [0, 0, 1, 1], [], []>} : vector<160x160xbf16>, vector<160x144xbf16>, vector<160x144xf32> -> vector<160x144xf32>
    %c1 = arith.constant 1 : index
    %c0_18 = arith.constant 0 : index
    %c0_19 = arith.constant 0 : index
    %32 = vector.load %arg4[%c1, %c0_18, %c0_19] : memref<6x144x144xbf16, #tpu.memory_space<vmem>>, vector<1x144x144xbf16>
    %33 = vector.shape_cast %32 : vector<1x144x144xbf16> to vector<144x144xbf16>
    %cst_20 = arith.constant dense<0.000000e+00> : vector<160x144xf32>
    %34 = tpu.matmul %24, %33, %cst_20 {dimension_numbers = #tpu.dot_dimension_numbers<[1], [0], [0], [1], [0, 0, 1, 1], [], []>} : vector<160x144xbf16>, vector<144x144xbf16>, vector<160x144xf32> -> vector<160x144xf32>
    %35 = arith.truncf %34 : vector<160x144xf32> to vector<160x144xbf16>
    %c1_21 = arith.constant 1 : index
    %c0_22 = arith.constant 0 : index
    %c0_23 = arith.constant 0 : index
    %36 = vector.load %arg3[%c1_21, %c0_22, %c0_23] : memref<7x160x160xbf16, #tpu.memory_space<vmem>>, vector<1x160x160xbf16>
    %37 = vector.shape_cast %36 : vector<1x160x160xbf16> to vector<160x160xbf16>
    %cst_24 = arith.constant dense<0.000000e+00> : vector<160x144xf32>
    %38 = tpu.matmul %37, %35, %cst_24 {dimension_numbers = #tpu.dot_dimension_numbers<[1], [0], [0], [1], [0, 0, 1, 1], [], []>} : vector<160x160xbf16>, vector<160x144xbf16>, vector<160x144xf32> -> vector<160x144xf32>
    %39 = arith.addf %31, %38 : vector<160x144xf32>
    %c2 = arith.constant 2 : index
    %c0_25 = arith.constant 0 : index
    %c0_26 = arith.constant 0 : index
    %40 = vector.load %arg4[%c2, %c0_25, %c0_26] : memref<6x144x144xbf16, #tpu.memory_space<vmem>>, vector<1x144x144xbf16>
    %41 = vector.shape_cast %40 : vector<1x144x144xbf16> to vector<144x144xbf16>
    %cst_27 = arith.constant dense<0.000000e+00> : vector<160x144xf32>
    %42 = tpu.matmul %24, %41, %cst_27 {dimension_numbers = #tpu.dot_dimension_numbers<[1], [0], [0], [1], [0, 0, 1, 1], [], []>} : vector<160x144xbf16>, vector<144x144xbf16>, vector<160x144xf32> -> vector<160x144xf32>
    %43 = arith.truncf %42 : vector<160x144xf32> to vector<160x144xbf16>
    %c2_28 = arith.constant 2 : index
    %c0_29 = arith.constant 0 : index
    %c0_30 = arith.constant 0 : index
    %44 = vector.load %arg3[%c2_28, %c0_29, %c0_30] : memref<7x160x160xbf16, #tpu.memory_space<vmem>>, vector<1x160x160xbf16>
    %45 = vector.shape_cast %44 : vector<1x160x160xbf16> to vector<160x160xbf16>
    %cst_31 = arith.constant dense<0.000000e+00> : vector<160x144xf32>
    %46 = tpu.matmul %45, %43, %cst_31 {dimension_numbers = #tpu.dot_dimension_numbers<[1], [0], [0], [1], [0, 0, 1, 1], [], []>} : vector<160x160xbf16>, vector<160x144xbf16>, vector<160x144xf32> -> vector<160x144xf32>
    %47 = arith.addf %39, %46 : vector<160x144xf32>
    %c3 = arith.constant 3 : index
    %c0_32 = arith.constant 0 : index
    %c0_33 = arith.constant 0 : index
    %48 = vector.load %arg3[%c3, %c0_32, %c0_33] : memref<7x160x160xbf16, #tpu.memory_space<vmem>>, vector<1x160x160xbf16>
    %49 = vector.shape_cast %48 : vector<1x160x160xbf16> to vector<160x160xbf16>
    %cst_34 = arith.constant dense<0.000000e+00> : vector<160x144xf32>
    %50 = tpu.matmul %49, %24, %cst_34 {dimension_numbers = #tpu.dot_dimension_numbers<[1], [0], [0], [1], [0, 0, 1, 1], [], []>} : vector<160x160xbf16>, vector<160x144xbf16>, vector<160x144xf32> -> vector<160x144xf32>
    %51 = arith.addf %47, %50 : vector<160x144xf32>
    %c3_35 = arith.constant 3 : index
    %c0_36 = arith.constant 0 : index
    %c0_37 = arith.constant 0 : index
    %52 = vector.load %arg4[%c3_35, %c0_36, %c0_37] : memref<6x144x144xbf16, #tpu.memory_space<vmem>>, vector<1x144x144xbf16>
    %53 = vector.shape_cast %52 : vector<1x144x144xbf16> to vector<144x144xbf16>
    %cst_38 = arith.constant dense<0.000000e+00> : vector<160x144xf32>
    %54 = tpu.matmul %24, %53, %cst_38 {dimension_numbers = #tpu.dot_dimension_numbers<[1], [0], [0], [1], [0, 0, 1, 1], [], []>} : vector<160x144xbf16>, vector<144x144xbf16>, vector<160x144xf32> -> vector<160x144xf32>
    %55 = arith.truncf %54 : vector<160x144xf32> to vector<160x144xbf16>
    %c4 = arith.constant 4 : index
    %c0_39 = arith.constant 0 : index
    %c0_40 = arith.constant 0 : index
    %56 = vector.load %arg3[%c4, %c0_39, %c0_40] : memref<7x160x160xbf16, #tpu.memory_space<vmem>>, vector<1x160x160xbf16>
    %57 = vector.shape_cast %56 : vector<1x160x160xbf16> to vector<160x160xbf16>
    %cst_41 = arith.constant dense<0.000000e+00> : vector<160x144xf32>
    %58 = tpu.matmul %57, %55, %cst_41 {dimension_numbers = #tpu.dot_dimension_numbers<[1], [0], [0], [1], [0, 0, 1, 1], [], []>} : vector<160x160xbf16>, vector<160x144xbf16>, vector<160x144xf32> -> vector<160x144xf32>
    %59 = arith.addf %51, %58 : vector<160x144xf32>
    %c4_42 = arith.constant 4 : index
    %c0_43 = arith.constant 0 : index
    %c0_44 = arith.constant 0 : index
    %60 = vector.load %arg4[%c4_42, %c0_43, %c0_44] : memref<6x144x144xbf16, #tpu.memory_space<vmem>>, vector<1x144x144xbf16>
    %61 = vector.shape_cast %60 : vector<1x144x144xbf16> to vector<144x144xbf16>
    %cst_45 = arith.constant dense<0.000000e+00> : vector<160x144xf32>
    %62 = tpu.matmul %24, %61, %cst_45 {dimension_numbers = #tpu.dot_dimension_numbers<[1], [0], [0], [1], [0, 0, 1, 1], [], []>} : vector<160x144xbf16>, vector<144x144xbf16>, vector<160x144xf32> -> vector<160x144xf32>
    %63 = arith.truncf %62 : vector<160x144xf32> to vector<160x144xbf16>
    %c5 = arith.constant 5 : index
    %c0_46 = arith.constant 0 : index
    %c0_47 = arith.constant 0 : index
    %64 = vector.load %arg3[%c5, %c0_46, %c0_47] : memref<7x160x160xbf16, #tpu.memory_space<vmem>>, vector<1x160x160xbf16>
    %65 = vector.shape_cast %64 : vector<1x160x160xbf16> to vector<160x160xbf16>
    %cst_48 = arith.constant dense<0.000000e+00> : vector<160x144xf32>
    %66 = tpu.matmul %65, %63, %cst_48 {dimension_numbers = #tpu.dot_dimension_numbers<[1], [0], [0], [1], [0, 0, 1, 1], [], []>} : vector<160x160xbf16>, vector<160x144xbf16>, vector<160x144xf32> -> vector<160x144xf32>
    %67 = arith.addf %59, %66 : vector<160x144xf32>
    %c5_49 = arith.constant 5 : index
    %c0_50 = arith.constant 0 : index
    %c0_51 = arith.constant 0 : index
    %68 = vector.load %arg4[%c5_49, %c0_50, %c0_51] : memref<6x144x144xbf16, #tpu.memory_space<vmem>>, vector<1x144x144xbf16>
    %69 = vector.shape_cast %68 : vector<1x144x144xbf16> to vector<144x144xbf16>
    %cst_52 = arith.constant dense<0.000000e+00> : vector<160x144xf32>
    %70 = tpu.matmul %24, %69, %cst_52 {dimension_numbers = #tpu.dot_dimension_numbers<[1], [0], [0], [1], [0, 0, 1, 1], [], []>} : vector<160x144xbf16>, vector<144x144xbf16>, vector<160x144xf32> -> vector<160x144xf32>
    %71 = arith.truncf %70 : vector<160x144xf32> to vector<160x144xbf16>
    %c6 = arith.constant 6 : index
    %c0_53 = arith.constant 0 : index
    %c0_54 = arith.constant 0 : index
    %72 = vector.load %arg3[%c6, %c0_53, %c0_54] : memref<7x160x160xbf16, #tpu.memory_space<vmem>>, vector<1x160x160xbf16>
    %73 = vector.shape_cast %72 : vector<1x160x160xbf16> to vector<160x160xbf16>
    %cst_55 = arith.constant dense<0.000000e+00> : vector<160x144xf32>
    %74 = tpu.matmul %73, %71, %cst_55 {dimension_numbers = #tpu.dot_dimension_numbers<[1], [0], [0], [1], [0, 0, 1, 1], [], []>} : vector<160x160xbf16>, vector<160x144xbf16>, vector<160x144xf32> -> vector<160x144xf32>
    %75 = arith.addf %67, %74 : vector<160x144xf32>
    %c0_56 = arith.constant 0 : index
    %c0_57 = arith.constant 0 : index
    %76 = vector.load %arg5[%c0_56, %c0_57] : memref<160x144xf32, #tpu.memory_space<vmem>>, vector<160x144xf32>
    tpu.vector_store %arg5[%c0_56, %c0_57], %75 {strides = array<i32>} : memref<160x144xf32, #tpu.memory_space<vmem>>, vector<160x144xf32>,
    return
  }
}

</mosaic_0001>

<llo_original>
// kernel: batchnorm_relu_conv2d.1
$region0: #{batchnorm_relu_conv2d.1}
  #allocation0 [shape = 'u32[]', space=smem, size = 0x4, offset = 0x4, fixed_abs, tag = 'smem constant byte address 0x4 - core index']
  #allocation1 [shape = 'u32[144,128]{1,0:T(1,128)}', space=vmem, size = 0x12000, scoped, tag = 'internal scratch']
  %s0 = inlined_call_operand.vmem [shape: f32[160,144], index: 0, kind: input, shape index: {}]
  %s1 = inlined_call_operand.vmem [shape: f32[160,1], index: 1, kind: input, shape index: {}]
  %s2 = inlined_call_operand.vmem [shape: f32[160,1], index: 2, kind: input, shape index: {}]
  %s3 = inlined_call_operand.vmem [shape: bf16[7,160,160], index: 3, kind: input, shape index: {}]
  %s4 = inlined_call_operand.vmem [shape: bf16[6,144,144], index: 4, kind: input, shape index: {}]
  %s5 = inlined_call_operand.vmem [shape: f32[160,144], index: 5, kind: output, shape index: {}]
  %s6 = sld [smem:[#allocation0]]
  $region30: #{batchnorm_relu_conv2d.1} parent=0
    _
  %s8 = ssub.s32 1, %s6
  %s9 = scalar_select 0, %s8, %s6
  // Predicated region
  $region2: #{batchnorm_relu_conv2d.1} parent=0 // pred_check
    _
  $region3: #{batchnorm_relu_conv2d.1} parent=0 // pred_check_branch
    %11 = sbr.rel (0) target = $region5
  $region4: #{batchnorm_relu_conv2d.1} parent=0 // pred_region
    _
  $region5: #{batchnorm_relu_conv2d.1} parent=0 // pred_fallthru
    _
  // Predicated region
  $region6: #{batchnorm_relu_conv2d.1} parent=0 // pred_check
    _
  $region7: #{batchnorm_relu_conv2d.1} parent=0 // pred_check_branch
    %13 = sbr.rel (0) target = $region9
  $region8: #{batchnorm_relu_conv2d.1} parent=0 // pred_region
    _
  $region9: #{batchnorm_relu_conv2d.1} parent=0 // pred_fallthru
    _
  // Predicated region
  $region10: #{batchnorm_relu_conv2d.1} parent=0 // pred_check
    _
  $region11: #{batchnorm_relu_conv2d.1} parent=0 // pred_check_branch
    %15 = sbr.rel (0) target = $region13
  $region12: #{batchnorm_relu_conv2d.1} parent=0 // pred_region
    _
  $region13: #{batchnorm_relu_conv2d.1} parent=0 // pred_fallthru
    _
  // Predicated region
  $region14: #{batchnorm_relu_conv2d.1} parent=0 // pred_check
    _
  $region15: #{batchnorm_relu_conv2d.1} parent=0 // pred_check_branch
    %17 = sbr.rel (0) target = $region17
  $region16: #{batchnorm_relu_conv2d.1} parent=0 // pred_region
    _
  $region17: #{batchnorm_relu_conv2d.1} parent=0 // pred_fallthru
    _
  // Predicated region
  $region18: #{batchnorm_relu_conv2d.1} parent=0 // pred_check
    _
  $region19: #{batchnorm_relu_conv2d.1} parent=0 // pred_check_branch
    %19 = sbr.rel (0) target = $region21
  $region20: #{batchnorm_relu_conv2d.1} parent=0 // pred_region
    _
  $region21: #{batchnorm_relu_conv2d.1} parent=0 // pred_fallthru
    _
  %v21 = vld [vmem:[%s0] sm:$0xff]
  %v22 = vld [vmem:[%s0 + $0x8] sm:$0xff]
  %v23 = vld [vmem:[%s0 + $0x10] sm:$0xff]
  %v24 = vld [vmem:[%s0 + $0x18] sm:$0xff]
  %v25 = vld [vmem:[%s0 + $0x20] sm:$0xff]
  %v26 = vld [vmem:[%s0 + $0x28] sm:$0xff]
  %v27 = vld [vmem:[%s0 + $0x30] sm:$0xff]
  %v28 = vld [vmem:[%s0 + $0x38] sm:$0xff]
  %v29 = vld [vmem:[%s0 + $0x40] sm:$0xff]
  %v30 = vld [vmem:[%s0 + $0x48] sm:$0xff]
  %v31 = vld [vmem:[%s0 + $0x50] sm:$0xff]
  %v32 = vld [vmem:[%s0 + $0x58] sm:$0xff]
  %v33 = vld [vmem:[%s0 + $0x60] sm:$0xff]
  %v34 = vld [vmem:[%s0 + $0x68] sm:$0xff]
  %v35 = vld [vmem:[%s0 + $0x70] sm:$0xff]
  %v36 = vld [vmem:[%s0 + $0x78] sm:$0xff]
  %v37 = vld [vmem:[%s0 + $0x80] sm:$0xff]
  %v38 = vld [vmem:[%s0 + $0x88] sm:$0xff]
  %v39 = vld [vmem:[%s0 + $0x90] sm:$0xff]
  %v40 = vld [vmem:[%s0 + $0x98] sm:$0xff]
  %v41 = vld [vmem:[%s0 + $0xa0] sm:$0xff]
  %v42 = vld [vmem:[%s0 + $0xa8] sm:$0xff]
  %v43 = vld [vmem:[%s0 + $0xb0] sm:$0xff]
  %v44 = vld [vmem:[%s0 + $0xb8] sm:$0xff]
  %v45 = vld [vmem:[%s0 + $0xc0] sm:$0xff]
  %v46 = vld [vmem:[%s0 + $0xc8] sm:$0xff]
  %v47 = vld [vmem:[%s0 + $0xd0] sm:$0xff]
  %v48 = vld [vmem:[%s0 + $0xd8] sm:$0xff]
  %v49 = vld [vmem:[%s0 + $0xe0] sm:$0xff]
  %v50 = vld [vmem:[%s0 + $0xe8] sm:$0xff]
  %v51 = vld [vmem:[%s0 + $0xf0] sm:$0xff]
  %v52 = vld [vmem:[%s0 + $0xf8] sm:$0xff]
  %v53 = vld [vmem:[%s0 + $0x100] sm:$0xff]
  %v54 = vld [vmem:[%s0 + $0x108] sm:$0xff]
  %v55 = vld [vmem:[%s0 + $0x110] sm:$0xff]
  %v56 = vld [vmem:[%s0 + $0x118] sm:$0xff]
  %v57 = vld [vmem:[%s0 + $0x120] sm:$0xff]
  %v58 = vld [vmem:[%s0 + $0x128] sm:$0xff]
  %v59 = vld [vmem:[%s0 + $0x130] sm:$0xff]
  %v60 = vld [vmem:[%s0 + $0x138] sm:$0xff]
  %vm61 = vcmask 130048
  %v62 = vsel %vm61, %v22, 0.0
  %v63 = vadd.f32 %v21, %v62
  %64 = vadd.xlane.f32.xlu0 %v63
  %v65 = vpop.xlane.xlu0 %64
  %v66 = vsel %vm61, %v24, 0.0
  %v67 = vadd.f32 %v23, %v66
  %68 = vadd.xlane.f32.xlu0 %v67
  %v69 = vpop.xlane.xlu0 %68
  %v70 = vsel %vm61, %v26, 0.0
  %v71 = vadd.f32 %v25, %v70
  %72 = vadd.xlane.f32.xlu0 %v71
  %v73 = vpop.xlane.xlu0 %72
  %v74 = vsel %vm61, %v28, 0.0
  %v75 = vadd.f32 %v27, %v74
  %76 = vadd.xlane.f32.xlu0 %v75
  %v77 = vpop.xlane.xlu0 %76
  %v78 = vsel %vm61, %v30, 0.0
  %v79 = vadd.f32 %v29, %v78
  %80 = vadd.xlane.f32.xlu0 %v79
  %v81 = vpop.xlane.xlu0 %80
  %v82 = vsel %vm61, %v32, 0.0
  %v83 = vadd.f32 %v31, %v82
  %84 = vadd.xlane.f32.xlu0 %v83
  %v85 = vpop.xlane.xlu0 %84
  %v86 = vsel %vm61, %v34, 0.0
  %v87 = vadd.f32 %v33, %v86
  %88 = vadd.xlane.f32.xlu0 %v87
  %v89 = vpop.xlane.xlu0 %88
  %v90 = vsel %vm61, %v36, 0.0
  %v91 = vadd.f32 %v35, %v90
  %92 = vadd.xlane.f32.xlu0 %v91
  %v93 = vpop.xlane.xlu0 %92
  %v94 = vsel %vm61, %v38, 0.0
  %v95 = vadd.f32 %v37, %v94
  %96 = vadd.xlane.f32.xlu0 %v95
  %v97 = vpop.xlane.xlu0 %96
  %v98 = vsel %vm61, %v40, 0.0
  %v99 = vadd.f32 %v39, %v98
  %100 = vadd.xlane.f32.xlu0 %v99
  %v101 = vpop.xlane.xlu0 %100
  %v102 = vsel %vm61, %v42, 0.0
  %v103 = vadd.f32 %v41, %v102
  %104 = vadd.xlane.f32.xlu0 %v103
  %v105 = vpop.xlane.xlu0 %104
  %v106 = vsel %vm61, %v44, 0.0
  %v107 = vadd.f32 %v43, %v106
  %108 = vadd.xlane.f32.xlu0 %v107
  %v109 = vpop.xlane.xlu0 %108
  %v110 = vsel %vm61, %v46, 0.0
  %v111 = vadd.f32 %v45, %v110
  %112 = vadd.xlane.f32.xlu0 %v111
  %v113 = vpop.xlane.xlu0 %112
  %v114 = vsel %vm61, %v48, 0.0
  %v115 = vadd.f32 %v47, %v114
  %116 = vadd.xlane.f32.xlu0 %v115
  %v117 = vpop.xlane.xlu0 %116
  %v118 = vsel %vm61, %v50, 0.0
  %v119 = vadd.f32 %v49, %v118
  %120 = vadd.xlane.f32.xlu0 %v119
  %v121 = vpop.xlane.xlu0 %120
  %v122 = vsel %vm61, %v52, 0.0
  %v123 = vadd.f32 %v51, %v122
  %124 = vadd.xlane.f32.xlu0 %v123
  %v125 = vpop.xlane.xlu0 %124
  %v126 = vsel %vm61, %v54, 0.0
  %v127 = vadd.f32 %v53, %v126
  %128 = vadd.xlane.f32.xlu0 %v127
  %v129 = vpop.xlane.xlu0 %128
  %v130 = vsel %vm61, %v56, 0.0
  %v131 = vadd.f32 %v55, %v130
  %132 = vadd.xlane.f32.xlu0 %v131
  %v133 = vpop.xlane.xlu0 %132
  %v134 = vsel %vm61, %v58, 0.0
  %v135 = vadd.f32 %v57, %v134
  %136 = vadd.xlane.f32.xlu0 %v135
  %v137 = vpop.xlane.xlu0 %136
  %v138 = vsel %vm61, %v60, 0.0
  %v139 = vadd.f32 %v59, %v138
  %140 = vadd.xlane.f32.xlu0 %v139
  %v141 = vpop.xlane.xlu0 %140
  %v142 = vrcp.pop 144.0
  %v143 = vmul.f32 %v65, %v142
  %v144 = vmul.f32 %v69, %v142
  %v145 = vmul.f32 %v73, %v142
  %v146 = vmul.f32 %v77, %v142
  %v147 = vmul.f32 %v81, %v142
  %v148 = vmul.f32 %v85, %v142
  %v149 = vmul.f32 %v89, %v142
  %v150 = vmul.f32 %v93, %v142
  %v151 = vmul.f32 %v97, %v142
  %v152 = vmul.f32 %v101, %v142
  %v153 = vmul.f32 %v105, %v142
  %v154 = vmul.f32 %v109, %v142
  %v155 = vmul.f32 %v113, %v142
  %v156 = vmul.f32 %v117, %v142
  %v157 = vmul.f32 %v121, %v142
  %v158 = vmul.f32 %v125, %v142
  %v159 = vmul.f32 %v129, %v142
  %v160 = vmul.f32 %v133, %v142
  %v161 = vmul.f32 %v137, %v142
  %v162 = vmul.f32 %v141, %v142
  %v163 = vsub.f32 %v21, %v143
  %v164 = vsub.f32 %v22, %v143
  %v165 = vsub.f32 %v23, %v144
  %v166 = vsub.f32 %v24, %v144
  %v167 = vsub.f32 %v25, %v145
  %v168 = vsub.f32 %v26, %v145
  %v169 = vsub.f32 %v27, %v146
  %v170 = vsub.f32 %v28, %v146
  %v171 = vsub.f32 %v29, %v147
  %v172 = vsub.f32 %v30, %v147
  %v173 = vsub.f32 %v31, %v148
  %v174 = vsub.f32 %v32, %v148
  %v175 = vsub.f32 %v33, %v149
  %v176 = vsub.f32 %v34, %v149
  %v177 = vsub.f32 %v35, %v150
  %v178 = vsub.f32 %v36, %v150
  %v179 = vsub.f32 %v37, %v151
  %v180 = vsub.f32 %v38, %v151
  %v181 = vsub.f32 %v39, %v152
  %v182 = vsub.f32 %v40, %v152
  %v183 = vsub.f32 %v41, %v153
  %v184 = vsub.f32 %v42, %v153
  %v185 = vsub.f32 %v43, %v154
  %v186 = vsub.f32 %v44, %v154
  %v187 = vsub.f32 %v45, %v155
  %v188 = vsub.f32 %v46, %v155
  %v189 = vsub.f32 %v47, %v156
  %v190 = vsub.f32 %v48, %v156
  %v191 = vsub.f32 %v49, %v157
  %v192 = vsub.f32 %v50, %v157
  %v193 = vsub.f32 %v51, %v158
  %v194 = vsub.f32 %v52, %v158
  %v195 = vsub.f32 %v53, %v159
  %v196 = vsub.f32 %v54, %v159
  %v197 = vsub.f32 %v55, %v160
  %v198 = vsub.f32 %v56, %v160
  %v199 = vsub.f32 %v57, %v161
  %v200 = vsub.f32 %v58, %v161
  %v201 = vsub.f32 %v59, %v162
  %v202 = vsub.f32 %v60, %v162
  %v203 = vmul.f32 %v163, %v163
  %v204 = vmul.f32 %v164, %v164
  %v205 = vmul.f32 %v165, %v165
  %v206 = vmul.f32 %v166, %v166
  %v207 = vmul.f32 %v167, %v167
  %v208 = vmul.f32 %v168, %v168
  %v209 = vmul.f32 %v169, %v169
  %v210 = vmul.f32 %v170, %v170
  %v211 = vmul.f32 %v171, %v171
  %v212 = vmul.f32 %v172, %v172
  %v213 = vmul.f32 %v173, %v173
  %v214 = vmul.f32 %v174, %v174
  %v215 = vmul.f32 %v175, %v175
  %v216 = vmul.f32 %v176, %v176
  %v217 = vmul.f32 %v177, %v177
  %v218 = vmul.f32 %v178, %v178
  %v219 = vmul.f32 %v179, %v179
  %v220 = vmul.f32 %v180, %v180
  %v221 = vmul.f32 %v181, %v181
  %v222 = vmul.f32 %v182, %v182
  %v223 = vmul.f32 %v183, %v183
  %v224 = vmul.f32 %v184, %v184
  %v225 = vmul.f32 %v185, %v185
  %v226 = vmul.f32 %v186, %v186
  %v227 = vmul.f32 %v187, %v187
  %v228 = vmul.f32 %v188, %v188
  %v229 = vmul.f32 %v189, %v189
  %v230 = vmul.f32 %v190, %v190
  %v231 = vmul.f32 %v191, %v191
  %v232 = vmul.f32 %v192, %v192
  %v233 = vmul.f32 %v193, %v193
  %v234 = vmul.f32 %v194, %v194
  %v235 = vmul.f32 %v195, %v195
  %v236 = vmul.f32 %v196, %v196
  %v237 = vmul.f32 %v197, %v197
  %v238 = vmul.f32 %v198, %v198
  %v239 = vmul.f32 %v199, %v199
  %v240 = vmul.f32 %v200, %v200
  %v241 = vmul.f32 %v201, %v201
  %v242 = vmul.f32 %v202, %v202
  %v243 = vsel %vm61, %v204, 0.0
  %v244 = vadd.f32 %v203, %v243
  %245 = vadd.xlane.f32.xlu0 %v244
  %v246 = vpop.xlane.xlu0 %245
  %v247 = vsel %vm61, %v206, 0.0
  %v248 = vadd.f32 %v205, %v247
  %249 = vadd.xlane.f32.xlu0 %v248
  %v250 = vpop.xlane.xlu0 %249
  %v251 = vsel %vm61, %v208, 0.0
  %v252 = vadd.f32 %v207, %v251
  %253 = vadd.xlane.f32.xlu0 %v252
  %v254 = vpop.xlane.xlu0 %253
  %v255 = vsel %vm61, %v210, 0.0
  %v256 = vadd.f32 %v209, %v255
  %257 = vadd.xlane.f32.xlu0 %v256
  %v258 = vpop.xlane.xlu0 %257
  %v259 = vsel %vm61, %v212, 0.0
  %v260 = vadd.f32 %v211, %v259
  %261 = vadd.xlane.f32.xlu0 %v260
  %v262 = vpop.xlane.xlu0 %261
  %v263 = vsel %vm61, %v214, 0.0
  %v264 = vadd.f32 %v213, %v263
  %265 = vadd.xlane.f32.xlu0 %v264
  %v266 = vpop.xlane.xlu0 %265
  %v267 = vsel %vm61, %v216, 0.0
  %v268 = vadd.f32 %v215, %v267
  %269 = vadd.xlane.f32.xlu0 %v268
  %v270 = vpop.xlane.xlu0 %269
  %v271 = vsel %vm61, %v218, 0.0
  %v272 = vadd.f32 %v217, %v271
  %273 = vadd.xlane.f32.xlu0 %v272
  %v274 = vpop.xlane.xlu0 %273
  %v275 = vsel %vm61, %v220, 0.0
  %v276 = vadd.f32 %v219, %v275
  %277 = vadd.xlane.f32.xlu0 %v276
  %v278 = vpop.xlane.xlu0 %277
  %v279 = vsel %vm61, %v222, 0.0
  %v280 = vadd.f32 %v221, %v279
  %281 = vadd.xlane.f32.xlu0 %v280
  %v282 = vpop.xlane.xlu0 %281
  %v283 = vsel %vm61, %v224, 0.0
  %v284 = vadd.f32 %v223, %v283
  %285 = vadd.xlane.f32.xlu0 %v284
  %v286 = vpop.xlane.xlu0 %285
  %v287 = vsel %vm61, %v226, 0.0
  %v288 = vadd.f32 %v225, %v287
  %289 = vadd.xlane.f32.xlu0 %v288
  %v290 = vpop.xlane.xlu0 %289
  %v291 = vsel %vm61, %v228, 0.0
  %v292 = vadd.f32 %v227, %v291
  %293 = vadd.xlane.f32.xlu0 %v292
  %v294 = vpop.xlane.xlu0 %293
  %v295 = vsel %vm61, %v230, 0.0
  %v296 = vadd.f32 %v229, %v295
  %297 = vadd.xlane.f32.xlu0 %v296
  %v298 = vpop.xlane.xlu0 %297
  %v299 = vsel %vm61, %v232, 0.0
  %v300 = vadd.f32 %v231, %v299
  %301 = vadd.xlane.f32.xlu0 %v300
  %v302 = vpop.xlane.xlu0 %301
  %v303 = vsel %vm61, %v234, 0.0
  %v304 = vadd.f32 %v233, %v303
  %305 = vadd.xlane.f32.xlu0 %v304
  %v306 = vpop.xlane.xlu0 %305
  %v307 = vsel %vm61, %v236, 0.0
  %v308 = vadd.f32 %v235, %v307
  %309 = vadd.xlane.f32.xlu0 %v308
  %v310 = vpop.xlane.xlu0 %309
  %v311 = vsel %vm61, %v238, 0.0
  %v312 = vadd.f32 %v237, %v311
  %313 = vadd.xlane.f32.xlu0 %v312
  %v314 = vpop.xlane.xlu0 %313
  %v315 = vsel %vm61, %v240, 0.0
  %v316 = vadd.f32 %v239, %v315
  %317 = vadd.xlane.f32.xlu0 %v316
  %v318 = vpop.xlane.xlu0 %317
  %v319 = vsel %vm61, %v242, 0.0
  %v320 = vadd.f32 %v241, %v319
  %321 = vadd.xlane.f32.xlu0 %v320
  %v322 = vpop.xlane.xlu0 %321
  %v323 = vmul.f32 %v246, %v142
  %v324 = vmul.f32 %v250, %v142
  %v325 = vmul.f32 %v254, %v142
  %v326 = vmul.f32 %v258, %v142
  %v327 = vmul.f32 %v262, %v142
  %v328 = vmul.f32 %v266, %v142
  %v329 = vmul.f32 %v270, %v142
  %v330 = vmul.f32 %v274, %v142
  %v331 = vmul.f32 %v278, %v142
  %v332 = vmul.f32 %v282, %v142
  %v333 = vmul.f32 %v286, %v142
  %v334 = vmul.f32 %v290, %v142
  %v335 = vmul.f32 %v294, %v142
  %v336 = vmul.f32 %v298, %v142
  %v337 = vmul.f32 %v302, %v142
  %v338 = vmul.f32 %v306, %v142
  %v339 = vmul.f32 %v310, %v142
  %v340 = vmul.f32 %v314, %v142
  %v341 = vmul.f32 %v318, %v142
  %v342 = vmul.f32 %v322, %v142
  %v343 = vld [vmem:[%s1] sm:$0xff]
  %v344 = vld [vmem:[%s1 + $0x8] sm:$0xff]
  %v345 = vld [vmem:[%s1 + $0x10] sm:$0xff]
  %v346 = vld [vmem:[%s1 + $0x18] sm:$0xff]
  %v347 = vld [vmem:[%s1 + $0x20] sm:$0xff]
  %v348 = vld [vmem:[%s1 + $0x28] sm:$0xff]
  %v349 = vld [vmem:[%s1 + $0x30] sm:$0xff]
  %v350 = vld [vmem:[%s1 + $0x38] sm:$0xff]
  %v351 = vld [vmem:[%s1 + $0x40] sm:$0xff]
  %v352 = vld [vmem:[%s1 + $0x48] sm:$0xff]
  %v353 = vld [vmem:[%s1 + $0x50] sm:$0xff]
  %v354 = vld [vmem:[%s1 + $0x58] sm:$0xff]
  %v355 = vld [vmem:[%s1 + $0x60] sm:$0xff]
  %v356 = vld [vmem:[%s1 + $0x68] sm:$0xff]
  %v357 = vld [vmem:[%s1 + $0x70] sm:$0xff]
  %v358 = vld [vmem:[%s1 + $0x78] sm:$0xff]
  %v359 = vld [vmem:[%s1 + $0x80] sm:$0xff]
  %v360 = vld [vmem:[%s1 + $0x88] sm:$0xff]
  %v361 = vld [vmem:[%s1 + $0x90] sm:$0xff]
  %v362 = vld [vmem:[%s1 + $0x98] sm:$0xff]
  %v363 = vadd.f32 %v323, 0.001
  %v364 = vadd.f32 %v324, 0.001
  %v365 = vadd.f32 %v325, 0.001
  %v366 = vadd.f32 %v326, 0.001
  %v367 = vadd.f32 %v327, 0.001
  %v368 = vadd.f32 %v328, 0.001
  %v369 = vadd.f32 %v329, 0.001
  %v370 = vadd.f32 %v330, 0.001
  %v371 = vadd.f32 %v331, 0.001
  %v372 = vadd.f32 %v332, 0.001
  %v373 = vadd.f32 %v333, 0.001
  %v374 = vadd.f32 %v334, 0.001
  %v375 = vadd.f32 %v335, 0.001
  %v376 = vadd.f32 %v336, 0.001
  %v377 = vadd.f32 %v337, 0.001
  %v378 = vadd.f32 %v338, 0.001
  %v379 = vadd.f32 %v339, 0.001
  %v380 = vadd.f32 %v340, 0.001
  %v381 = vadd.f32 %v341, 0.001
  %v382 = vadd.f32 %v342, 0.001
  %v383 = vrsqrt.pop %v363
  %v384 = vrsqrt.pop %v364
  %v385 = vrsqrt.pop %v365
  %v386 = vrsqrt.pop %v366
  %v387 = vrsqrt.pop %v367
  %v388 = vrsqrt.pop %v368
  %v389 = vrsqrt.pop %v369
  %v390 = vrsqrt.pop %v370
  %v391 = vrsqrt.pop %v371
  %v392 = vrsqrt.pop %v372
  %v393 = vrsqrt.pop %v373
  %v394 = vrsqrt.pop %v374
  %v395 = vrsqrt.pop %v375
  %v396 = vrsqrt.pop %v376
  %v397 = vrsqrt.pop %v377
  %v398 = vrsqrt.pop %v378
  %v399 = vrsqrt.pop %v379
  %v400 = vrsqrt.pop %v380
  %v401 = vrsqrt.pop %v381
  %v402 = vrsqrt.pop %v382
  %v403 = vmul.f32 %v343, %v383
  %v404 = vmul.f32 %v344, %v384
  %v405 = vmul.f32 %v345, %v385
  %v406 = vmul.f32 %v346, %v386
  %v407 = vmul.f32 %v347, %v387
  %v408 = vmul.f32 %v348, %v388
  %v409 = vmul.f32 %v349, %v389
  %v410 = vmul.f32 %v350, %v390
  %v411 = vmul.f32 %v351, %v391
  %v412 = vmul.f32 %v352, %v392
  %v413 = vmul.f32 %v353, %v393
  %v414 = vmul.f32 %v354, %v394
  %v415 = vmul.f32 %v355, %v395
  %v416 = vmul.f32 %v356, %v396
  %v417 = vmul.f32 %v357, %v397
  %v418 = vmul.f32 %v358, %v398
  %v419 = vmul.f32 %v359, %v399
  %v420 = vmul.f32 %v360, %v400
  %v421 = vmul.f32 %v361, %v401
  %v422 = vmul.f32 %v362, %v402
  %424 = vset.pattern.permute.xlu0 0
  %425 = vperm.xlu0 %424, %v403
  %v426 = vpop.permute.xlu0 %425
  %429 = vset.pattern.permute.xlu0 0
  %430 = vperm.xlu0 %429, %v404
  %v431 = vpop.permute.xlu0 %430
  %434 = vset.pattern.permute.xlu0 0
  %435 = vperm.xlu0 %434, %v405
  %v436 = vpop.permute.xlu0 %435
  %439 = vset.pattern.permute.xlu0 0
  %440 = vperm.xlu0 %439, %v406
  %v441 = vpop.permute.xlu0 %440
  %444 = vset.pattern.permute.xlu0 0
  %445 = vperm.xlu0 %444, %v407
  %v446 = vpop.permute.xlu0 %445
  %449 = vset.pattern.permute.xlu0 0
  %450 = vperm.xlu0 %449, %v408
  %v451 = vpop.permute.xlu0 %450
  %454 = vset.pattern.permute.xlu0 0
  %455 = vperm.xlu0 %454, %v409
  %v456 = vpop.permute.xlu0 %455
  %459 = vset.pattern.permute.xlu0 0
  %460 = vperm.xlu0 %459, %v410
  %v461 = vpop.permute.xlu0 %460
  %464 = vset.pattern.permute.xlu0 0
  %465 = vperm.xlu0 %464, %v411
  %v466 = vpop.permute.xlu0 %465
  %469 = vset.pattern.permute.xlu0 0
  %470 = vperm.xlu0 %469, %v412
  %v471 = vpop.permute.xlu0 %470
  %474 = vset.pattern.permute.xlu0 0
  %475 = vperm.xlu0 %474, %v413
  %v476 = vpop.permute.xlu0 %475
  %479 = vset.pattern.permute.xlu0 0
  %480 = vperm.xlu0 %479, %v414
  %v481 = vpop.permute.xlu0 %480
  %484 = vset.pattern.permute.xlu0 0
  %485 = vperm.xlu0 %484, %v415
  %v486 = vpop.permute.xlu0 %485
  %489 = vset.pattern.permute.xlu0 0
  %490 = vperm.xlu0 %489, %v416
  %v491 = vpop.permute.xlu0 %490
  %494 = vset.pattern.permute.xlu0 0
  %495 = vperm.xlu0 %494, %v417
  %v496 = vpop.permute.xlu0 %495
  %499 = vset.pattern.permute.xlu0 0
  %500 = vperm.xlu0 %499, %v418
  %v501 = vpop.permute.xlu0 %500
  %504 = vset.pattern.permute.xlu0 0
  %505 = vperm.xlu0 %504, %v419
  %v506 = vpop.permute.xlu0 %505
  %509 = vset.pattern.permute.xlu0 0
  %510 = vperm.xlu0 %509, %v420
  %v511 = vpop.permute.xlu0 %510
  %514 = vset.pattern.permute.xlu0 0
  %515 = vperm.xlu0 %514, %v421
  %v516 = vpop.permute.xlu0 %515
  %519 = vset.pattern.permute.xlu0 0
  %520 = vperm.xlu0 %519, %v422
  %v521 = vpop.permute.xlu0 %520
  %v523 = vmul.f32 %v163, %v426
  %v524 = vmul.f32 %v164, %v426
  %v525 = vmul.f32 %v165, %v431
  %v526 = vmul.f32 %v166, %v431
  %v527 = vmul.f32 %v167, %v436
  %v528 = vmul.f32 %v168, %v436
  %v529 = vmul.f32 %v169, %v441
  %v530 = vmul.f32 %v170, %v441
  %v531 = vmul.f32 %v171, %v446
  %v532 = vmul.f32 %v172, %v446
  %v533 = vmul.f32 %v173, %v451
  %v534 = vmul.f32 %v174, %v451
  %v535 = vmul.f32 %v175, %v456
  %v536 = vmul.f32 %v176, %v456
  %v537 = vmul.f32 %v177, %v461
  %v538 = vmul.f32 %v178, %v461
  %v539 = vmul.f32 %v179, %v466
  %v540 = vmul.f32 %v180, %v466
  %v541 = vmul.f32 %v181, %v471
  %v542 = vmul.f32 %v182, %v471
  %v543 = vmul.f32 %v183, %v476
  %v544 = vmul.f32 %v184, %v476
  %v545 = vmul.f32 %v185, %v481
  %v546 = vmul.f32 %v186, %v481
  %v547 = vmul.f32 %v187, %v486
  %v548 = vmul.f32 %v188, %v486
  %v549 = vmul.f32 %v189, %v491
  %v550 = vmul.f32 %v190, %v491
  %v551 = vmul.f32 %v191, %v496
  %v552 = vmul.f32 %v192, %v496
  %v553 = vmul.f32 %v193, %v501
  %v554 = vmul.f32 %v194, %v501
  %v555 = vmul.f32 %v195, %v506
  %v556 = vmul.f32 %v196, %v506
  %v557 = vmul.f32 %v197, %v511
  %v558 = vmul.f32 %v198, %v511
  %v559 = vmul.f32 %v199, %v516
  %v560 = vmul.f32 %v200, %v516
  %v561 = vmul.f32 %v201, %v521
  %v562 = vmul.f32 %v202, %v521
  %v563 = vld [vmem:[%s2] sm:$0xff]
  %v564 = vld [vmem:[%s2 + $0x8] sm:$0xff]
  %v565 = vld [vmem:[%s2 + $0x10] sm:$0xff]
  %v566 = vld [vmem:[%s2 + $0x18] sm:$0xff]
  %v567 = vld [vmem:[%s2 + $0x20] sm:$0xff]
  %v568 = vld [vmem:[%s2 + $0x28] sm:$0xff]
  %v569 = vld [vmem:[%s2 + $0x30] sm:$0xff]
  %v570 = vld [vmem:[%s2 + $0x38] sm:$0xff]
  %v571 = vld [vmem:[%s2 + $0x40] sm:$0xff]
  %v572 = vld [vmem:[%s2 + $0x48] sm:$0xff]
  %v573 = vld [vmem:[%s2 + $0x50] sm:$0xff]
  %v574 = vld [vmem:[%s2 + $0x58] sm:$0xff]
  %v575 = vld [vmem:[%s2 + $0x60] sm:$0xff]
  %v576 = vld [vmem:[%s2 + $0x68] sm:$0xff]
  %v577 = vld [vmem:[%s2 + $0x70] sm:$0xff]
  %v578 = vld [vmem:[%s2 + $0x78] sm:$0xff]
  %v579 = vld [vmem:[%s2 + $0x80] sm:$0xff]
  %v580 = vld [vmem:[%s2 + $0x88] sm:$0xff]
  %v581 = vld [vmem:[%s2 + $0x90] sm:$0xff]
  %v582 = vld [vmem:[%s2 + $0x98] sm:$0xff]
  %584 = vset.pattern.permute.xlu0 0
  %585 = vperm.xlu0 %584, %v563
  %v586 = vpop.permute.xlu0 %585
  %589 = vset.pattern.permute.xlu0 0
  %590 = vperm.xlu0 %589, %v564
  %v591 = vpop.permute.xlu0 %590
  %594 = vset.pattern.permute.xlu0 0
  %595 = vperm.xlu0 %594, %v565
  %v596 = vpop.permute.xlu0 %595
  %599 = vset.pattern.permute.xlu0 0
  %600 = vperm.xlu0 %599, %v566
  %v601 = vpop.permute.xlu0 %600
  %604 = vset.pattern.permute.xlu0 0
  %605 = vperm.xlu0 %604, %v567
  %v606 = vpop.permute.xlu0 %605
  %609 = vset.pattern.permute.xlu0 0
  %610 = vperm.xlu0 %609, %v568
  %v611 = vpop.permute.xlu0 %610
  %614 = vset.pattern.permute.xlu0 0
  %615 = vperm.xlu0 %614, %v569
  %v616 = vpop.permute.xlu0 %615
  %619 = vset.pattern.permute.xlu0 0
  %620 = vperm.xlu0 %619, %v570
  %v621 = vpop.permute.xlu0 %620
  %624 = vset.pattern.permute.xlu0 0
  %625 = vperm.xlu0 %624, %v571
  %v626 = vpop.permute.xlu0 %625
  %629 = vset.pattern.permute.xlu0 0
  %630 = vperm.xlu0 %629, %v572
  %v631 = vpop.permute.xlu0 %630
  %634 = vset.pattern.permute.xlu0 0
  %635 = vperm.xlu0 %634, %v573
  %v636 = vpop.permute.xlu0 %635
  %639 = vset.pattern.permute.xlu0 0
  %640 = vperm.xlu0 %639, %v574
  %v641 = vpop.permute.xlu0 %640
  %644 = vset.pattern.permute.xlu0 0
  %645 = vperm.xlu0 %644, %v575
  %v646 = vpop.permute.xlu0 %645
  %649 = vset.pattern.permute.xlu0 0
  %650 = vperm.xlu0 %649, %v576
  %v651 = vpop.permute.xlu0 %650
  %654 = vset.pattern.permute.xlu0 0
  %655 = vperm.xlu0 %654, %v577
  %v656 = vpop.permute.xlu0 %655
  %659 = vset.pattern.permute.xlu0 0
  %660 = vperm.xlu0 %659, %v578
  %v661 = vpop.permute.xlu0 %660
  %664 = vset.pattern.permute.xlu0 0
  %665 = vperm.xlu0 %664, %v579
  %v666 = vpop.permute.xlu0 %665
  %669 = vset.pattern.permute.xlu0 0
  %670 = vperm.xlu0 %669, %v580
  %v671 = vpop.permute.xlu0 %670
  %674 = vset.pattern.permute.xlu0 0
  %675 = vperm.xlu0 %674, %v581
  %v676 = vpop.permute.xlu0 %675
  %679 = vset.pattern.permute.xlu0 0
  %680 = vperm.xlu0 %679, %v582
  %v681 = vpop.permute.xlu0 %680
  %v683 = vadd.f32 %v523, %v586
  %v684 = vadd.f32 %v524, %v586
  %v685 = vadd.f32 %v525, %v591
  %v686 = vadd.f32 %v526, %v591
  %v687 = vadd.f32 %v527, %v596
  %v688 = vadd.f32 %v528, %v596
  %v689 = vadd.f32 %v529, %v601
  %v690 = vadd.f32 %v530, %v601
  %v691 = vadd.f32 %v531, %v606
  %v692 = vadd.f32 %v532, %v606
  %v693 = vadd.f32 %v533, %v611
  %v694 = vadd.f32 %v534, %v611
  %v695 = vadd.f32 %v535, %v616
  %v696 = vadd.f32 %v536, %v616
  %v697 = vadd.f32 %v537, %v621
  %v698 = vadd.f32 %v538, %v621
  %v699 = vadd.f32 %v539, %v626
  %v700 = vadd.f32 %v540, %v626
  %v701 = vadd.f32 %v541, %v631
  %v702 = vadd.f32 %v542, %v631
  %v703 = vadd.f32 %v543, %v636
  %v704 = vadd.f32 %v544, %v636
  %v705 = vadd.f32 %v545, %v641
  %v706 = vadd.f32 %v546, %v641
  %v707 = vadd.f32 %v547, %v646
  %v708 = vadd.f32 %v548, %v646
  %v709 = vadd.f32 %v549, %v651
  %v710 = vadd.f32 %v550, %v651
  %v711 = vadd.f32 %v551, %v656
  %v712 = vadd.f32 %v552, %v656
  %v713 = vadd.f32 %v553, %v661
  %v714 = vadd.f32 %v554, %v661
  %v715 = vadd.f32 %v555, %v666
  %v716 = vadd.f32 %v556, %v666
  %v717 = vadd.f32 %v557, %v671
  %v718 = vadd.f32 %v558, %v671
  %v719 = vadd.f32 %v559, %v676
  %v720 = vadd.f32 %v560, %v676
  %v721 = vadd.f32 %v561, %v681
  %v722 = vadd.f32 %v562, %v681
  %v723 = vmax.f32 %v683, 0.0
  %v724 = vmax.f32 %v684, 0.0
  %v725 = vmax.f32 %v685, 0.0
  %v726 = vmax.f32 %v686, 0.0
  %v727 = vmax.f32 %v687, 0.0
  %v728 = vmax.f32 %v688, 0.0
  %v729 = vmax.f32 %v689, 0.0
  %v730 = vmax.f32 %v690, 0.0
  %v731 = vmax.f32 %v691, 0.0
  %v732 = vmax.f32 %v692, 0.0
  %v733 = vmax.f32 %v693, 0.0
  %v734 = vmax.f32 %v694, 0.0
  %v735 = vmax.f32 %v695, 0.0
  %v736 = vmax.f32 %v696, 0.0
  %v737 = vmax.f32 %v697, 0.0
  %v738 = vmax.f32 %v698, 0.0
  %v739 = vmax.f32 %v699, 0.0
  %v740 = vmax.f32 %v700, 0.0
  %v741 = vmax.f32 %v701, 0.0
  %v742 = vmax.f32 %v702, 0.0
  %v743 = vmax.f32 %v703, 0.0
  %v744 = vmax.f32 %v704, 0.0
  %v745 = vmax.f32 %v705, 0.0
  %v746 = vmax.f32 %v706, 0.0
  %v747 = vmax.f32 %v707, 0.0
  %v748 = vmax.f32 %v708, 0.0
  %v749 = vmax.f32 %v709, 0.0
  %v750 = vmax.f32 %v710, 0.0
  %v751 = vmax.f32 %v711, 0.0
  %v752 = vmax.f32 %v712, 0.0
  %v753 = vmax.f32 %v713, 0.0
  %v754 = vmax.f32 %v714, 0.0
  %v755 = vmax.f32 %v715, 0.0
  %v756 = vmax.f32 %v716, 0.0
  %v757 = vmax.f32 %v717, 0.0
  %v758 = vmax.f32 %v718, 0.0
  %v759 = vmax.f32 %v719, 0.0
  %v760 = vmax.f32 %v720, 0.0
  %v761 = vmax.f32 %v721, 0.0
  %v762 = vmax.f32 %v722, 0.0
  %v763 = vpack.c.bf16 %v725, %v723
  %v764 = vpack.c.bf16 %v726, %v724
  %v765 = vpack.c.bf16 %v729, %v727
  %v766 = vpack.c.bf16 %v730, %v728
  %v767 = vpack.c.bf16 %v733, %v731
  %v768 = vpack.c.bf16 %v734, %v732
  %v769 = vpack.c.bf16 %v737, %v735
  %v770 = vpack.c.bf16 %v738, %v736
  %v771 = vpack.c.bf16 %v741, %v739
  %v772 = vpack.c.bf16 %v742, %v740
  %v773 = vpack.c.bf16 %v745, %v743
  %v774 = vpack.c.bf16 %v746, %v744
  %v775 = vpack.c.bf16 %v749, %v747
  %v776 = vpack.c.bf16 %v750, %v748
  %v777 = vpack.c.bf16 %v753, %v751
  %v778 = vpack.c.bf16 %v754, %v752
  %v779 = vpack.c.bf16 %v757, %v755
  %v780 = vpack.c.bf16 %v758, %v756
  %v781 = vpack.c.bf16 %v761, %v759
  %v782 = vpack.c.bf16 %v762, %v760
  %v783 = vld [vmem:[%s4] sm:$0xff]
  %v784 = vld [vmem:[%s4 + $0x8] sm:$0xff]
  %v785 = vld [vmem:[%s4 + $0x10] sm:$0xff]
  %v786 = vld [vmem:[%s4 + $0x18] sm:$0xff]
  %v787 = vld [vmem:[%s4 + $0x20] sm:$0xff]
  %v788 = vld [vmem:[%s4 + $0x28] sm:$0xff]
  %v789 = vld [vmem:[%s4 + $0x30] sm:$0xff]
  %v790 = vld [vmem:[%s4 + $0x38] sm:$0xff]
  %v791 = vld [vmem:[%s4 + $0x40] sm:$0xff]
  %v792 = vld [vmem:[%s4 + $0x48] sm:$0xff]
  %v793 = vld [vmem:[%s4 + $0x50] sm:$0xff]
  %v794 = vld [vmem:[%s4 + $0x58] sm:$0xff]
  %v795 = vld [vmem:[%s4 + $0x60] sm:$0xff]
  %v796 = vld [vmem:[%s4 + $0x68] sm:$0xff]
  %v797 = vld [vmem:[%s4 + $0x70] sm:$0xff]
  %v798 = vld [vmem:[%s4 + $0x78] sm:$0xff]
  %v799 = vld [vmem:[%s4 + $0x80] sm:$0xff]
  %v800 = vld [vmem:[%s4 + $0x88] sm:$0xff]
  %v819 = vunpack.c.l.b16 %v783
  %v820 = vunpack.c.h.b16 %v783
  %v821 = vunpack.c.l.b16 %v784
  %v822 = vunpack.c.h.b16 %v784
  %v823 = vunpack.c.l.b16 %v785
  %v824 = vunpack.c.h.b16 %v785
  %v825 = vunpack.c.l.b16 %v786
  %v826 = vunpack.c.h.b16 %v786
  %v827 = vunpack.c.l.b16 %v787
  %v828 = vunpack.c.h.b16 %v787
  %v829 = vunpack.c.l.b16 %v788
  %v830 = vunpack.c.h.b16 %v788
  %v831 = vunpack.c.l.b16 %v789
  %v832 = vunpack.c.h.b16 %v789
  %v833 = vunpack.c.l.b16 %v790
  %v834 = vunpack.c.h.b16 %v790
  %v835 = vunpack.c.l.b16 %v791
  %v836 = vunpack.c.h.b16 %v791
  %v837 = vunpack.c.l.b16 %v792
  %v838 = vunpack.c.h.b16 %v792
  %v839 = vunpack.c.l.b16 %v793
  %v840 = vunpack.c.h.b16 %v793
  %v841 = vunpack.c.l.b16 %v794
  %v842 = vunpack.c.h.b16 %v794
  %v843 = vunpack.c.l.b16 %v795
  %v844 = vunpack.c.h.b16 %v795
  %v845 = vunpack.c.l.b16 %v796
  %v846 = vunpack.c.h.b16 %v796
  %v847 = vunpack.c.l.b16 %v797
  %v848 = vunpack.c.h.b16 %v797
  %v849 = vunpack.c.l.b16 %v798
  %v850 = vunpack.c.h.b16 %v798
  %v851 = vunpack.c.l.b16 %v799
  %v852 = vunpack.c.h.b16 %v799
  %v853 = vunpack.c.l.b16 %v800
  %v854 = vunpack.c.h.b16 %v800
  %v855 = vpack.c.b16 %v821, %v819
  %v856 = vpack.c.b16 %v822, %v820
  %v857 = vpack.c.b16 %v825, %v823
  %v858 = vpack.c.b16 %v826, %v824
  %v859 = vpack.c.b16 %v829, %v827
  %v860 = vpack.c.b16 %v830, %v828
  %v861 = vpack.c.b16 %v833, %v831
  %v862 = vpack.c.b16 %v834, %v832
  %v863 = vpack.c.b16 %v837, %v835
  %v864 = vpack.c.b16 %v838, %v836
  %v865 = vpack.c.b16 %v841, %v839
  %v866 = vpack.c.b16 %v842, %v840
  %v867 = vpack.c.b16 %v845, %v843
  %v868 = vpack.c.b16 %v846, %v844
  %v869 = vpack.c.b16 %v849, %v847
  %v870 = vpack.c.b16 %v850, %v848
  %v871 = vpack.c.b16 %v853, %v851
  %v872 = vpack.c.b16 %v854, %v852
  %v892 = vsel %vm61, %v764, 0
  %v895 = vsel %vm61, %v766, 0
  %v898 = vsel %vm61, %v768, 0
  %v901 = vsel %vm61, %v770, 0
  %v904 = vsel %vm61, %v772, 0
  %v907 = vsel %vm61, %v774, 0
  %v910 = vsel %vm61, %v776, 0
  %v913 = vsel %vm61, %v778, 0
  %v916 = vsel %vm61, %v780, 0
  %v919 = vsel %vm61, %v782, 0
  %921 = vmatprep.subr.bf16.mxu0 %v870
  %922 = vmatpush1.bf16.msra.mxu0 %v869
  %923 = vmatprep.subr.bf16.mxu0 %v868
  %924 = vmatpush1.bf16.msra.mxu0 %v867
  %925 = vmatprep.subr.bf16.mxu0 %v866
  %926 = vmatpush1.bf16.msra.mxu0 %v865
  %927 = vmatprep.subr.bf16.mxu0 %v864
  %928 = vmatpush1.bf16.msra.mxu0 %v863
  %929 = vmatprep.subr.bf16.mxu0 %v862
  %930 = vmatpush1.bf16.msra.mxu0 %v861
  %931 = vmatprep.subr.bf16.mxu0 %v860
  %932 = vmatpush1.bf16.msra.mxu0 %v859
  %933 = vmatprep.subr.bf16.mxu0 %v858
  %934 = vmatpush1.bf16.msra.mxu0 %v857
  %935 = vmatprep.subr.bf16.mxu0 %v856
  %936 = vmatpush1.bf16.msra.mxu0 %v855
  %937 = vmatprep.subr.bf16.mxu0 0
  %938 = vmatpush2.bf16.msra.mxu0 0
  %939 = vmatprep.subr.bf16.mxu0 0
  %940 = vmatpush2.bf16.msra.mxu0 0
  %941 = vmatprep.subr.bf16.mxu0 0
  %942 = vmatpush2.bf16.msra.mxu0 0
  %943 = vmatprep.subr.bf16.mxu0 0
  %944 = vmatpush2.bf16.msra.mxu0 0
  %945 = vmatprep.subr.bf16.mxu0 0
  %946 = vmatpush2.bf16.msra.mxu0 0
  %947 = vmatprep.subr.bf16.mxu0 0
  %948 = vmatpush2.bf16.msra.mxu0 0
  %949 = vmatprep.subr.bf16.mxu0 0
  %950 = vmatpush2.bf16.msra.mxu0 0
  %951 = vmatprep.subr.bf16.mxu0 %v872
  %952 = vmatpush2.bf16.msra.mxu0 %v871
  %953 = vmatprep.mubr.bf16.mxu0 %v892
  %954 = vmatmul.mubr.bf16.gmra.mxu0 %v763
  %v955 = vpop.f32.mrf.mxu0
  %v956 = vadd.f32 0.0, %v955
  %v957 = vpop.f32.mrf.mxu0
  %v958 = vadd.f32 0.0, %v957
  %v959 = vpop.f32.mrf.mxu0
  %v960 = vadd.f32 0.0, %v959
  %v961 = vpop.f32.mrf.mxu0
  %v962 = vadd.f32 0.0, %v961
  %963 = vmatprep.mubr.bf16.mxu0 %v895
  %964 = vmatmul.mubr.bf16.gmra.mxu0 %v765
  %v965 = vpop.f32.mrf.mxu0
  %v966 = vadd.f32 0.0, %v965
  %v967 = vpop.f32.mrf.mxu0
  %v968 = vadd.f32 0.0, %v967
  %v969 = vpop.f32.mrf.mxu0
  %v970 = vadd.f32 0.0, %v969
  %v971 = vpop.f32.mrf.mxu0
  %v972 = vadd.f32 0.0, %v971
  %973 = vmatprep.mubr.bf16.mxu0 %v898
  %974 = vmatmul.mubr.bf16.gmra.mxu0 %v767
  %v975 = vpop.f32.mrf.mxu0
  %v976 = vadd.f32 0.0, %v975
  %v977 = vpop.f32.mrf.mxu0
  %v978 = vadd.f32 0.0, %v977
  %v979 = vpop.f32.mrf.mxu0
  %v980 = vadd.f32 0.0, %v979
  %v981 = vpop.f32.mrf.mxu0
  %v982 = vadd.f32 0.0, %v981
  %983 = vmatprep.mubr.bf16.mxu0 %v901
  %984 = vmatmul.mubr.bf16.gmra.mxu0 %v769
  %v985 = vpop.f32.mrf.mxu0
  %v986 = vadd.f32 0.0, %v985
  %v987 = vpop.f32.mrf.mxu0
  %v988 = vadd.f32 0.0, %v987
  %v989 = vpop.f32.mrf.mxu0
  %v990 = vadd.f32 0.0, %v989
  %v991 = vpop.f32.mrf.mxu0
  %v992 = vadd.f32 0.0, %v991
  %993 = vmatprep.mubr.bf16.mxu0 %v904
  %994 = vmatmul.mubr.bf16.gmra.mxu0 %v771
  %v995 = vpop.f32.mrf.mxu0
  %v996 = vadd.f32 0.0, %v995
  %v997 = vpop.f32.mrf.mxu0
  %v998 = vadd.f32 0.0, %v997
  %v999 = vpop.f32.mrf.mxu0
  %v1000 = vadd.f32 0.0, %v999
  %v1001 = vpop.f32.mrf.mxu0
  %v1002 = vadd.f32 0.0, %v1001
  %1003 = vmatprep.mubr.bf16.mxu0 %v907
  %1004 = vmatmul.mubr.bf16.gmra.mxu0 %v773
  %v1005 = vpop.f32.mrf.mxu0
  %v1006 = vadd.f32 0.0, %v1005
  %v1007 = vpop.f32.mrf.mxu0
  %v1008 = vadd.f32 0.0, %v1007
  %v1009 = vpop.f32.mrf.mxu0
  %v1010 = vadd.f32 0.0, %v1009
  %v1011 = vpop.f32.mrf.mxu0
  %v1012 = vadd.f32 0.0, %v1011
  %1013 = vmatprep.mubr.bf16.mxu0 %v910
  %1014 = vmatmul.mubr.bf16.gmra.mxu0 %v775
  %v1015 = vpop.f32.mrf.mxu0
  %v1016 = vadd.f32 0.0, %v1015
  %v1017 = vpop.f32.mrf.mxu0
  %v1018 = vadd.f32 0.0, %v1017
  %v1019 = vpop.f32.mrf.mxu0
  %v1020 = vadd.f32 0.0, %v1019
  %v1021 = vpop.f32.mrf.mxu0
  %v1022 = vadd.f32 0.0, %v1021
  %1023 = vmatprep.mubr.bf16.mxu0 %v913
  %1024 = vmatmul.mubr.bf16.gmra.mxu0 %v777
  %v1025 = vpop.f32.mrf.mxu0
  %v1026 = vadd.f32 0.0, %v1025
  %v1027 = vpop.f32.mrf.mxu0
  %v1028 = vadd.f32 0.0, %v1027
  %v1029 = vpop.f32.mrf.mxu0
  %v1030 = vadd.f32 0.0, %v1029
  %v1031 = vpop.f32.mrf.mxu0
  %v1032 = vadd.f32 0.0, %v1031
  %1033 = vmatprep.mubr.bf16.mxu0 %v916
  %1034 = vmatmul.mubr.bf16.gmra.mxu0 %v779
  %v1035 = vpop.f32.mrf.mxu0
  %v1036 = vadd.f32 0.0, %v1035
  %v1037 = vpop.f32.mrf.mxu0
  %v1038 = vadd.f32 0.0, %v1037
  %v1039 = vpop.f32.mrf.mxu0
  %v1040 = vadd.f32 0.0, %v1039
  %v1041 = vpop.f32.mrf.mxu0
  %v1042 = vadd.f32 0.0, %v1041
  %1043 = vmatprep.mubr.bf16.mxu0 %v919
  %1044 = vmatmul.mubr.bf16.gmra.mxu0 %v781
  %v1045 = vpop.f32.mrf.mxu0
  %v1046 = vadd.f32 0.0, %v1045
  %v1047 = vpop.f32.mrf.mxu0
  %v1048 = vadd.f32 0.0, %v1047
  %v1049 = vpop.f32.mrf.mxu0
  %v1050 = vadd.f32 0.0, %v1049
  %v1051 = vpop.f32.mrf.mxu0
  %v1052 = vadd.f32 0.0, %v1051
  %1053 = vdwg.mxu0
  %v1054 = vpack.c.bf16 %v960, %v956
  %v1055 = vpack.c.bf16 %v962, %v958
  %v1056 = vpack.c.bf16 %v970, %v966
  %v1057 = vpack.c.bf16 %v972, %v968
  %v1058 = vpack.c.bf16 %v980, %v976
  %v1059 = vpack.c.bf16 %v982, %v978
  %v1060 = vpack.c.bf16 %v990, %v986
  %v1061 = vpack.c.bf16 %v992, %v988
  %v1062 = vpack.c.bf16 %v1000, %v996
  %v1063 = vpack.c.bf16 %v1002, %v998
  %v1064 = vpack.c.bf16 %v1010, %v1006
  %v1065 = vpack.c.bf16 %v1012, %v1008
  %v1066 = vpack.c.bf16 %v1020, %v1016
  %v1067 = vpack.c.bf16 %v1022, %v1018
  %v1068 = vpack.c.bf16 %v1030, %v1026
  %v1069 = vpack.c.bf16 %v1032, %v1028
  %v1070 = vpack.c.bf16 %v1040, %v1036
  %v1071 = vpack.c.bf16 %v1042, %v1038
  %v1072 = vpack.c.bf16 %v1050, %v1046
  %v1073 = vpack.c.bf16 %v1052, %v1048
  %v1074 = vld [vmem:[%s3] sm:$0xff]
  %v1075 = vld [vmem:[%s3 + $0x8] sm:$0xff]
  %v1076 = vld [vmem:[%s3 + $0x10] sm:$0xff]
  %v1077 = vld [vmem:[%s3 + $0x18] sm:$0xff]
  %v1078 = vld [vmem:[%s3 + $0x20] sm:$0xff]
  %v1079 = vld [vmem:[%s3 + $0x28] sm:$0xff]
  %v1080 = vld [vmem:[%s3 + $0x30] sm:$0xff]
  %v1081 = vld [vmem:[%s3 + $0x38] sm:$0xff]
  %v1082 = vld [vmem:[%s3 + $0x40] sm:$0xff]
  %v1083 = vld [vmem:[%s3 + $0x48] sm:$0xff]
  %v1084 = vld [vmem:[%s3 + $0x50] sm:$0xff]
  %v1085 = vld [vmem:[%s3 + $0x58] sm:$0xff]
  %v1086 = vld [vmem:[%s3 + $0x60] sm:$0xff]
  %v1087 = vld [vmem:[%s3 + $0x68] sm:$0xff]
  %v1088 = vld [vmem:[%s3 + $0x70] sm:$0xff]
  %v1089 = vld [vmem:[%s3 + $0x78] sm:$0xff]
  %v1090 = vld [vmem:[%s3 + $0x80] sm:$0xff]
  %v1091 = vld [vmem:[%s3 + $0x88] sm:$0xff]
  %v1092 = vld [vmem:[%s3 + $0x90] sm:$0xff]
  %v1093 = vld [vmem:[%s3 + $0x98] sm:$0xff]
  %s1094 = scalar_lea.vmem %s4, 144
  %v1095 = vld [vmem:[%s1094] sm:$0xff]
  %v1096 = vld [vmem:[%s1094 + $0x8] sm:$0xff]
  %v1097 = vld [vmem:[%s1094 + $0x10] sm:$0xff]
  %v1098 = vld [vmem:[%s1094 + $0x18] sm:$0xff]
  %v1099 = vld [vmem:[%s1094 + $0x20] sm:$0xff]
  %v1100 = vld [vmem:[%s1094 + $0x28] sm:$0xff]
  %v1101 = vld [vmem:[%s1094 + $0x30] sm:$0xff]
  %v1102 = vld [vmem:[%s1094 + $0x38] sm:$0xff]
  %v1103 = vld [vmem:[%s1094 + $0x40] sm:$0xff]
  %v1104 = vld [vmem:[%s1094 + $0x48] sm:$0xff]
  %v1105 = vld [vmem:[%s1094 + $0x50] sm:$0xff]
  %v1106 = vld [vmem:[%s1094 + $0x58] sm:$0xff]
  %v1107 = vld [vmem:[%s1094 + $0x60] sm:$0xff]
  %v1108 = vld [vmem:[%s1094 + $0x68] sm:$0xff]
  %v1109 = vld [vmem:[%s1094 + $0x70] sm:$0xff]
  %v1110 = vld [vmem:[%s1094 + $0x78] sm:$0xff]
  %v1111 = vld [vmem:[%s1094 + $0x80] sm:$0xff]
  %v1112 = vld [vmem:[%s1094 + $0x88] sm:$0xff]
  %v1131 = vunpack.c.l.b16 %v1095
  %v1132 = vunpack.c.h.b16 %v1095
  %v1133 = vunpack.c.l.b16 %v1096
  %v1134 = vunpack.c.h.b16 %v1096
  %v1135 = vunpack.c.l.b16 %v1097
  %v1136 = vunpack.c.h.b16 %v1097
  %v1137 = vunpack.c.l.b16 %v1098
  %v1138 = vunpack.c.h.b16 %v1098
  %v1139 = vunpack.c.l.b16 %v1099
  %v1140 = vunpack.c.h.b16 %v1099
  %v1141 = vunpack.c.l.b16 %v1100
  %v1142 = vunpack.c.h.b16 %v1100
  %v1143 = vunpack.c.l.b16 %v1101
  %v1144 = vunpack.c.h.b16 %v1101
  %v1145 = vunpack.c.l.b16 %v1102
  %v1146 = vunpack.c.h.b16 %v1102
  %v1147 = vunpack.c.l.b16 %v1103
  %v1148 = vunpack.c.h.b16 %v1103
  %v1149 = vunpack.c.l.b16 %v1104
  %v1150 = vunpack.c.h.b16 %v1104
  %v1151 = vunpack.c.l.b16 %v1105
  %v1152 = vunpack.c.h.b16 %v1105
  %v1153 = vunpack.c.l.b16 %v1106
  %v1154 = vunpack.c.h.b16 %v1106
  %v1155 = vunpack.c.l.b16 %v1107
  %v1156 = vunpack.c.h.b16 %v1107
  %v1157 = vunpack.c.l.b16 %v1108
  %v1158 = vunpack.c.h.b16 %v1108
  %v1159 = vunpack.c.l.b16 %v1109
  %v1160 = vunpack.c.h.b16 %v1109
  %v1161 = vunpack.c.l.b16 %v1110
  %v1162 = vunpack.c.h.b16 %v1110
  %v1163 = vunpack.c.l.b16 %v1111
  %v1164 = vunpack.c.h.b16 %v1111
  %v1165 = vunpack.c.l.b16 %v1112
  %v1166 = vunpack.c.h.b16 %v1112
  %v1167 = vpack.c.b16 %v1133, %v1131
  %v1168 = vpack.c.b16 %v1134, %v1132
  %v1169 = vpack.c.b16 %v1137, %v1135
  %v1170 = vpack.c.b16 %v1138, %v1136
  %v1171 = vpack.c.b16 %v1141, %v1139
  %v1172 = vpack.c.b16 %v1142, %v1140
  %v1173 = vpack.c.b16 %v1145, %v1143
  %v1174 = vpack.c.b16 %v1146, %v1144
  %v1175 = vpack.c.b16 %v1149, %v1147
  %v1176 = vpack.c.b16 %v1150, %v1148
  %v1177 = vpack.c.b16 %v1153, %v1151
  %v1178 = vpack.c.b16 %v1154, %v1152
  %v1179 = vpack.c.b16 %v1157, %v1155
  %v1180 = vpack.c.b16 %v1158, %v1156
  %v1181 = vpack.c.b16 %v1161, %v1159
  %v1182 = vpack.c.b16 %v1162, %v1160
  %v1183 = vpack.c.b16 %v1165, %v1163
  %v1184 = vpack.c.b16 %v1166, %v1164
  %1203 = vmatprep.subr.bf16.mxu0 %v1182
  %1204 = vmatpush1.bf16.msra.mxu0 %v1181
  %1205 = vmatprep.subr.bf16.mxu0 %v1180
  %1206 = vmatpush1.bf16.msra.mxu0 %v1179
  %1207 = vmatprep.subr.bf16.mxu0 %v1178
  %1208 = vmatpush1.bf16.msra.mxu0 %v1177
  %1209 = vmatprep.subr.bf16.mxu0 %v1176
  %1210 = vmatpush1.bf16.msra.mxu0 %v1175
  %1211 = vmatprep.subr.bf16.mxu0 %v1174
  %1212 = vmatpush1.bf16.msra.mxu0 %v1173
  %1213 = vmatprep.subr.bf16.mxu0 %v1172
  %1214 = vmatpush1.bf16.msra.mxu0 %v1171
  %1215 = vmatprep.subr.bf16.mxu0 %v1170
  %1216 = vmatpush1.bf16.msra.mxu0 %v1169
  %1217 = vmatprep.subr.bf16.mxu0 %v1168
  %1218 = vmatpush1.bf16.msra.mxu0 %v1167
  %1219 = vmatprep.subr.bf16.mxu0 0
  %1220 = vmatpush2.bf16.msra.mxu0 0
  %1221 = vmatprep.subr.bf16.mxu0 0
  %1222 = vmatpush2.bf16.msra.mxu0 0
  %1223 = vmatprep.subr.bf16.mxu0 0
  %1224 = vmatpush2.bf16.msra.mxu0 0
  %1225 = vmatprep.subr.bf16.mxu0 0
  %1226 = vmatpush2.bf16.msra.mxu0 0
  %1227 = vmatprep.subr.bf16.mxu0 0
  %1228 = vmatpush2.bf16.msra.mxu0 0
  %1229 = vmatprep.subr.bf16.mxu0 0
  %1230 = vmatpush2.bf16.msra.mxu0 0
  %1231 = vmatprep.subr.bf16.mxu0 0
  %1232 = vmatpush2.bf16.msra.mxu0 0
  %1233 = vmatprep.subr.bf16.mxu0 %v1184
  %1234 = vmatpush2.bf16.msra.mxu0 %v1183
  %1235 = vmatprep.mubr.bf16.mxu0 %v892
  %1236 = vmatmul.mubr.bf16.gmra.mxu0 %v763
  %v1237 = vpop.f32.mrf.mxu0
  %v1238 = vadd.f32 0.0, %v1237
  %v1239 = vpop.f32.mrf.mxu0
  %v1240 = vadd.f32 0.0, %v1239
  %v1241 = vpop.f32.mrf.mxu0
  %v1242 = vadd.f32 0.0, %v1241
  %v1243 = vpop.f32.mrf.mxu0
  %v1244 = vadd.f32 0.0, %v1243
  %1245 = vmatprep.mubr.bf16.mxu0 %v895
  %1246 = vmatmul.mubr.bf16.gmra.mxu0 %v765
  %v1247 = vpop.f32.mrf.mxu0
  %v1248 = vadd.f32 0.0, %v1247
  %v1249 = vpop.f32.mrf.mxu0
  %v1250 = vadd.f32 0.0, %v1249
  %v1251 = vpop.f32.mrf.mxu0
  %v1252 = vadd.f32 0.0, %v1251
  %v1253 = vpop.f32.mrf.mxu0
  %v1254 = vadd.f32 0.0, %v1253
  %1255 = vmatprep.mubr.bf16.mxu0 %v898
  %1256 = vmatmul.mubr.bf16.gmra.mxu0 %v767
  %v1257 = vpop.f32.mrf.mxu0
  %v1258 = vadd.f32 0.0, %v1257
  %v1259 = vpop.f32.mrf.mxu0
  %v1260 = vadd.f32 0.0, %v1259
  %v1261 = vpop.f32.mrf.mxu0
  %v1262 = vadd.f32 0.0, %v1261
  %v1263 = vpop.f32.mrf.mxu0
  %v1264 = vadd.f32 0.0, %v1263
  %1265 = vmatprep.mubr.bf16.mxu0 %v901
  %1266 = vmatmul.mubr.bf16.gmra.mxu0 %v769
  %v1267 = vpop.f32.mrf.mxu0
  %v1268 = vadd.f32 0.0, %v1267
  %v1269 = vpop.f32.mrf.mxu0
  %v1270 = vadd.f32 0.0, %v1269
  %v1271 = vpop.f32.mrf.mxu0
  %v1272 = vadd.f32 0.0, %v1271
  %v1273 = vpop.f32.mrf.mxu0
  %v1274 = vadd.f32 0.0, %v1273
  %1275 = vmatprep.mubr.bf16.mxu0 %v904
  %1276 = vmatmul.mubr.bf16.gmra.mxu0 %v771
  %v1277 = vpop.f32.mrf.mxu0
  %v1278 = vadd.f32 0.0, %v1277
  %v1279 = vpop.f32.mrf.mxu0
  %v1280 = vadd.f32 0.0, %v1279
  %v1281 = vpop.f32.mrf.mxu0
  %v1282 = vadd.f32 0.0, %v1281
  %v1283 = vpop.f32.mrf.mxu0
  %v1284 = vadd.f32 0.0, %v1283
  %1285 = vmatprep.mubr.bf16.mxu0 %v907
  %1286 = vmatmul.mubr.bf16.gmra.mxu0 %v773
  %v1287 = vpop.f32.mrf.mxu0
  %v1288 = vadd.f32 0.0, %v1287
  %v1289 = vpop.f32.mrf.mxu0
  %v1290 = vadd.f32 0.0, %v1289
  %v1291 = vpop.f32.mrf.mxu0
  %v1292 = vadd.f32 0.0, %v1291
  %v1293 = vpop.f32.mrf.mxu0
  %v1294 = vadd.f32 0.0, %v1293
  %1295 = vmatprep.mubr.bf16.mxu0 %v910
  %1296 = vmatmul.mubr.bf16.gmra.mxu0 %v775
  %v1297 = vpop.f32.mrf.mxu0
  %v1298 = vadd.f32 0.0, %v1297
  %v1299 = vpop.f32.mrf.mxu0
  %v1300 = vadd.f32 0.0, %v1299
  %v1301 = vpop.f32.mrf.mxu0
  %v1302 = vadd.f32 0.0, %v1301
  %v1303 = vpop.f32.mrf.mxu0
  %v1304 = vadd.f32 0.0, %v1303
  %1305 = vmatprep.mubr.bf16.mxu0 %v913
  %1306 = vmatmul.mubr.bf16.gmra.mxu0 %v777
  %v1307 = vpop.f32.mrf.mxu0
  %v1308 = vadd.f32 0.0, %v1307
  %v1309 = vpop.f32.mrf.mxu0
  %v1310 = vadd.f32 0.0, %v1309
  %v1311 = vpop.f32.mrf.mxu0
  %v1312 = vadd.f32 0.0, %v1311
  %v1313 = vpop.f32.mrf.mxu0
  %v1314 = vadd.f32 0.0, %v1313
  %1315 = vmatprep.mubr.bf16.mxu0 %v916
  %1316 = vmatmul.mubr.bf16.gmra.mxu0 %v779
  %v1317 = vpop.f32.mrf.mxu0
  %v1318 = vadd.f32 0.0, %v1317
  %v1319 = vpop.f32.mrf.mxu0
  %v1320 = vadd.f32 0.0, %v1319
  %v1321 = vpop.f32.mrf.mxu0
  %v1322 = vadd.f32 0.0, %v1321
  %v1323 = vpop.f32.mrf.mxu0
  %v1324 = vadd.f32 0.0, %v1323
  %1325 = vmatprep.mubr.bf16.mxu0 %v919
  %1326 = vmatmul.mubr.bf16.gmra.mxu0 %v781
  %v1327 = vpop.f32.mrf.mxu0
  %v1328 = vadd.f32 0.0, %v1327
  %v1329 = vpop.f32.mrf.mxu0
  %v1330 = vadd.f32 0.0, %v1329
  %v1331 = vpop.f32.mrf.mxu0
  %v1332 = vadd.f32 0.0, %v1331
  %v1333 = vpop.f32.mrf.mxu0
  %v1334 = vadd.f32 0.0, %v1333
  %1335 = vdwg.mxu0
  %v1336 = vpack.c.bf16 %v1242, %v1238
  %v1337 = vpack.c.bf16 %v1244, %v1240
  %v1338 = vpack.c.bf16 %v1252, %v1248
  %v1339 = vpack.c.bf16 %v1254, %v1250
  %v1340 = vpack.c.bf16 %v1262, %v1258
  %v1341 = vpack.c.bf16 %v1264, %v1260
  %v1342 = vpack.c.bf16 %v1272, %v1268
  %v1343 = vpack.c.bf16 %v1274, %v1270
  %v1344 = vpack.c.bf16 %v1282, %v1278
  %v1345 = vpack.c.bf16 %v1284, %v1280
  %v1346 = vpack.c.bf16 %v1292, %v1288
  %v1347 = vpack.c.bf16 %v1294, %v1290
  %v1348 = vpack.c.bf16 %v1302, %v1298
  %v1349 = vpack.c.bf16 %v1304, %v1300
  %v1350 = vpack.c.bf16 %v1312, %v1308
  %v1351 = vpack.c.bf16 %v1314, %v1310
  %v1352 = vpack.c.bf16 %v1322, %v1318
  %v1353 = vpack.c.bf16 %v1324, %v1320
  %v1354 = vpack.c.bf16 %v1332, %v1328
  %v1355 = vpack.c.bf16 %v1334, %v1330
  %s1356 = scalar_lea.vmem %s3, 160
  %v1357 = vld [vmem:[%s1356] sm:$0xff]
  %v1358 = vld [vmem:[%s1356 + $0x8] sm:$0xff]
  %v1359 = vld [vmem:[%s1356 + $0x10] sm:$0xff]
  %v1360 = vld [vmem:[%s1356 + $0x18] sm:$0xff]
  %v1361 = vld [vmem:[%s1356 + $0x20] sm:$0xff]
  %v1362 = vld [vmem:[%s1356 + $0x28] sm:$0xff]
  %v1363 = vld [vmem:[%s1356 + $0x30] sm:$0xff]
  %v1364 = vld [vmem:[%s1356 + $0x38] sm:$0xff]
  %v1365 = vld [vmem:[%s1356 + $0x40] sm:$0xff]
  %v1366 = vld [vmem:[%s1356 + $0x48] sm:$0xff]
  %v1367 = vld [vmem:[%s1356 + $0x50] sm:$0xff]
  %v1368 = vld [vmem:[%s1356 + $0x58] sm:$0xff]
  %v1369 = vld [vmem:[%s1356 + $0x60] sm:$0xff]
  %v1370 = vld [vmem:[%s1356 + $0x68] sm:$0xff]
  %v1371 = vld [vmem:[%s1356 + $0x70] sm:$0xff]
  %v1372 = vld [vmem:[%s1356 + $0x78] sm:$0xff]
  %v1373 = vld [vmem:[%s1356 + $0x80] sm:$0xff]
  %v1374 = vld [vmem:[%s1356 + $0x88] sm:$0xff]
  %v1375 = vld [vmem:[%s1356 + $0x90] sm:$0xff]
  %v1376 = vld [vmem:[%s1356 + $0x98] sm:$0xff]
  %v1397 = vunpack.c.l.b16 %v1357
  %v1398 = vunpack.c.h.b16 %v1357
  %v1399 = vunpack.c.l.b16 %v1358
  %v1400 = vunpack.c.h.b16 %v1358
  %v1401 = vunpack.c.l.b16 %v1359
  %v1402 = vunpack.c.h.b16 %v1359
  %v1403 = vunpack.c.l.b16 %v1360
  %v1404 = vunpack.c.h.b16 %v1360
  %v1405 = vunpack.c.l.b16 %v1361
  %v1406 = vunpack.c.h.b16 %v1361
  %v1407 = vunpack.c.l.b16 %v1362
  %v1408 = vunpack.c.h.b16 %v1362
  %v1409 = vunpack.c.l.b16 %v1363
  %v1410 = vunpack.c.h.b16 %v1363
  %v1411 = vunpack.c.l.b16 %v1364
  %v1412 = vunpack.c.h.b16 %v1364
  %v1413 = vunpack.c.l.b16 %v1365
  %v1414 = vunpack.c.h.b16 %v1365
  %v1415 = vunpack.c.l.b16 %v1366
  %v1416 = vunpack.c.h.b16 %v1366
  %v1417 = vunpack.c.l.b16 %v1367
  %v1418 = vunpack.c.h.b16 %v1367
  %v1419 = vunpack.c.l.b16 %v1368
  %v1420 = vunpack.c.h.b16 %v1368
  %v1421 = vunpack.c.l.b16 %v1369
  %v1422 = vunpack.c.h.b16 %v1369
  %v1423 = vunpack.c.l.b16 %v1370
  %v1424 = vunpack.c.h.b16 %v1370
  %v1425 = vunpack.c.l.b16 %v1371
  %v1426 = vunpack.c.h.b16 %v1371
  %v1427 = vunpack.c.l.b16 %v1372
  %v1428 = vunpack.c.h.b16 %v1372
  %v1429 = vunpack.c.l.b16 %v1373
  %v1430 = vunpack.c.h.b16 %v1373
  %v1431 = vunpack.c.l.b16 %v1374
  %v1432 = vunpack.c.h.b16 %v1374
  %v1433 = vunpack.c.l.b16 %v1375
  %v1434 = vunpack.c.h.b16 %v1375
  %v1435 = vunpack.c.l.b16 %v1376
  %v1436 = vunpack.c.h.b16 %v1376
  %v1437 = vpack.c.b16 %v1399, %v1397
  %v1438 = vpack.c.b16 %v1400, %v1398
  %v1439 = vpack.c.b16 %v1403, %v1401
  %v1440 = vpack.c.b16 %v1404, %v1402
  %v1441 = vpack.c.b16 %v1407, %v1405
  %v1442 = vpack.c.b16 %v1408, %v1406
  %v1443 = vpack.c.b16 %v1411, %v1409
  %v1444 = vpack.c.b16 %v1412, %v1410
  %v1445 = vpack.c.b16 %v1415, %v1413
  %v1446 = vpack.c.b16 %v1416, %v1414
  %v1447 = vpack.c.b16 %v1419, %v1417
  %v1448 = vpack.c.b16 %v1420, %v1418
  %v1449 = vpack.c.b16 %v1423, %v1421
  %v1450 = vpack.c.b16 %v1424, %v1422
  %v1451 = vpack.c.b16 %v1427, %v1425
  %v1452 = vpack.c.b16 %v1428, %v1426
  %v1453 = vpack.c.b16 %v1431, %v1429
  %v1454 = vpack.c.b16 %v1432, %v1430
  %v1455 = vpack.c.b16 %v1435, %v1433
  %v1456 = vpack.c.b16 %v1436, %v1434
  %vm1467 = vcmask 261120
  %v1469 = vsel %vm1467, %v1438, 0
  %v1472 = vsel %vm1467, %v1440, 0
  %v1475 = vsel %vm1467, %v1442, 0
  %v1478 = vsel %vm1467, %v1444, 0
  %v1481 = vsel %vm1467, %v1446, 0
  %v1484 = vsel %vm1467, %v1448, 0
  %v1487 = vsel %vm1467, %v1450, 0
  %v1490 = vsel %vm1467, %v1452, 0
  %v1493 = vsel %vm1467, %v1454, 0
  %v1496 = vsel %vm1467, %v1456, 0
  %1498 = vmatprep.subr.bf16.mxu0 %v1351
  %1499 = vmatpush1.bf16.msra.mxu0 %v1350
  %1500 = vmatprep.subr.bf16.mxu0 %v1349
  %1501 = vmatpush1.bf16.msra.mxu0 %v1348
  %1502 = vmatprep.subr.bf16.mxu0 %v1347
  %1503 = vmatpush1.bf16.msra.mxu0 %v1346
  %1504 = vmatprep.subr.bf16.mxu0 %v1345
  %1505 = vmatpush1.bf16.msra.mxu0 %v1344
  %1506 = vmatprep.subr.bf16.mxu0 %v1343
  %1507 = vmatpush1.bf16.msra.mxu0 %v1342
  %1508 = vmatprep.subr.bf16.mxu0 %v1341
  %1509 = vmatpush1.bf16.msra.mxu0 %v1340
  %1510 = vmatprep.subr.bf16.mxu0 %v1339
  %1511 = vmatpush1.bf16.msra.mxu0 %v1338
  %1512 = vmatprep.subr.bf16.mxu0 %v1337
  %1513 = vmatpush1.bf16.msra.mxu0 %v1336
  %1514 = vmatprep.subr.bf16.mxu0 0
  %1515 = vmatpush2.bf16.msra.mxu0 0
  %1516 = vmatprep.subr.bf16.mxu0 0
  %1517 = vmatpush2.bf16.msra.mxu0 0
  %1518 = vmatprep.subr.bf16.mxu0 0
  %1519 = vmatpush2.bf16.msra.mxu0 0
  %1520 = vmatprep.subr.bf16.mxu0 0
  %1521 = vmatpush2.bf16.msra.mxu0 0
  %1522 = vmatprep.subr.bf16.mxu0 0
  %1523 = vmatpush2.bf16.msra.mxu0 0
  %1524 = vmatprep.subr.bf16.mxu0 0
  %1525 = vmatpush2.bf16.msra.mxu0 0
  %1526 = vmatprep.subr.bf16.mxu0 %v1355
  %1527 = vmatpush2.bf16.msra.mxu0 %v1354
  %1528 = vmatprep.subr.bf16.mxu0 %v1353
  %1529 = vmatpush2.bf16.msra.mxu0 %v1352
  %1530 = vmatprep.mubr.bf16.mxu0 %v1469
  %1531 = vmatmul.mubr.bf16.gmra.mxu0 %v1437
  %v1532 = vpop.f32.mrf.mxu0
  %v1533 = vadd.f32 0.0, %v1532
  %v1534 = vpop.f32.mrf.mxu0
  %v1535 = vadd.f32 0.0, %v1534
  %v1536 = vpop.f32.mrf.mxu0
  %v1537 = vadd.f32 0.0, %v1536
  %v1538 = vpop.f32.mrf.mxu0
  %v1539 = vadd.f32 0.0, %v1538
  %1540 = vmatprep.mubr.bf16.mxu0 %v1472
  %1541 = vmatmul.mubr.bf16.gmra.mxu0 %v1439
  %v1542 = vpop.f32.mrf.mxu0
  %v1543 = vadd.f32 0.0, %v1542
  %v1544 = vpop.f32.mrf.mxu0
  %v1545 = vadd.f32 0.0, %v1544
  %v1546 = vpop.f32.mrf.mxu0
  %v1547 = vadd.f32 0.0, %v1546
  %v1548 = vpop.f32.mrf.mxu0
  %v1549 = vadd.f32 0.0, %v1548
  %1550 = vmatprep.mubr.bf16.mxu0 %v1475
  %1551 = vmatmul.mubr.bf16.gmra.mxu0 %v1441
  %v1552 = vpop.f32.mrf.mxu0
  %v1553 = vadd.f32 0.0, %v1552
  %v1554 = vpop.f32.mrf.mxu0
  %v1555 = vadd.f32 0.0, %v1554
  %v1556 = vpop.f32.mrf.mxu0
  %v1557 = vadd.f32 0.0, %v1556
  %v1558 = vpop.f32.mrf.mxu0
  %v1559 = vadd.f32 0.0, %v1558
  %1560 = vmatprep.mubr.bf16.mxu0 %v1478
  %1561 = vmatmul.mubr.bf16.gmra.mxu0 %v1443
  %v1562 = vpop.f32.mrf.mxu0
  %v1563 = vadd.f32 0.0, %v1562
  %v1564 = vpop.f32.mrf.mxu0
  %v1565 = vadd.f32 0.0, %v1564
  %v1566 = vpop.f32.mrf.mxu0
  %v1567 = vadd.f32 0.0, %v1566
  %v1568 = vpop.f32.mrf.mxu0
  %v1569 = vadd.f32 0.0, %v1568
  %1570 = vmatprep.mubr.bf16.mxu0 %v1481
  %1571 = vmatmul.mubr.bf16.gmra.mxu0 %v1445
  %v1572 = vpop.f32.mrf.mxu0
  %v1573 = vadd.f32 0.0, %v1572
  %v1574 = vpop.f32.mrf.mxu0
  %v1575 = vadd.f32 0.0, %v1574
  %v1576 = vpop.f32.mrf.mxu0
  %v1577 = vadd.f32 0.0, %v1576
  %v1578 = vpop.f32.mrf.mxu0
  %v1579 = vadd.f32 0.0, %v1578
  %1580 = vmatprep.mubr.bf16.mxu0 %v1484
  %1581 = vmatmul.mubr.bf16.gmra.mxu0 %v1447
  %v1582 = vpop.f32.mrf.mxu0
  %v1583 = vadd.f32 0.0, %v1582
  %v1584 = vpop.f32.mrf.mxu0
  %v1585 = vadd.f32 0.0, %v1584
  %v1586 = vpop.f32.mrf.mxu0
  %v1587 = vadd.f32 0.0, %v1586
  %v1588 = vpop.f32.mrf.mxu0
  %v1589 = vadd.f32 0.0, %v1588
  %1590 = vmatprep.mubr.bf16.mxu0 %v1487
  %1591 = vmatmul.mubr.bf16.gmra.mxu0 %v1449
  %v1592 = vpop.f32.mrf.mxu0
  %v1593 = vadd.f32 0.0, %v1592
  %v1594 = vpop.f32.mrf.mxu0
  %v1595 = vadd.f32 0.0, %v1594
  %v1596 = vpop.f32.mrf.mxu0
  %v1597 = vadd.f32 0.0, %v1596
  %v1598 = vpop.f32.mrf.mxu0
  %v1599 = vadd.f32 0.0, %v1598
  %1600 = vmatprep.mubr.bf16.mxu0 %v1490
  %1601 = vmatmul.mubr.bf16.gmra.mxu0 %v1451
  %v1602 = vpop.f32.mrf.mxu0
  %v1603 = vadd.f32 0.0, %v1602
  %v1604 = vpop.f32.mrf.mxu0
  %v1605 = vadd.f32 0.0, %v1604
  %v1606 = vpop.f32.mrf.mxu0
  %v1607 = vadd.f32 0.0, %v1606
  %v1608 = vpop.f32.mrf.mxu0
  %v1609 = vadd.f32 0.0, %v1608
  %1610 = vmatprep.mubr.bf16.mxu0 %v1493
  %1611 = vmatmul.mubr.bf16.gmra.mxu0 %v1453
  %v1612 = vpop.f32.mrf.mxu0
  %v1613 = vadd.f32 0.0, %v1612
  %v1614 = vpop.f32.mrf.mxu0
  %v1615 = vadd.f32 0.0, %v1614
  %v1616 = vpop.f32.mrf.mxu0
  %v1617 = vadd.f32 0.0, %v1616
  %v1618 = vpop.f32.mrf.mxu0
  %v1619 = vadd.f32 0.0, %v1618
  %1620 = vmatprep.mubr.bf16.mxu0 %v1496
  %1621 = vmatmul.mubr.bf16.gmra.mxu0 %v1455
  %v1622 = vpop.f32.mrf.mxu0
  %v1623 = vadd.f32 0.0, %v1622
  %v1624 = vpop.f32.mrf.mxu0
  %v1625 = vadd.f32 0.0, %v1624
  %v1626 = vpop.f32.mrf.mxu0
  %v1627 = vadd.f32 0.0, %v1626
  %v1628 = vpop.f32.mrf.mxu0
  %v1629 = vadd.f32 0.0, %v1628
  %1630 = vdwg.mxu0
  %v1651 = vunpack.c.l.b16 %v1074
  %v1652 = vunpack.c.h.b16 %v1074
  %v1653 = vunpack.c.l.b16 %v1075
  %v1654 = vunpack.c.h.b16 %v1075
  %v1655 = vunpack.c.l.b16 %v1076
  %v1656 = vunpack.c.h.b16 %v1076
  %v1657 = vunpack.c.l.b16 %v1077
  %v1658 = vunpack.c.h.b16 %v1077
  %v1659 = vunpack.c.l.b16 %v1078
  %v1660 = vunpack.c.h.b16 %v1078
  %v1661 = vunpack.c.l.b16 %v1079
  %v1662 = vunpack.c.h.b16 %v1079
  %v1663 = vunpack.c.l.b16 %v1080
  %v1664 = vunpack.c.h.b16 %v1080
  %v1665 = vunpack.c.l.b16 %v1081
  %v1666 = vunpack.c.h.b16 %v1081
  %v1667 = vunpack.c.l.b16 %v1082
  %v1668 = vunpack.c.h.b16 %v1082
  %v1669 = vunpack.c.l.b16 %v1083
  %v1670 = vunpack.c.h.b16 %v1083
  %v1671 = vunpack.c.l.b16 %v1084
  %v1672 = vunpack.c.h.b16 %v1084
  %v1673 = vunpack.c.l.b16 %v1085
  %v1674 = vunpack.c.h.b16 %v1085
  %v1675 = vunpack.c.l.b16 %v1086
  %v1676 = vunpack.c.h.b16 %v1086
  %v1677 = vunpack.c.l.b16 %v1087
  %v1678 = vunpack.c.h.b16 %v1087
  %v1679 = vunpack.c.l.b16 %v1088
  %v1680 = vunpack.c.h.b16 %v1088
  %v1681 = vunpack.c.l.b16 %v1089
  %v1682 = vunpack.c.h.b16 %v1089
  %v1683 = vunpack.c.l.b16 %v1090
  %v1684 = vunpack.c.h.b16 %v1090
  %v1685 = vunpack.c.l.b16 %v1091
  %v1686 = vunpack.c.h.b16 %v1091
  %v1687 = vunpack.c.l.b16 %v1092
  %v1688 = vunpack.c.h.b16 %v1092
  %v1689 = vunpack.c.l.b16 %v1093
  %v1690 = vunpack.c.h.b16 %v1093
  %v1691 = vpack.c.b16 %v1653, %v1651
  %v1692 = vpack.c.b16 %v1654, %v1652
  %v1693 = vpack.c.b16 %v1657, %v1655
  %v1694 = vpack.c.b16 %v1658, %v1656
  %v1695 = vpack.c.b16 %v1661, %v1659
  %v1696 = vpack.c.b16 %v1662, %v1660
  %v1697 = vpack.c.b16 %v1665, %v1663
  %v1698 = vpack.c.b16 %v1666, %v1664
  %v1699 = vpack.c.b16 %v1669, %v1667
  %v1700 = vpack.c.b16 %v1670, %v1668
  %v1701 = vpack.c.b16 %v1673, %v1671
  %v1702 = vpack.c.b16 %v1674, %v1672
  %v1703 = vpack.c.b16 %v1677, %v1675
  %v1704 = vpack.c.b16 %v1678, %v1676
  %v1705 = vpack.c.b16 %v1681, %v1679
  %v1706 = vpack.c.b16 %v1682, %v1680
  %v1707 = vpack.c.b16 %v1685, %v1683
  %v1708 = vpack.c.b16 %v1686, %v1684
  %v1709 = vpack.c.b16 %v1689, %v1687
  %v1710 = vpack.c.b16 %v1690, %v1688
  %v1722 = vsel %vm1467, %v1692, 0
  %v1725 = vsel %vm1467, %v1694, 0
  %v1728 = vsel %vm1467, %v1696, 0
  %v1731 = vsel %vm1467, %v1698, 0
  %v1734 = vsel %vm1467, %v1700, 0
  %v1737 = vsel %vm1467, %v1702, 0
  %v1740 = vsel %vm1467, %v1704, 0
  %v1743 = vsel %vm1467, %v1706, 0
  %v1746 = vsel %vm1467, %v1708, 0
  %v1749 = vsel %vm1467, %v1710, 0
  %1751 = vmatprep.subr.bf16.mxu0 %v1069
  %1752 = vmatpush1.bf16.msra.mxu0 %v1068
  %1753 = vmatprep.subr.bf16.mxu0 %v1067
  %1754 = vmatpush1.bf16.msra.mxu0 %v1066
  %1755 = vmatprep.subr.bf16.mxu0 %v1065
  %1756 = vmatpush1.bf16.msra.mxu0 %v1064
  %1757 = vmatprep.subr.bf16.mxu0 %v1063
  %1758 = vmatpush1.bf16.msra.mxu0 %v1062
  %1759 = vmatprep.subr.bf16.mxu0 %v1061
  %1760 = vmatpush1.bf16.msra.mxu0 %v1060
  %1761 = vmatprep.subr.bf16.mxu0 %v1059
  %1762 = vmatpush1.bf16.msra.mxu0 %v1058
  %1763 = vmatprep.subr.bf16.mxu0 %v1057
  %1764 = vmatpush1.bf16.msra.mxu0 %v1056
  %1765 = vmatprep.subr.bf16.mxu0 %v1055
  %1766 = vmatpush1.bf16.msra.mxu0 %v1054
  %1767 = vmatprep.subr.bf16.mxu0 0
  %1768 = vmatpush2.bf16.msra.mxu0 0
  %1769 = vmatprep.subr.bf16.mxu0 0
  %1770 = vmatpush2.bf16.msra.mxu0 0
  %1771 = vmatprep.subr.bf16.mxu0 0
  %1772 = vmatpush2.bf16.msra.mxu0 0
  %1773 = vmatprep.subr.bf16.mxu0 0
  %1774 = vmatpush2.bf16.msra.mxu0 0
  %1775 = vmatprep.subr.bf16.mxu0 0
  %1776 = vmatpush2.bf16.msra.mxu0 0
  %1777 = vmatprep.subr.bf16.mxu0 0
  %1778 = vmatpush2.bf16.msra.mxu0 0
  %1779 = vmatprep.subr.bf16.mxu0 %v1073
  %1780 = vmatpush2.bf16.msra.mxu0 %v1072
  %1781 = vmatprep.subr.bf16.mxu0 %v1071
  %1782 = vmatpush2.bf16.msra.mxu0 %v1070
  %1783 = vmatprep.mubr.bf16.mxu0 %v1722
  %1784 = vmatmul.mubr.bf16.gmra.mxu0 %v1691
  %v1785 = vpop.f32.mrf.mxu0
  %v1786 = vadd.f32 %v1533, %v1785
  %v1787 = vpop.f32.mrf.mxu0
  %v1788 = vadd.f32 %v1535, %v1787
  %v1789 = vpop.f32.mrf.mxu0
  %v1790 = vadd.f32 %v1537, %v1789
  %v1791 = vpop.f32.mrf.mxu0
  %v1792 = vadd.f32 %v1539, %v1791
  %1793 = vmatprep.mubr.bf16.mxu0 %v1725
  %1794 = vmatmul.mubr.bf16.gmra.mxu0 %v1693
  %v1795 = vpop.f32.mrf.mxu0
  %v1796 = vadd.f32 %v1543, %v1795
  %v1797 = vpop.f32.mrf.mxu0
  %v1798 = vadd.f32 %v1545, %v1797
  %v1799 = vpop.f32.mrf.mxu0
  %v1800 = vadd.f32 %v1547, %v1799
  %v1801 = vpop.f32.mrf.mxu0
  %v1802 = vadd.f32 %v1549, %v1801
  %1803 = vmatprep.mubr.bf16.mxu0 %v1728
  %1804 = vmatmul.mubr.bf16.gmra.mxu0 %v1695
  %v1805 = vpop.f32.mrf.mxu0
  %v1806 = vadd.f32 %v1553, %v1805
  %v1807 = vpop.f32.mrf.mxu0
  %v1808 = vadd.f32 %v1555, %v1807
  %v1809 = vpop.f32.mrf.mxu0
  %v1810 = vadd.f32 %v1557, %v1809
  %v1811 = vpop.f32.mrf.mxu0
  %v1812 = vadd.f32 %v1559, %v1811
  %1813 = vmatprep.mubr.bf16.mxu0 %v1731
  %1814 = vmatmul.mubr.bf16.gmra.mxu0 %v1697
  %v1815 = vpop.f32.mrf.mxu0
  %v1816 = vadd.f32 %v1563, %v1815
  %v1817 = vpop.f32.mrf.mxu0
  %v1818 = vadd.f32 %v1565, %v1817
  %v1819 = vpop.f32.mrf.mxu0
  %v1820 = vadd.f32 %v1567, %v1819
  %v1821 = vpop.f32.mrf.mxu0
  %v1822 = vadd.f32 %v1569, %v1821
  %1823 = vmatprep.mubr.bf16.mxu0 %v1734
  %1824 = vmatmul.mubr.bf16.gmra.mxu0 %v1699
  %v1825 = vpop.f32.mrf.mxu0
  %v1826 = vadd.f32 %v1573, %v1825
  %v1827 = vpop.f32.mrf.mxu0
  %v1828 = vadd.f32 %v1575, %v1827
  %v1829 = vpop.f32.mrf.mxu0
  %v1830 = vadd.f32 %v1577, %v1829
  %v1831 = vpop.f32.mrf.mxu0
  %v1832 = vadd.f32 %v1579, %v1831
  %1833 = vmatprep.mubr.bf16.mxu0 %v1737
  %1834 = vmatmul.mubr.bf16.gmra.mxu0 %v1701
  %v1835 = vpop.f32.mrf.mxu0
  %v1836 = vadd.f32 %v1583, %v1835
  %v1837 = vpop.f32.mrf.mxu0
  %v1838 = vadd.f32 %v1585, %v1837
  %v1839 = vpop.f32.mrf.mxu0
  %v1840 = vadd.f32 %v1587, %v1839
  %v1841 = vpop.f32.mrf.mxu0
  %v1842 = vadd.f32 %v1589, %v1841
  %1843 = vmatprep.mubr.bf16.mxu0 %v1740
  %1844 = vmatmul.mubr.bf16.gmra.mxu0 %v1703
  %v1845 = vpop.f32.mrf.mxu0
  %v1846 = vadd.f32 %v1593, %v1845
  %v1847 = vpop.f32.mrf.mxu0
  %v1848 = vadd.f32 %v1595, %v1847
  %v1849 = vpop.f32.mrf.mxu0
  %v1850 = vadd.f32 %v1597, %v1849
  %v1851 = vpop.f32.mrf.mxu0
  %v1852 = vadd.f32 %v1599, %v1851
  %1853 = vmatprep.mubr.bf16.mxu0 %v1743
  %1854 = vmatmul.mubr.bf16.gmra.mxu0 %v1705
  %v1855 = vpop.f32.mrf.mxu0
  %v1856 = vadd.f32 %v1603, %v1855
  %v1857 = vpop.f32.mrf.mxu0
  %v1858 = vadd.f32 %v1605, %v1857
  %v1859 = vpop.f32.mrf.mxu0
  %v1860 = vadd.f32 %v1607, %v1859
  %v1861 = vpop.f32.mrf.mxu0
  %v1862 = vadd.f32 %v1609, %v1861
  %1863 = vmatprep.mubr.bf16.mxu0 %v1746
  %1864 = vmatmul.mubr.bf16.gmra.mxu0 %v1707
  %v1865 = vpop.f32.mrf.mxu0
  %v1866 = vadd.f32 %v1613, %v1865
  %v1867 = vpop.f32.mrf.mxu0
  %v1868 = vadd.f32 %v1615, %v1867
  %v1869 = vpop.f32.mrf.mxu0
  %v1870 = vadd.f32 %v1617, %v1869
  %v1871 = vpop.f32.mrf.mxu0
  %v1872 = vadd.f32 %v1619, %v1871
  %1873 = vmatprep.mubr.bf16.mxu0 %v1749
  %1874 = vmatmul.mubr.bf16.gmra.mxu0 %v1709
  %v1875 = vpop.f32.mrf.mxu0
  %v1876 = vadd.f32 %v1623, %v1875
  %v1877 = vpop.f32.mrf.mxu0
  %v1878 = vadd.f32 %v1625, %v1877
  %v1879 = vpop.f32.mrf.mxu0
  %v1880 = vadd.f32 %v1627, %v1879
  %v1881 = vpop.f32.mrf.mxu0
  %v1882 = vadd.f32 %v1629, %v1881
  %1883 = vdwg.mxu0
  %s1884 = scalar_lea.vmem %s4, 288
  %v1885 = vld [vmem:[%s1884] sm:$0xff]
  %v1886 = vld [vmem:[%s1884 + $0x8] sm:$0xff]
  %v1887 = vld [vmem:[%s1884 + $0x10] sm:$0xff]
  %v1888 = vld [vmem:[%s1884 + $0x18] sm:$0xff]
  %v1889 = vld [vmem:[%s1884 + $0x20] sm:$0xff]
  %v1890 = vld [vmem:[%s1884 + $0x28] sm:$0xff]
  %v1891 = vld [vmem:[%s1884 + $0x30] sm:$0xff]
  %v1892 = vld [vmem:[%s1884 + $0x38] sm:$0xff]
  %v1893 = vld [vmem:[%s1884 + $0x40] sm:$0xff]
  %v1894 = vld [vmem:[%s1884 + $0x48] sm:$0xff]
  %v1895 = vld [vmem:[%s1884 + $0x50] sm:$0xff]
  %v1896 = vld [vmem:[%s1884 + $0x58] sm:$0xff]
  %v1897 = vld [vmem:[%s1884 + $0x60] sm:$0xff]
  %v1898 = vld [vmem:[%s1884 + $0x68] sm:$0xff]
  %v1899 = vld [vmem:[%s1884 + $0x70] sm:$0xff]
  %v1900 = vld [vmem:[%s1884 + $0x78] sm:$0xff]
  %v1901 = vld [vmem:[%s1884 + $0x80] sm:$0xff]
  %v1902 = vld [vmem:[%s1884 + $0x88] sm:$0xff]
  %v1921 = vunpack.c.l.b16 %v1885
  %v1922 = vunpack.c.h.b16 %v1885
  %v1923 = vunpack.c.l.b16 %v1886
  %v1924 = vunpack.c.h.b16 %v1886
  %v1925 = vunpack.c.l.b16 %v1887
  %v1926 = vunpack.c.h.b16 %v1887
  %v1927 = vunpack.c.l.b16 %v1888
  %v1928 = vunpack.c.h.b16 %v1888
  %v1929 = vunpack.c.l.b16 %v1889
  %v1930 = vunpack.c.h.b16 %v1889
  %v1931 = vunpack.c.l.b16 %v1890
  %v1932 = vunpack.c.h.b16 %v1890
  %v1933 = vunpack.c.l.b16 %v1891
  %v1934 = vunpack.c.h.b16 %v1891
  %v1935 = vunpack.c.l.b16 %v1892
  %v1936 = vunpack.c.h.b16 %v1892
  %v1937 = vunpack.c.l.b16 %v1893
  %v1938 = vunpack.c.h.b16 %v1893
  %v1939 = vunpack.c.l.b16 %v1894
  %v1940 = vunpack.c.h.b16 %v1894
  %v1941 = vunpack.c.l.b16 %v1895
  %v1942 = vunpack.c.h.b16 %v1895
  %v1943 = vunpack.c.l.b16 %v1896
  %v1944 = vunpack.c.h.b16 %v1896
  %v1945 = vunpack.c.l.b16 %v1897
  %v1946 = vunpack.c.h.b16 %v1897
  %v1947 = vunpack.c.l.b16 %v1898
  %v1948 = vunpack.c.h.b16 %v1898
  %v1949 = vunpack.c.l.b16 %v1899
  %v1950 = vunpack.c.h.b16 %v1899
  %v1951 = vunpack.c.l.b16 %v1900
  %v1952 = vunpack.c.h.b16 %v1900
  %v1953 = vunpack.c.l.b16 %v1901
  %v1954 = vunpack.c.h.b16 %v1901
  %v1955 = vunpack.c.l.b16 %v1902
  %v1956 = vunpack.c.h.b16 %v1902
  %v1957 = vpack.c.b16 %v1923, %v1921
  %v1958 = vpack.c.b16 %v1924, %v1922
  %v1959 = vpack.c.b16 %v1927, %v1925
  %v1960 = vpack.c.b16 %v1928, %v1926
  %v1961 = vpack.c.b16 %v1931, %v1929
  %v1962 = vpack.c.b16 %v1932, %v1930
  %v1963 = vpack.c.b16 %v1935, %v1933
  %v1964 = vpack.c.b16 %v1936, %v1934
  %v1965 = vpack.c.b16 %v1939, %v1937
  %v1966 = vpack.c.b16 %v1940, %v1938
  %v1967 = vpack.c.b16 %v1943, %v1941
  %v1968 = vpack.c.b16 %v1944, %v1942
  %v1969 = vpack.c.b16 %v1947, %v1945
  %v1970 = vpack.c.b16 %v1948, %v1946
  %v1971 = vpack.c.b16 %v1951, %v1949
  %v1972 = vpack.c.b16 %v1952, %v1950
  %v1973 = vpack.c.b16 %v1955, %v1953
  %v1974 = vpack.c.b16 %v1956, %v1954
  %1993 = vmatprep.subr.bf16.mxu0 %v1972
  %1994 = vmatpush1.bf16.msra.mxu0 %v1971
  %1995 = vmatprep.subr.bf16.mxu0 %v1970
  %1996 = vmatpush1.bf16.msra.mxu0 %v1969
  %1997 = vmatprep.subr.bf16.mxu0 %v1968
  %1998 = vmatpush1.bf16.msra.mxu0 %v1967
  %1999 = vmatprep.subr.bf16.mxu0 %v1966
  %2000 = vmatpush1.bf16.msra.mxu0 %v1965
  %2001 = vmatprep.subr.bf16.mxu0 %v1964
  %2002 = vmatpush1.bf16.msra.mxu0 %v1963
  %2003 = vmatprep.subr.bf16.mxu0 %v1962
  %2004 = vmatpush1.bf16.msra.mxu0 %v1961
  %2005 = vmatprep.subr.bf16.mxu0 %v1960
  %2006 = vmatpush1.bf16.msra.mxu0 %v1959
  %2007 = vmatprep.subr.bf16.mxu0 %v1958
  %2008 = vmatpush1.bf16.msra.mxu0 %v1957
  %2009 = vmatprep.subr.bf16.mxu0 0
  %2010 = vmatpush2.bf16.msra.mxu0 0
  %2011 = vmatprep.subr.bf16.mxu0 0
  %2012 = vmatpush2.bf16.msra.mxu0 0
  %2013 = vmatprep.subr.bf16.mxu0 0
  %2014 = vmatpush2.bf16.msra.mxu0 0
  %2015 = vmatprep.subr.bf16.mxu0 0
  %2016 = vmatpush2.bf16.msra.mxu0 0
  %2017 = vmatprep.subr.bf16.mxu0 0
  %2018 = vmatpush2.bf16.msra.mxu0 0
  %2019 = vmatprep.subr.bf16.mxu0 0
  %2020 = vmatpush2.bf16.msra.mxu0 0
  %2021 = vmatprep.subr.bf16.mxu0 0
  %2022 = vmatpush2.bf16.msra.mxu0 0
  %2023 = vmatprep.subr.bf16.mxu0 %v1974
  %2024 = vmatpush2.bf16.msra.mxu0 %v1973
  %2025 = vmatprep.mubr.bf16.mxu0 %v892
  %2026 = vmatmul.mubr.bf16.gmra.mxu0 %v763
  %v2027 = vpop.f32.mrf.mxu0
  %v2028 = vadd.f32 0.0, %v2027
  %v2029 = vpop.f32.mrf.mxu0
  %v2030 = vadd.f32 0.0, %v2029
  %v2031 = vpop.f32.mrf.mxu0
  %v2032 = vadd.f32 0.0, %v2031
  %v2033 = vpop.f32.mrf.mxu0
  %v2034 = vadd.f32 0.0, %v2033
  %2035 = vmatprep.mubr.bf16.mxu0 %v895
  %2036 = vmatmul.mubr.bf16.gmra.mxu0 %v765
  %v2037 = vpop.f32.mrf.mxu0
  %v2038 = vadd.f32 0.0, %v2037
  %v2039 = vpop.f32.mrf.mxu0
  %v2040 = vadd.f32 0.0, %v2039
  %v2041 = vpop.f32.mrf.mxu0
  %v2042 = vadd.f32 0.0, %v2041
  %v2043 = vpop.f32.mrf.mxu0
  %v2044 = vadd.f32 0.0, %v2043
  %2045 = vmatprep.mubr.bf16.mxu0 %v898
  %2046 = vmatmul.mubr.bf16.gmra.mxu0 %v767
  %v2047 = vpop.f32.mrf.mxu0
  %v2048 = vadd.f32 0.0, %v2047
  %v2049 = vpop.f32.mrf.mxu0
  %v2050 = vadd.f32 0.0, %v2049
  %v2051 = vpop.f32.mrf.mxu0
  %v2052 = vadd.f32 0.0, %v2051
  %v2053 = vpop.f32.mrf.mxu0
  %v2054 = vadd.f32 0.0, %v2053
  %2055 = vmatprep.mubr.bf16.mxu0 %v901
  %2056 = vmatmul.mubr.bf16.gmra.mxu0 %v769
  %v2057 = vpop.f32.mrf.mxu0
  %v2058 = vadd.f32 0.0, %v2057
  %v2059 = vpop.f32.mrf.mxu0
  %v2060 = vadd.f32 0.0, %v2059
  %v2061 = vpop.f32.mrf.mxu0
  %v2062 = vadd.f32 0.0, %v2061
  %v2063 = vpop.f32.mrf.mxu0
  %v2064 = vadd.f32 0.0, %v2063
  %2065 = vmatprep.mubr.bf16.mxu0 %v904
  %2066 = vmatmul.mubr.bf16.gmra.mxu0 %v771
  %v2067 = vpop.f32.mrf.mxu0
  %v2068 = vadd.f32 0.0, %v2067
  %v2069 = vpop.f32.mrf.mxu0
  %v2070 = vadd.f32 0.0, %v2069
  %v2071 = vpop.f32.mrf.mxu0
  %v2072 = vadd.f32 0.0, %v2071
  %v2073 = vpop.f32.mrf.mxu0
  %v2074 = vadd.f32 0.0, %v2073
  %2075 = vmatprep.mubr.bf16.mxu0 %v907
  %2076 = vmatmul.mubr.bf16.gmra.mxu0 %v773
  %v2077 = vpop.f32.mrf.mxu0
  %v2078 = vadd.f32 0.0, %v2077
  %v2079 = vpop.f32.mrf.mxu0
  %v2080 = vadd.f32 0.0, %v2079
  %v2081 = vpop.f32.mrf.mxu0
  %v2082 = vadd.f32 0.0, %v2081
  %v2083 = vpop.f32.mrf.mxu0
  %v2084 = vadd.f32 0.0, %v2083
  %2085 = vmatprep.mubr.bf16.mxu0 %v910
  %2086 = vmatmul.mubr.bf16.gmra.mxu0 %v775
  %v2087 = vpop.f32.mrf.mxu0
  %v2088 = vadd.f32 0.0, %v2087
  %v2089 = vpop.f32.mrf.mxu0
  %v2090 = vadd.f32 0.0, %v2089
  %v2091 = vpop.f32.mrf.mxu0
  %v2092 = vadd.f32 0.0, %v2091
  %v2093 = vpop.f32.mrf.mxu0
  %v2094 = vadd.f32 0.0, %v2093
  %2095 = vmatprep.mubr.bf16.mxu0 %v913
  %2096 = vmatmul.mubr.bf16.gmra.mxu0 %v777
  %v2097 = vpop.f32.mrf.mxu0
  %v2098 = vadd.f32 0.0, %v2097
  %v2099 = vpop.f32.mrf.mxu0
  %v2100 = vadd.f32 0.0, %v2099
  %v2101 = vpop.f32.mrf.mxu0
  %v2102 = vadd.f32 0.0, %v2101
  %v2103 = vpop.f32.mrf.mxu0
  %v2104 = vadd.f32 0.0, %v2103
  %2105 = vmatprep.mubr.bf16.mxu0 %v916
  %2106 = vmatmul.mubr.bf16.gmra.mxu0 %v779
  %v2107 = vpop.f32.mrf.mxu0
  %v2108 = vadd.f32 0.0, %v2107
  %v2109 = vpop.f32.mrf.mxu0
  %v2110 = vadd.f32 0.0, %v2109
  %v2111 = vpop.f32.mrf.mxu0
  %v2112 = vadd.f32 0.0, %v2111
  %v2113 = vpop.f32.mrf.mxu0
  %v2114 = vadd.f32 0.0, %v2113
  %2115 = vmatprep.mubr.bf16.mxu0 %v919
  %2116 = vmatmul.mubr.bf16.gmra.mxu0 %v781
  %v2117 = vpop.f32.mrf.mxu0
  %v2118 = vadd.f32 0.0, %v2117
  %v2119 = vpop.f32.mrf.mxu0
  %v2120 = vadd.f32 0.0, %v2119
  %v2121 = vpop.f32.mrf.mxu0
  %v2122 = vadd.f32 0.0, %v2121
  %v2123 = vpop.f32.mrf.mxu0
  %v2124 = vadd.f32 0.0, %v2123
  %2125 = vdwg.mxu0
  %v2126 = vpack.c.bf16 %v2032, %v2028
  %v2127 = vpack.c.bf16 %v2034, %v2030
  %v2128 = vpack.c.bf16 %v2042, %v2038
  %v2129 = vpack.c.bf16 %v2044, %v2040
  %v2130 = vpack.c.bf16 %v2052, %v2048
  %v2131 = vpack.c.bf16 %v2054, %v2050
  %v2132 = vpack.c.bf16 %v2062, %v2058
  %v2133 = vpack.c.bf16 %v2064, %v2060
  %v2134 = vpack.c.bf16 %v2072, %v2068
  %v2135 = vpack.c.bf16 %v2074, %v2070
  %v2136 = vpack.c.bf16 %v2082, %v2078
  %v2137 = vpack.c.bf16 %v2084, %v2080
  %v2138 = vpack.c.bf16 %v2092, %v2088
  %v2139 = vpack.c.bf16 %v2094, %v2090
  %v2140 = vpack.c.bf16 %v2102, %v2098
  %v2141 = vpack.c.bf16 %v2104, %v2100
  %v2142 = vpack.c.bf16 %v2112, %v2108
  %v2143 = vpack.c.bf16 %v2114, %v2110
  %v2144 = vpack.c.bf16 %v2122, %v2118
  %v2145 = vpack.c.bf16 %v2124, %v2120
  %s2146 = scalar_lea.vmem %s3, 320
  %v2147 = vld [vmem:[%s2146] sm:$0xff]
  %v2148 = vld [vmem:[%s2146 + $0x8] sm:$0xff]
  %v2149 = vld [vmem:[%s2146 + $0x10] sm:$0xff]
  %v2150 = vld [vmem:[%s2146 + $0x18] sm:$0xff]
  %v2151 = vld [vmem:[%s2146 + $0x20] sm:$0xff]
  %v2152 = vld [vmem:[%s2146 + $0x28] sm:$0xff]
  %v2153 = vld [vmem:[%s2146 + $0x30] sm:$0xff]
  %v2154 = vld [vmem:[%s2146 + $0x38] sm:$0xff]
  %v2155 = vld [vmem:[%s2146 + $0x40] sm:$0xff]
  %v2156 = vld [vmem:[%s2146 + $0x48] sm:$0xff]
  %v2157 = vld [vmem:[%s2146 + $0x50] sm:$0xff]
  %v2158 = vld [vmem:[%s2146 + $0x58] sm:$0xff]
  %v2159 = vld [vmem:[%s2146 + $0x60] sm:$0xff]
  %v2160 = vld [vmem:[%s2146 + $0x68] sm:$0xff]
  %v2161 = vld [vmem:[%s2146 + $0x70] sm:$0xff]
  %v2162 = vld [vmem:[%s2146 + $0x78] sm:$0xff]
  %v2163 = vld [vmem:[%s2146 + $0x80] sm:$0xff]
  %v2164 = vld [vmem:[%s2146 + $0x88] sm:$0xff]
  %v2165 = vld [vmem:[%s2146 + $0x90] sm:$0xff]
  %v2166 = vld [vmem:[%s2146 + $0x98] sm:$0xff]
  %v2187 = vunpack.c.l.b16 %v2147
  %v2188 = vunpack.c.h.b16 %v2147
  %v2189 = vunpack.c.l.b16 %v2148
  %v2190 = vunpack.c.h.b16 %v2148
  %v2191 = vunpack.c.l.b16 %v2149
  %v2192 = vunpack.c.h.b16 %v2149
  %v2193 = vunpack.c.l.b16 %v2150
  %v2194 = vunpack.c.h.b16 %v2150
  %v2195 = vunpack.c.l.b16 %v2151
  %v2196 = vunpack.c.h.b16 %v2151
  %v2197 = vunpack.c.l.b16 %v2152
  %v2198 = vunpack.c.h.b16 %v2152
  %v2199 = vunpack.c.l.b16 %v2153
  %v2200 = vunpack.c.h.b16 %v2153
  %v2201 = vunpack.c.l.b16 %v2154
  %v2202 = vunpack.c.h.b16 %v2154
  %v2203 = vunpack.c.l.b16 %v2155
  %v2204 = vunpack.c.h.b16 %v2155
  %v2205 = vunpack.c.l.b16 %v2156
  %v2206 = vunpack.c.h.b16 %v2156
  %v2207 = vunpack.c.l.b16 %v2157
  %v2208 = vunpack.c.h.b16 %v2157
  %v2209 = vunpack.c.l.b16 %v2158
  %v2210 = vunpack.c.h.b16 %v2158
  %v2211 = vunpack.c.l.b16 %v2159
  %v2212 = vunpack.c.h.b16 %v2159
  %v2213 = vunpack.c.l.b16 %v2160
  %v2214 = vunpack.c.h.b16 %v2160
  %v2215 = vunpack.c.l.b16 %v2161
  %v2216 = vunpack.c.h.b16 %v2161
  %v2217 = vunpack.c.l.b16 %v2162
  %v2218 = vunpack.c.h.b16 %v2162
  %v2219 = vunpack.c.l.b16 %v2163
  %v2220 = vunpack.c.h.b16 %v2163
  %v2221 = vunpack.c.l.b16 %v2164
  %v2222 = vunpack.c.h.b16 %v2164
  %v2223 = vunpack.c.l.b16 %v2165
  %v2224 = vunpack.c.h.b16 %v2165
  %v2225 = vunpack.c.l.b16 %v2166
  %v2226 = vunpack.c.h.b16 %v2166
  %v2227 = vpack.c.b16 %v2189, %v2187
  %v2228 = vpack.c.b16 %v2190, %v2188
  %v2229 = vpack.c.b16 %v2193, %v2191
  %v2230 = vpack.c.b16 %v2194, %v2192
  %v2231 = vpack.c.b16 %v2197, %v2195
  %v2232 = vpack.c.b16 %v2198, %v2196
  %v2233 = vpack.c.b16 %v2201, %v2199
  %v2234 = vpack.c.b16 %v2202, %v2200
  %v2235 = vpack.c.b16 %v2205, %v2203
  %v2236 = vpack.c.b16 %v2206, %v2204
  %v2237 = vpack.c.b16 %v2209, %v2207
  %v2238 = vpack.c.b16 %v2210, %v2208
  %v2239 = vpack.c.b16 %v2213, %v2211
  %v2240 = vpack.c.b16 %v2214, %v2212
  %v2241 = vpack.c.b16 %v2217, %v2215
  %v2242 = vpack.c.b16 %v2218, %v2216
  %v2243 = vpack.c.b16 %v2221, %v2219
  %v2244 = vpack.c.b16 %v2222, %v2220
  %v2245 = vpack.c.b16 %v2225, %v2223
  %v2246 = vpack.c.b16 %v2226, %v2224
  %v2258 = vsel %vm1467, %v2228, 0
  %v2261 = vsel %vm1467, %v2230, 0
  %v2264 = vsel %vm1467, %v2232, 0
  %v2267 = vsel %vm1467, %v2234, 0
  %v2270 = vsel %vm1467, %v2236, 0
  %v2273 = vsel %vm1467, %v2238, 0
  %v2276 = vsel %vm1467, %v2240, 0
  %v2279 = vsel %vm1467, %v2242, 0
  %v2282 = vsel %vm1467, %v2244, 0
  %v2285 = vsel %vm1467, %v2246, 0
  %2287 = vmatprep.subr.bf16.mxu0 %v2141
  %2288 = vmatpush1.bf16.msra.mxu0 %v2140
  %2289 = vmatprep.subr.bf16.mxu0 %v2139
  %2290 = vmatpush1.bf16.msra.mxu0 %v2138
  %2291 = vmatprep.subr.bf16.mxu0 %v2137
  %2292 = vmatpush1.bf16.msra.mxu0 %v2136
  %2293 = vmatprep.subr.bf16.mxu0 %v2135
  %2294 = vmatpush1.bf16.msra.mxu0 %v2134
  %2295 = vmatprep.subr.bf16.mxu0 %v2133
  %2296 = vmatpush1.bf16.msra.mxu0 %v2132
  %2297 = vmatprep.subr.bf16.mxu0 %v2131
  %2298 = vmatpush1.bf16.msra.mxu0 %v2130
  %2299 = vmatprep.subr.bf16.mxu0 %v2129
  %2300 = vmatpush1.bf16.msra.mxu0 %v2128
  %2301 = vmatprep.subr.bf16.mxu0 %v2127
  %2302 = vmatpush1.bf16.msra.mxu0 %v2126
  %2303 = vmatprep.subr.bf16.mxu0 0
  %2304 = vmatpush2.bf16.msra.mxu0 0
  %2305 = vmatprep.subr.bf16.mxu0 0
  %2306 = vmatpush2.bf16.msra.mxu0 0
  %2307 = vmatprep.subr.bf16.mxu0 0
  %2308 = vmatpush2.bf16.msra.mxu0 0
  %2309 = vmatprep.subr.bf16.mxu0 0
  %2310 = vmatpush2.bf16.msra.mxu0 0
  %2311 = vmatprep.subr.bf16.mxu0 0
  %2312 = vmatpush2.bf16.msra.mxu0 0
  %2313 = vmatprep.subr.bf16.mxu0 0
  %2314 = vmatpush2.bf16.msra.mxu0 0
  %2315 = vmatprep.subr.bf16.mxu0 %v2145
  %2316 = vmatpush2.bf16.msra.mxu0 %v2144
  %2317 = vmatprep.subr.bf16.mxu0 %v2143
  %2318 = vmatpush2.bf16.msra.mxu0 %v2142
  %2319 = vmatprep.mubr.bf16.mxu0 %v2258
  %2320 = vmatmul.mubr.bf16.gmra.mxu0 %v2227
  %v2321 = vpop.f32.mrf.mxu0
  %v2322 = vadd.f32 0.0, %v2321
  %v2323 = vpop.f32.mrf.mxu0
  %v2324 = vadd.f32 0.0, %v2323
  %v2325 = vpop.f32.mrf.mxu0
  %v2326 = vadd.f32 0.0, %v2325
  %v2327 = vpop.f32.mrf.mxu0
  %v2328 = vadd.f32 0.0, %v2327
  %2329 = vmatprep.mubr.bf16.mxu0 %v2261
  %2330 = vmatmul.mubr.bf16.gmra.mxu0 %v2229
  %v2331 = vpop.f32.mrf.mxu0
  %v2332 = vadd.f32 0.0, %v2331
  %v2333 = vpop.f32.mrf.mxu0
  %v2334 = vadd.f32 0.0, %v2333
  %v2335 = vpop.f32.mrf.mxu0
  %v2336 = vadd.f32 0.0, %v2335
  %v2337 = vpop.f32.mrf.mxu0
  %v2338 = vadd.f32 0.0, %v2337
  %2339 = vmatprep.mubr.bf16.mxu0 %v2264
  %2340 = vmatmul.mubr.bf16.gmra.mxu0 %v2231
  %v2341 = vpop.f32.mrf.mxu0
  %v2342 = vadd.f32 0.0, %v2341
  %v2343 = vpop.f32.mrf.mxu0
  %v2344 = vadd.f32 0.0, %v2343
  %v2345 = vpop.f32.mrf.mxu0
  %v2346 = vadd.f32 0.0, %v2345
  %v2347 = vpop.f32.mrf.mxu0
  %v2348 = vadd.f32 0.0, %v2347
  %2349 = vmatprep.mubr.bf16.mxu0 %v2267
  %2350 = vmatmul.mubr.bf16.gmra.mxu0 %v2233
  %v2351 = vpop.f32.mrf.mxu0
  %v2352 = vadd.f32 0.0, %v2351
  %v2353 = vpop.f32.mrf.mxu0
  %v2354 = vadd.f32 0.0, %v2353
  %v2355 = vpop.f32.mrf.mxu0
  %v2356 = vadd.f32 0.0, %v2355
  %v2357 = vpop.f32.mrf.mxu0
  %v2358 = vadd.f32 0.0, %v2357
  %2359 = vmatprep.mubr.bf16.mxu0 %v2270
  %2360 = vmatmul.mubr.bf16.gmra.mxu0 %v2235
  %v2361 = vpop.f32.mrf.mxu0
  %v2362 = vadd.f32 0.0, %v2361
  %v2363 = vpop.f32.mrf.mxu0
  %v2364 = vadd.f32 0.0, %v2363
  %v2365 = vpop.f32.mrf.mxu0
  %v2366 = vadd.f32 0.0, %v2365
  %v2367 = vpop.f32.mrf.mxu0
  %v2368 = vadd.f32 0.0, %v2367
  %2369 = vmatprep.mubr.bf16.mxu0 %v2273
  %2370 = vmatmul.mubr.bf16.gmra.mxu0 %v2237
  %v2371 = vpop.f32.mrf.mxu0
  %v2372 = vadd.f32 0.0, %v2371
  %v2373 = vpop.f32.mrf.mxu0
  %v2374 = vadd.f32 0.0, %v2373
  %v2375 = vpop.f32.mrf.mxu0
  %v2376 = vadd.f32 0.0, %v2375
  %v2377 = vpop.f32.mrf.mxu0
  %v2378 = vadd.f32 0.0, %v2377
  %2379 = vmatprep.mubr.bf16.mxu0 %v2276
  %2380 = vmatmul.mubr.bf16.gmra.mxu0 %v2239
  %v2381 = vpop.f32.mrf.mxu0
  %v2382 = vadd.f32 0.0, %v2381
  %v2383 = vpop.f32.mrf.mxu0
  %v2384 = vadd.f32 0.0, %v2383
  %v2385 = vpop.f32.mrf.mxu0
  %v2386 = vadd.f32 0.0, %v2385
  %v2387 = vpop.f32.mrf.mxu0
  %v2388 = vadd.f32 0.0, %v2387
  %2389 = vmatprep.mubr.bf16.mxu0 %v2279
  %2390 = vmatmul.mubr.bf16.gmra.mxu0 %v2241
  %v2391 = vpop.f32.mrf.mxu0
  %v2392 = vadd.f32 0.0, %v2391
  %v2393 = vpop.f32.mrf.mxu0
  %v2394 = vadd.f32 0.0, %v2393
  %v2395 = vpop.f32.mrf.mxu0
  %v2396 = vadd.f32 0.0, %v2395
  %v2397 = vpop.f32.mrf.mxu0
  %v2398 = vadd.f32 0.0, %v2397
  %2399 = vmatprep.mubr.bf16.mxu0 %v2282
  %2400 = vmatmul.mubr.bf16.gmra.mxu0 %v2243
  %v2401 = vpop.f32.mrf.mxu0
  %v2402 = vadd.f32 0.0, %v2401
  %v2403 = vpop.f32.mrf.mxu0
  %v2404 = vadd.f32 0.0, %v2403
  %v2405 = vpop.f32.mrf.mxu0
  %v2406 = vadd.f32 0.0, %v2405
  %v2407 = vpop.f32.mrf.mxu0
  %v2408 = vadd.f32 0.0, %v2407
  %2409 = vmatprep.mubr.bf16.mxu0 %v2285
  %2410 = vmatmul.mubr.bf16.gmra.mxu0 %v2245
  %v2411 = vpop.f32.mrf.mxu0
  %v2412 = vadd.f32 0.0, %v2411
  %v2413 = vpop.f32.mrf.mxu0
  %v2414 = vadd.f32 0.0, %v2413
  %v2415 = vpop.f32.mrf.mxu0
  %v2416 = vadd.f32 0.0, %v2415
  %v2417 = vpop.f32.mrf.mxu0
  %v2418 = vadd.f32 0.0, %v2417
  %2419 = vdwg.mxu0
  %v2420 = vadd.f32 %v1786, %v2322
  %v2421 = vadd.f32 %v1788, %v2324
  %v2422 = vadd.f32 %v1790, %v2326
  %v2423 = vadd.f32 %v1792, %v2328
  %v2424 = vadd.f32 %v1796, %v2332
  %v2425 = vadd.f32 %v1798, %v2334
  %v2426 = vadd.f32 %v1800, %v2336
  %v2427 = vadd.f32 %v1802, %v2338
  %v2428 = vadd.f32 %v1806, %v2342
  %v2429 = vadd.f32 %v1808, %v2344
  %v2430 = vadd.f32 %v1810, %v2346
  %v2431 = vadd.f32 %v1812, %v2348
  %v2432 = vadd.f32 %v1816, %v2352
  %v2433 = vadd.f32 %v1818, %v2354
  %v2434 = vadd.f32 %v1820, %v2356
  %v2435 = vadd.f32 %v1822, %v2358
  %v2436 = vadd.f32 %v1826, %v2362
  %v2437 = vadd.f32 %v1828, %v2364
  %v2438 = vadd.f32 %v1830, %v2366
  %v2439 = vadd.f32 %v1832, %v2368
  %v2440 = vadd.f32 %v1836, %v2372
  %v2441 = vadd.f32 %v1838, %v2374
  %v2442 = vadd.f32 %v1840, %v2376
  %v2443 = vadd.f32 %v1842, %v2378
  %v2444 = vadd.f32 %v1846, %v2382
  %v2445 = vadd.f32 %v1848, %v2384
  %v2446 = vadd.f32 %v1850, %v2386
  %v2447 = vadd.f32 %v1852, %v2388
  %v2448 = vadd.f32 %v1856, %v2392
  %v2449 = vadd.f32 %v1858, %v2394
  %v2450 = vadd.f32 %v1860, %v2396
  %v2451 = vadd.f32 %v1862, %v2398
  %v2452 = vadd.f32 %v1866, %v2402
  %v2453 = vadd.f32 %v1868, %v2404
  %v2454 = vadd.f32 %v1870, %v2406
  %v2455 = vadd.f32 %v1872, %v2408
  %v2456 = vadd.f32 %v1876, %v2412
  %v2457 = vadd.f32 %v1878, %v2414
  %v2458 = vadd.f32 %v1880, %v2416
  %v2459 = vadd.f32 %v1882, %v2418
  %s2460 = scalar_lea.vmem %s3, 480
  %v2461 = vld [vmem:[%s2460] sm:$0xff]
  %v2462 = vld [vmem:[%s2460 + $0x8] sm:$0xff]
  %v2463 = vld [vmem:[%s2460 + $0x10] sm:$0xff]
  %v2464 = vld [vmem:[%s2460 + $0x18] sm:$0xff]
  %v2465 = vld [vmem:[%s2460 + $0x20] sm:$0xff]
  %v2466 = vld [vmem:[%s2460 + $0x28] sm:$0xff]
  %v2467 = vld [vmem:[%s2460 + $0x30] sm:$0xff]
  %v2468 = vld [vmem:[%s2460 + $0x38] sm:$0xff]
  %v2469 = vld [vmem:[%s2460 + $0x40] sm:$0xff]
  %v2470 = vld [vmem:[%s2460 + $0x48] sm:$0xff]
  %v2471 = vld [vmem:[%s2460 + $0x50] sm:$0xff]
  %v2472 = vld [vmem:[%s2460 + $0x58] sm:$0xff]
  %v2473 = vld [vmem:[%s2460 + $0x60] sm:$0xff]
  %v2474 = vld [vmem:[%s2460 + $0x68] sm:$0xff]
  %v2475 = vld [vmem:[%s2460 + $0x70] sm:$0xff]
  %v2476 = vld [vmem:[%s2460 + $0x78] sm:$0xff]
  %v2477 = vld [vmem:[%s2460 + $0x80] sm:$0xff]
  %v2478 = vld [vmem:[%s2460 + $0x88] sm:$0xff]
  %v2479 = vld [vmem:[%s2460 + $0x90] sm:$0xff]
  %v2480 = vld [vmem:[%s2460 + $0x98] sm:$0xff]
  %v2501 = vunpack.c.l.b16 %v2461
  %v2502 = vunpack.c.h.b16 %v2461
  %v2503 = vunpack.c.l.b16 %v2462
  %v2504 = vunpack.c.h.b16 %v2462
  %v2505 = vunpack.c.l.b16 %v2463
  %v2506 = vunpack.c.h.b16 %v2463
  %v2507 = vunpack.c.l.b16 %v2464
  %v2508 = vunpack.c.h.b16 %v2464
  %v2509 = vunpack.c.l.b16 %v2465
  %v2510 = vunpack.c.h.b16 %v2465
  %v2511 = vunpack.c.l.b16 %v2466
  %v2512 = vunpack.c.h.b16 %v2466
  %v2513 = vunpack.c.l.b16 %v2467
  %v2514 = vunpack.c.h.b16 %v2467
  %v2515 = vunpack.c.l.b16 %v2468
  %v2516 = vunpack.c.h.b16 %v2468
  %v2517 = vunpack.c.l.b16 %v2469
  %v2518 = vunpack.c.h.b16 %v2469
  %v2519 = vunpack.c.l.b16 %v2470
  %v2520 = vunpack.c.h.b16 %v2470
  %v2521 = vunpack.c.l.b16 %v2471
  %v2522 = vunpack.c.h.b16 %v2471
  %v2523 = vunpack.c.l.b16 %v2472
  %v2524 = vunpack.c.h.b16 %v2472
  %v2525 = vunpack.c.l.b16 %v2473
  %v2526 = vunpack.c.h.b16 %v2473
  %v2527 = vunpack.c.l.b16 %v2474
  %v2528 = vunpack.c.h.b16 %v2474
  %v2529 = vunpack.c.l.b16 %v2475
  %v2530 = vunpack.c.h.b16 %v2475
  %v2531 = vunpack.c.l.b16 %v2476
  %v2532 = vunpack.c.h.b16 %v2476
  %v2533 = vunpack.c.l.b16 %v2477
  %v2534 = vunpack.c.h.b16 %v2477
  %v2535 = vunpack.c.l.b16 %v2478
  %v2536 = vunpack.c.h.b16 %v2478
  %v2537 = vunpack.c.l.b16 %v2479
  %v2538 = vunpack.c.h.b16 %v2479
  %v2539 = vunpack.c.l.b16 %v2480
  %v2540 = vunpack.c.h.b16 %v2480
  %v2541 = vpack.c.b16 %v2503, %v2501
  %v2542 = vpack.c.b16 %v2504, %v2502
  %v2543 = vpack.c.b16 %v2507, %v2505
  %v2544 = vpack.c.b16 %v2508, %v2506
  %v2545 = vpack.c.b16 %v2511, %v2509
  %v2546 = vpack.c.b16 %v2512, %v2510
  %v2547 = vpack.c.b16 %v2515, %v2513
  %v2548 = vpack.c.b16 %v2516, %v2514
  %v2549 = vpack.c.b16 %v2519, %v2517
  %v2550 = vpack.c.b16 %v2520, %v2518
  %v2551 = vpack.c.b16 %v2523, %v2521
  %v2552 = vpack.c.b16 %v2524, %v2522
  %v2553 = vpack.c.b16 %v2527, %v2525
  %v2554 = vpack.c.b16 %v2528, %v2526
  %v2555 = vpack.c.b16 %v2531, %v2529
  %v2556 = vpack.c.b16 %v2532, %v2530
  %v2557 = vpack.c.b16 %v2535, %v2533
  %v2558 = vpack.c.b16 %v2536, %v2534
  %v2559 = vpack.c.b16 %v2539, %v2537
  %v2560 = vpack.c.b16 %v2540, %v2538
  %v2572 = vsel %vm1467, %v2542, 0
  %v2575 = vsel %vm1467, %v2544, 0
  %v2578 = vsel %vm1467, %v2546, 0
  %v2581 = vsel %vm1467, %v2548, 0
  %v2584 = vsel %vm1467, %v2550, 0
  %v2587 = vsel %vm1467, %v2552, 0
  %v2590 = vsel %vm1467, %v2554, 0
  %v2593 = vsel %vm1467, %v2556, 0
  %v2596 = vsel %vm1467, %v2558, 0
  %v2599 = vsel %vm1467, %v2560, 0
  %2601 = vmatprep.subr.bf16.mxu0 %v778
  %2602 = vmatpush1.bf16.msra.mxu0 %v777
  %2603 = vmatprep.subr.bf16.mxu0 %v776
  %2604 = vmatpush1.bf16.msra.mxu0 %v775
  %2605 = vmatprep.subr.bf16.mxu0 %v774
  %2606 = vmatpush1.bf16.msra.mxu0 %v773
  %2607 = vmatprep.subr.bf16.mxu0 %v772
  %2608 = vmatpush1.bf16.msra.mxu0 %v771
  %2609 = vmatprep.subr.bf16.mxu0 %v770
  %2610 = vmatpush1.bf16.msra.mxu0 %v769
  %2611 = vmatprep.subr.bf16.mxu0 %v768
  %2612 = vmatpush1.bf16.msra.mxu0 %v767
  %2613 = vmatprep.subr.bf16.mxu0 %v766
  %2614 = vmatpush1.bf16.msra.mxu0 %v765
  %2615 = vmatprep.subr.bf16.mxu0 %v764
  %2616 = vmatpush1.bf16.msra.mxu0 %v763
  %2617 = vmatprep.subr.bf16.mxu0 0
  %2618 = vmatpush2.bf16.msra.mxu0 0
  %2619 = vmatprep.subr.bf16.mxu0 0
  %2620 = vmatpush2.bf16.msra.mxu0 0
  %2621 = vmatprep.subr.bf16.mxu0 0
  %2622 = vmatpush2.bf16.msra.mxu0 0
  %2623 = vmatprep.subr.bf16.mxu0 0
  %2624 = vmatpush2.bf16.msra.mxu0 0
  %2625 = vmatprep.subr.bf16.mxu0 0
  %2626 = vmatpush2.bf16.msra.mxu0 0
  %2627 = vmatprep.subr.bf16.mxu0 0
  %2628 = vmatpush2.bf16.msra.mxu0 0
  %2629 = vmatprep.subr.bf16.mxu0 %v782
  %2630 = vmatpush2.bf16.msra.mxu0 %v781
  %2631 = vmatprep.subr.bf16.mxu0 %v780
  %2632 = vmatpush2.bf16.msra.mxu0 %v779
  %2633 = vmatprep.mubr.bf16.mxu0 %v2572
  %2634 = vmatmul.mubr.bf16.gmra.mxu0 %v2541
  %v2635 = vpop.f32.mrf.mxu0
  %v2636 = vadd.f32 0.0, %v2635
  %v2637 = vpop.f32.mrf.mxu0
  %v2638 = vadd.f32 0.0, %v2637
  %v2639 = vpop.f32.mrf.mxu0
  %v2640 = vadd.f32 0.0, %v2639
  %v2641 = vpop.f32.mrf.mxu0
  %v2642 = vadd.f32 0.0, %v2641
  %2643 = vmatprep.mubr.bf16.mxu0 %v2575
  %2644 = vmatmul.mubr.bf16.gmra.mxu0 %v2543
  %v2645 = vpop.f32.mrf.mxu0
  %v2646 = vadd.f32 0.0, %v2645
  %v2647 = vpop.f32.mrf.mxu0
  %v2648 = vadd.f32 0.0, %v2647
  %v2649 = vpop.f32.mrf.mxu0
  %v2650 = vadd.f32 0.0, %v2649
  %v2651 = vpop.f32.mrf.mxu0
  %v2652 = vadd.f32 0.0, %v2651
  %2653 = vmatprep.mubr.bf16.mxu0 %v2578
  %2654 = vmatmul.mubr.bf16.gmra.mxu0 %v2545
  %v2655 = vpop.f32.mrf.mxu0
  %v2656 = vadd.f32 0.0, %v2655
  %v2657 = vpop.f32.mrf.mxu0
  %v2658 = vadd.f32 0.0, %v2657
  %v2659 = vpop.f32.mrf.mxu0
  %v2660 = vadd.f32 0.0, %v2659
  %v2661 = vpop.f32.mrf.mxu0
  %v2662 = vadd.f32 0.0, %v2661
  %2663 = vmatprep.mubr.bf16.mxu0 %v2581
  %2664 = vmatmul.mubr.bf16.gmra.mxu0 %v2547
  %v2665 = vpop.f32.mrf.mxu0
  %v2666 = vadd.f32 0.0, %v2665
  %v2667 = vpop.f32.mrf.mxu0
  %v2668 = vadd.f32 0.0, %v2667
  %v2669 = vpop.f32.mrf.mxu0
  %v2670 = vadd.f32 0.0, %v2669
  %v2671 = vpop.f32.mrf.mxu0
  %v2672 = vadd.f32 0.0, %v2671
  %2673 = vmatprep.mubr.bf16.mxu0 %v2584
  %2674 = vmatmul.mubr.bf16.gmra.mxu0 %v2549
  %v2675 = vpop.f32.mrf.mxu0
  %v2676 = vadd.f32 0.0, %v2675
  %v2677 = vpop.f32.mrf.mxu0
  %v2678 = vadd.f32 0.0, %v2677
  %v2679 = vpop.f32.mrf.mxu0
  %v2680 = vadd.f32 0.0, %v2679
  %v2681 = vpop.f32.mrf.mxu0
  %v2682 = vadd.f32 0.0, %v2681
  %2683 = vmatprep.mubr.bf16.mxu0 %v2587
  %2684 = vmatmul.mubr.bf16.gmra.mxu0 %v2551
  %v2685 = vpop.f32.mrf.mxu0
  %v2686 = vadd.f32 0.0, %v2685
  %v2687 = vpop.f32.mrf.mxu0
  %v2688 = vadd.f32 0.0, %v2687
  %v2689 = vpop.f32.mrf.mxu0
  %v2690 = vadd.f32 0.0, %v2689
  %v2691 = vpop.f32.mrf.mxu0
  %v2692 = vadd.f32 0.0, %v2691
  %2693 = vmatprep.mubr.bf16.mxu0 %v2590
  %2694 = vmatmul.mubr.bf16.gmra.mxu0 %v2553
  %v2695 = vpop.f32.mrf.mxu0
  %v2696 = vadd.f32 0.0, %v2695
  %v2697 = vpop.f32.mrf.mxu0
  %v2698 = vadd.f32 0.0, %v2697
  %v2699 = vpop.f32.mrf.mxu0
  %v2700 = vadd.f32 0.0, %v2699
  %v2701 = vpop.f32.mrf.mxu0
  %v2702 = vadd.f32 0.0, %v2701
  %2703 = vmatprep.mubr.bf16.mxu0 %v2593
  %2704 = vmatmul.mubr.bf16.gmra.mxu0 %v2555
  %v2705 = vpop.f32.mrf.mxu0
  %v2706 = vadd.f32 0.0, %v2705
  %v2707 = vpop.f32.mrf.mxu0
  %v2708 = vadd.f32 0.0, %v2707
  %v2709 = vpop.f32.mrf.mxu0
  %v2710 = vadd.f32 0.0, %v2709
  %v2711 = vpop.f32.mrf.mxu0
  %v2712 = vadd.f32 0.0, %v2711
  %2713 = vmatprep.mubr.bf16.mxu0 %v2596
  %2714 = vmatmul.mubr.bf16.gmra.mxu0 %v2557
  %v2715 = vpop.f32.mrf.mxu0
  %v2716 = vadd.f32 0.0, %v2715
  %v2717 = vpop.f32.mrf.mxu0
  %v2718 = vadd.f32 0.0, %v2717
  %v2719 = vpop.f32.mrf.mxu0
  %v2720 = vadd.f32 0.0, %v2719
  %v2721 = vpop.f32.mrf.mxu0
  %v2722 = vadd.f32 0.0, %v2721
  %2723 = vmatprep.mubr.bf16.mxu0 %v2599
  %2724 = vmatmul.mubr.bf16.gmra.mxu0 %v2559
  %v2725 = vpop.f32.mrf.mxu0
  %v2726 = vadd.f32 0.0, %v2725
  %v2727 = vpop.f32.mrf.mxu0
  %v2728 = vadd.f32 0.0, %v2727
  %v2729 = vpop.f32.mrf.mxu0
  %v2730 = vadd.f32 0.0, %v2729
  %v2731 = vpop.f32.mrf.mxu0
  %v2732 = vadd.f32 0.0, %v2731
  %2733 = vdwg.mxu0
  %v2734 = vadd.f32 %v2420, %v2636
  %v2735 = vadd.f32 %v2421, %v2638
  %v2736 = vadd.f32 %v2422, %v2640
  %v2737 = vadd.f32 %v2423, %v2642
  %v2738 = vadd.f32 %v2424, %v2646
  %v2739 = vadd.f32 %v2425, %v2648
  %v2740 = vadd.f32 %v2426, %v2650
  %v2741 = vadd.f32 %v2427, %v2652
  %v2742 = vadd.f32 %v2428, %v2656
  %v2743 = vadd.f32 %v2429, %v2658
  %v2744 = vadd.f32 %v2430, %v2660
  %v2745 = vadd.f32 %v2431, %v2662
  %v2746 = vadd.f32 %v2432, %v2666
  %v2747 = vadd.f32 %v2433, %v2668
  %v2748 = vadd.f32 %v2434, %v2670
  %v2749 = vadd.f32 %v2435, %v2672
  %v2750 = vadd.f32 %v2436, %v2676
  %v2751 = vadd.f32 %v2437, %v2678
  %v2752 = vadd.f32 %v2438, %v2680
  %v2753 = vadd.f32 %v2439, %v2682
  %v2754 = vadd.f32 %v2440, %v2686
  %v2755 = vadd.f32 %v2441, %v2688
  %v2756 = vadd.f32 %v2442, %v2690
  %v2757 = vadd.f32 %v2443, %v2692
  %v2758 = vadd.f32 %v2444, %v2696
  %v2759 = vadd.f32 %v2445, %v2698
  %v2760 = vadd.f32 %v2446, %v2700
  %v2761 = vadd.f32 %v2447, %v2702
  %v2762 = vadd.f32 %v2448, %v2706
  %v2763 = vadd.f32 %v2449, %v2708
  %v2764 = vadd.f32 %v2450, %v2710
  %v2765 = vadd.f32 %v2451, %v2712
  %v2766 = vadd.f32 %v2452, %v2716
  %v2767 = vadd.f32 %v2453, %v2718
  %v2768 = vadd.f32 %v2454, %v2720
  %v2769 = vadd.f32 %v2455, %v2722
  %v2770 = vadd.f32 %v2456, %v2726
  %v2771 = vadd.f32 %v2457, %v2728
  %v2772 = vadd.f32 %v2458, %v2730
  %v2773 = vadd.f32 %v2459, %v2732
  %s2774 = scalar_lea.vmem %s4, 432
  %v2775 = vld [vmem:[%s2774] sm:$0xff]
  %v2776 = vld [vmem:[%s2774 + $0x8] sm:$0xff]
  %v2777 = vld [vmem:[%s2774 + $0x10] sm:$0xff]
  %v2778 = vld [vmem:[%s2774 + $0x18] sm:$0xff]
  %v2779 = vld [vmem:[%s2774 + $0x20] sm:$0xff]
  %v2780 = vld [vmem:[%s2774 + $0x28] sm:$0xff]
  %v2781 = vld [vmem:[%s2774 + $0x30] sm:$0xff]
  %v2782 = vld [vmem:[%s2774 + $0x38] sm:$0xff]
  %v2783 = vld [vmem:[%s2774 + $0x40] sm:$0xff]
  %v2784 = vld [vmem:[%s2774 + $0x48] sm:$0xff]
  %v2785 = vld [vmem:[%s2774 + $0x50] sm:$0xff]
  %v2786 = vld [vmem:[%s2774 + $0x58] sm:$0xff]
  %v2787 = vld [vmem:[%s2774 + $0x60] sm:$0xff]
  %v2788 = vld [vmem:[%s2774 + $0x68] sm:$0xff]
  %v2789 = vld [vmem:[%s2774 + $0x70] sm:$0xff]
  %v2790 = vld [vmem:[%s2774 + $0x78] sm:$0xff]
  %v2791 = vld [vmem:[%s2774 + $0x80] sm:$0xff]
  %v2792 = vld [vmem:[%s2774 + $0x88] sm:$0xff]
  %v2811 = vunpack.c.l.b16 %v2775
  %v2812 = vunpack.c.h.b16 %v2775
  %v2813 = vunpack.c.l.b16 %v2776
  %v2814 = vunpack.c.h.b16 %v2776
  %v2815 = vunpack.c.l.b16 %v2777
  %v2816 = vunpack.c.h.b16 %v2777
  %v2817 = vunpack.c.l.b16 %v2778
  %v2818 = vunpack.c.h.b16 %v2778
  %v2819 = vunpack.c.l.b16 %v2779
  %v2820 = vunpack.c.h.b16 %v2779
  %v2821 = vunpack.c.l.b16 %v2780
  %v2822 = vunpack.c.h.b16 %v2780
  %v2823 = vunpack.c.l.b16 %v2781
  %v2824 = vunpack.c.h.b16 %v2781
  %v2825 = vunpack.c.l.b16 %v2782
  %v2826 = vunpack.c.h.b16 %v2782
  %v2827 = vunpack.c.l.b16 %v2783
  %v2828 = vunpack.c.h.b16 %v2783
  %v2829 = vunpack.c.l.b16 %v2784
  %v2830 = vunpack.c.h.b16 %v2784
  %v2831 = vunpack.c.l.b16 %v2785
  %v2832 = vunpack.c.h.b16 %v2785
  %v2833 = vunpack.c.l.b16 %v2786
  %v2834 = vunpack.c.h.b16 %v2786
  %v2835 = vunpack.c.l.b16 %v2787
  %v2836 = vunpack.c.h.b16 %v2787
  %v2837 = vunpack.c.l.b16 %v2788
  %v2838 = vunpack.c.h.b16 %v2788
  %v2839 = vunpack.c.l.b16 %v2789
  %v2840 = vunpack.c.h.b16 %v2789
  %v2841 = vunpack.c.l.b16 %v2790
  %v2842 = vunpack.c.h.b16 %v2790
  %v2843 = vunpack.c.l.b16 %v2791
  %v2844 = vunpack.c.h.b16 %v2791
  %v2845 = vunpack.c.l.b16 %v2792
  %v2846 = vunpack.c.h.b16 %v2792
  %v2847 = vpack.c.b16 %v2813, %v2811
  %v2848 = vpack.c.b16 %v2814, %v2812
  %v2849 = vpack.c.b16 %v2817, %v2815
  %v2850 = vpack.c.b16 %v2818, %v2816
  %v2851 = vpack.c.b16 %v2821, %v2819
  %v2852 = vpack.c.b16 %v2822, %v2820
  %v2853 = vpack.c.b16 %v2825, %v2823
  %v2854 = vpack.c.b16 %v2826, %v2824
  %v2855 = vpack.c.b16 %v2829, %v2827
  %v2856 = vpack.c.b16 %v2830, %v2828
  %v2857 = vpack.c.b16 %v2833, %v2831
  %v2858 = vpack.c.b16 %v2834, %v2832
  %v2859 = vpack.c.b16 %v2837, %v2835
  %v2860 = vpack.c.b16 %v2838, %v2836
  %v2861 = vpack.c.b16 %v2841, %v2839
  %v2862 = vpack.c.b16 %v2842, %v2840
  %v2863 = vpack.c.b16 %v2845, %v2843
  %v2864 = vpack.c.b16 %v2846, %v2844
  %2883 = vmatprep.subr.bf16.mxu0 %v2862
  %2884 = vmatpush1.bf16.msra.mxu0 %v2861
  %2885 = vmatprep.subr.bf16.mxu0 %v2860
  %2886 = vmatpush1.bf16.msra.mxu0 %v2859
  %2887 = vmatprep.subr.bf16.mxu0 %v2858
  %2888 = vmatpush1.bf16.msra.mxu0 %v2857
  %2889 = vmatprep.subr.bf16.mxu0 %v2856
  %2890 = vmatpush1.bf16.msra.mxu0 %v2855
  %2891 = vmatprep.subr.bf16.mxu0 %v2854
  %2892 = vmatpush1.bf16.msra.mxu0 %v2853
  %2893 = vmatprep.subr.bf16.mxu0 %v2852
  %2894 = vmatpush1.bf16.msra.mxu0 %v2851
  %2895 = vmatprep.subr.bf16.mxu0 %v2850
  %2896 = vmatpush1.bf16.msra.mxu0 %v2849
  %2897 = vmatprep.subr.bf16.mxu0 %v2848
  %2898 = vmatpush1.bf16.msra.mxu0 %v2847
  %2899 = vmatprep.subr.bf16.mxu0 0
  %2900 = vmatpush2.bf16.msra.mxu0 0
  %2901 = vmatprep.subr.bf16.mxu0 0
  %2902 = vmatpush2.bf16.msra.mxu0 0
  %2903 = vmatprep.subr.bf16.mxu0 0
  %2904 = vmatpush2.bf16.msra.mxu0 0
  %2905 = vmatprep.subr.bf16.mxu0 0
  %2906 = vmatpush2.bf16.msra.mxu0 0
  %2907 = vmatprep.subr.bf16.mxu0 0
  %2908 = vmatpush2.bf16.msra.mxu0 0
  %2909 = vmatprep.subr.bf16.mxu0 0
  %2910 = vmatpush2.bf16.msra.mxu0 0
  %2911 = vmatprep.subr.bf16.mxu0 0
  %2912 = vmatpush2.bf16.msra.mxu0 0
  %2913 = vmatprep.subr.bf16.mxu0 %v2864
  %2914 = vmatpush2.bf16.msra.mxu0 %v2863
  %2915 = vmatprep.mubr.bf16.mxu0 %v892
  %2916 = vmatmul.mubr.bf16.gmra.mxu0 %v763
  %v2917 = vpop.f32.mrf.mxu0
  %v2918 = vadd.f32 0.0, %v2917
  %v2919 = vpop.f32.mrf.mxu0
  %v2920 = vadd.f32 0.0, %v2919
  %v2921 = vpop.f32.mrf.mxu0
  %v2922 = vadd.f32 0.0, %v2921
  %v2923 = vpop.f32.mrf.mxu0
  %v2924 = vadd.f32 0.0, %v2923
  %2925 = vmatprep.mubr.bf16.mxu0 %v895
  %2926 = vmatmul.mubr.bf16.gmra.mxu0 %v765
  %v2927 = vpop.f32.mrf.mxu0
  %v2928 = vadd.f32 0.0, %v2927
  %v2929 = vpop.f32.mrf.mxu0
  %v2930 = vadd.f32 0.0, %v2929
  %v2931 = vpop.f32.mrf.mxu0
  %v2932 = vadd.f32 0.0, %v2931
  %v2933 = vpop.f32.mrf.mxu0
  %v2934 = vadd.f32 0.0, %v2933
  %2935 = vmatprep.mubr.bf16.mxu0 %v898
  %2936 = vmatmul.mubr.bf16.gmra.mxu0 %v767
  %v2937 = vpop.f32.mrf.mxu0
  %v2938 = vadd.f32 0.0, %v2937
  %v2939 = vpop.f32.mrf.mxu0
  %v2940 = vadd.f32 0.0, %v2939
  %v2941 = vpop.f32.mrf.mxu0
  %v2942 = vadd.f32 0.0, %v2941
  %v2943 = vpop.f32.mrf.mxu0
  %v2944 = vadd.f32 0.0, %v2943
  %2945 = vmatprep.mubr.bf16.mxu0 %v901
  %2946 = vmatmul.mubr.bf16.gmra.mxu0 %v769
  %v2947 = vpop.f32.mrf.mxu0
  %v2948 = vadd.f32 0.0, %v2947
  %v2949 = vpop.f32.mrf.mxu0
  %v2950 = vadd.f32 0.0, %v2949
  %v2951 = vpop.f32.mrf.mxu0
  %v2952 = vadd.f32 0.0, %v2951
  %v2953 = vpop.f32.mrf.mxu0
  %v2954 = vadd.f32 0.0, %v2953
  %2955 = vmatprep.mubr.bf16.mxu0 %v904
  %2956 = vmatmul.mubr.bf16.gmra.mxu0 %v771
  %v2957 = vpop.f32.mrf.mxu0
  %v2958 = vadd.f32 0.0, %v2957
  %v2959 = vpop.f32.mrf.mxu0
  %v2960 = vadd.f32 0.0, %v2959
  %v2961 = vpop.f32.mrf.mxu0
  %v2962 = vadd.f32 0.0, %v2961
  %v2963 = vpop.f32.mrf.mxu0
  %v2964 = vadd.f32 0.0, %v2963
  %2965 = vmatprep.mubr.bf16.mxu0 %v907
  %2966 = vmatmul.mubr.bf16.gmra.mxu0 %v773
  %v2967 = vpop.f32.mrf.mxu0
  %v2968 = vadd.f32 0.0, %v2967
  %v2969 = vpop.f32.mrf.mxu0
  %v2970 = vadd.f32 0.0, %v2969
  %v2971 = vpop.f32.mrf.mxu0
  %v2972 = vadd.f32 0.0, %v2971
  %v2973 = vpop.f32.mrf.mxu0
  %v2974 = vadd.f32 0.0, %v2973
  %2975 = vmatprep.mubr.bf16.mxu0 %v910
  %2976 = vmatmul.mubr.bf16.gmra.mxu0 %v775
  %v2977 = vpop.f32.mrf.mxu0
  %v2978 = vadd.f32 0.0, %v2977
  %v2979 = vpop.f32.mrf.mxu0
  %v2980 = vadd.f32 0.0, %v2979
  %v2981 = vpop.f32.mrf.mxu0
  %v2982 = vadd.f32 0.0, %v2981
  %v2983 = vpop.f32.mrf.mxu0
  %v2984 = vadd.f32 0.0, %v2983
  %2985 = vmatprep.mubr.bf16.mxu0 %v913
  %2986 = vmatmul.mubr.bf16.gmra.mxu0 %v777
  %v2987 = vpop.f32.mrf.mxu0
  %v2988 = vadd.f32 0.0, %v2987
  %v2989 = vpop.f32.mrf.mxu0
  %v2990 = vadd.f32 0.0, %v2989
  %v2991 = vpop.f32.mrf.mxu0
  %v2992 = vadd.f32 0.0, %v2991
  %v2993 = vpop.f32.mrf.mxu0
  %v2994 = vadd.f32 0.0, %v2993
  %2995 = vmatprep.mubr.bf16.mxu0 %v916
  %2996 = vmatmul.mubr.bf16.gmra.mxu0 %v779
  %v2997 = vpop.f32.mrf.mxu0
  %v2998 = vadd.f32 0.0, %v2997
  %v2999 = vpop.f32.mrf.mxu0
  %v3000 = vadd.f32 0.0, %v2999
  %v3001 = vpop.f32.mrf.mxu0
  %v3002 = vadd.f32 0.0, %v3001
  %v3003 = vpop.f32.mrf.mxu0
  %v3004 = vadd.f32 0.0, %v3003
  %3005 = vmatprep.mubr.bf16.mxu0 %v919
  %3006 = vmatmul.mubr.bf16.gmra.mxu0 %v781
  %v3007 = vpop.f32.mrf.mxu0
  %v3008 = vadd.f32 0.0, %v3007
  %v3009 = vpop.f32.mrf.mxu0
  %v3010 = vadd.f32 0.0, %v3009
  %v3011 = vpop.f32.mrf.mxu0
  %v3012 = vadd.f32 0.0, %v3011
  %v3013 = vpop.f32.mrf.mxu0
  %v3014 = vadd.f32 0.0, %v3013
  %3015 = vdwg.mxu0
  %v3016 = vpack.c.bf16 %v2922, %v2918
  %v3017 = vpack.c.bf16 %v2924, %v2920
  %v3018 = vpack.c.bf16 %v2932, %v2928
  %v3019 = vpack.c.bf16 %v2934, %v2930
  %v3020 = vpack.c.bf16 %v2942, %v2938
  %v3021 = vpack.c.bf16 %v2944, %v2940
  %v3022 = vpack.c.bf16 %v2952, %v2948
  %v3023 = vpack.c.bf16 %v2954, %v2950
  %v3024 = vpack.c.bf16 %v2962, %v2958
  %v3025 = vpack.c.bf16 %v2964, %v2960
  %v3026 = vpack.c.bf16 %v2972, %v2968
  %v3027 = vpack.c.bf16 %v2974, %v2970
  %v3028 = vpack.c.bf16 %v2982, %v2978
  %v3029 = vpack.c.bf16 %v2984, %v2980
  %v3030 = vpack.c.bf16 %v2992, %v2988
  %v3031 = vpack.c.bf16 %v2994, %v2990
  %v3032 = vpack.c.bf16 %v3002, %v2998
  %v3033 = vpack.c.bf16 %v3004, %v3000
  %v3034 = vpack.c.bf16 %v3012, %v3008
  %v3035 = vpack.c.bf16 %v3014, %v3010
  %s3036 = scalar_lea.vmem %s3, 640
  %v3037 = vld [vmem:[%s3036] sm:$0xff]
  %v3038 = vld [vmem:[%s3036 + $0x8] sm:$0xff]
  %v3039 = vld [vmem:[%s3036 + $0x10] sm:$0xff]
  %v3040 = vld [vmem:[%s3036 + $0x18] sm:$0xff]
  %v3041 = vld [vmem:[%s3036 + $0x20] sm:$0xff]
  %v3042 = vld [vmem:[%s3036 + $0x28] sm:$0xff]
  %v3043 = vld [vmem:[%s3036 + $0x30] sm:$0xff]
  %v3044 = vld [vmem:[%s3036 + $0x38] sm:$0xff]
  %v3045 = vld [vmem:[%s3036 + $0x40] sm:$0xff]
  %v3046 = vld [vmem:[%s3036 + $0x48] sm:$0xff]
  %v3047 = vld [vmem:[%s3036 + $0x50] sm:$0xff]
  %v3048 = vld [vmem:[%s3036 + $0x58] sm:$0xff]
  %v3049 = vld [vmem:[%s3036 + $0x60] sm:$0xff]
  %v3050 = vld [vmem:[%s3036 + $0x68] sm:$0xff]
  %v3051 = vld [vmem:[%s3036 + $0x70] sm:$0xff]
  %v3052 = vld [vmem:[%s3036 + $0x78] sm:$0xff]
  %v3053 = vld [vmem:[%s3036 + $0x80] sm:$0xff]
  %v3054 = vld [vmem:[%s3036 + $0x88] sm:$0xff]
  %v3055 = vld [vmem:[%s3036 + $0x90] sm:$0xff]
  %v3056 = vld [vmem:[%s3036 + $0x98] sm:$0xff]
  %v3077 = vunpack.c.l.b16 %v3037
  %v3078 = vunpack.c.h.b16 %v3037
  %v3079 = vunpack.c.l.b16 %v3038
  %v3080 = vunpack.c.h.b16 %v3038
  %v3081 = vunpack.c.l.b16 %v3039
  %v3082 = vunpack.c.h.b16 %v3039
  %v3083 = vunpack.c.l.b16 %v3040
  %v3084 = vunpack.c.h.b16 %v3040
  %v3085 = vunpack.c.l.b16 %v3041
  %v3086 = vunpack.c.h.b16 %v3041
  %v3087 = vunpack.c.l.b16 %v3042
  %v3088 = vunpack.c.h.b16 %v3042
  %v3089 = vunpack.c.l.b16 %v3043
  %v3090 = vunpack.c.h.b16 %v3043
  %v3091 = vunpack.c.l.b16 %v3044
  %v3092 = vunpack.c.h.b16 %v3044
  %v3093 = vunpack.c.l.b16 %v3045
  %v3094 = vunpack.c.h.b16 %v3045
  %v3095 = vunpack.c.l.b16 %v3046
  %v3096 = vunpack.c.h.b16 %v3046
  %v3097 = vunpack.c.l.b16 %v3047
  %v3098 = vunpack.c.h.b16 %v3047
  %v3099 = vunpack.c.l.b16 %v3048
  %v3100 = vunpack.c.h.b16 %v3048
  %v3101 = vunpack.c.l.b16 %v3049
  %v3102 = vunpack.c.h.b16 %v3049
  %v3103 = vunpack.c.l.b16 %v3050
  %v3104 = vunpack.c.h.b16 %v3050
  %v3105 = vunpack.c.l.b16 %v3051
  %v3106 = vunpack.c.h.b16 %v3051
  %v3107 = vunpack.c.l.b16 %v3052
  %v3108 = vunpack.c.h.b16 %v3052
  %v3109 = vunpack.c.l.b16 %v3053
  %v3110 = vunpack.c.h.b16 %v3053
  %v3111 = vunpack.c.l.b16 %v3054
  %v3112 = vunpack.c.h.b16 %v3054
  %v3113 = vunpack.c.l.b16 %v3055
  %v3114 = vunpack.c.h.b16 %v3055
  %v3115 = vunpack.c.l.b16 %v3056
  %v3116 = vunpack.c.h.b16 %v3056
  %v3117 = vpack.c.b16 %v3079, %v3077
  %v3118 = vpack.c.b16 %v3080, %v3078
  %v3119 = vpack.c.b16 %v3083, %v3081
  %v3120 = vpack.c.b16 %v3084, %v3082
  %v3121 = vpack.c.b16 %v3087, %v3085
  %v3122 = vpack.c.b16 %v3088, %v3086
  %v3123 = vpack.c.b16 %v3091, %v3089
  %v3124 = vpack.c.b16 %v3092, %v3090
  %v3125 = vpack.c.b16 %v3095, %v3093
  %v3126 = vpack.c.b16 %v3096, %v3094
  %v3127 = vpack.c.b16 %v3099, %v3097
  %v3128 = vpack.c.b16 %v3100, %v3098
  %v3129 = vpack.c.b16 %v3103, %v3101
  %v3130 = vpack.c.b16 %v3104, %v3102
  %v3131 = vpack.c.b16 %v3107, %v3105
  %v3132 = vpack.c.b16 %v3108, %v3106
  %v3133 = vpack.c.b16 %v3111, %v3109
  %v3134 = vpack.c.b16 %v3112, %v3110
  %v3135 = vpack.c.b16 %v3115, %v3113
  %v3136 = vpack.c.b16 %v3116, %v3114
  %v3148 = vsel %vm1467, %v3118, 0
  %v3151 = vsel %vm1467, %v3120, 0
  %v3154 = vsel %vm1467, %v3122, 0
  %v3157 = vsel %vm1467, %v3124, 0
  %v3160 = vsel %vm1467, %v3126, 0
  %v3163 = vsel %vm1467, %v3128, 0
  %v3166 = vsel %vm1467, %v3130, 0
  %v3169 = vsel %vm1467, %v3132, 0
  %v3172 = vsel %vm1467, %v3134, 0
  %v3175 = vsel %vm1467, %v3136, 0
  %3177 = vmatprep.subr.bf16.mxu0 %v3031
  %3178 = vmatpush1.bf16.msra.mxu0 %v3030
  %3179 = vmatprep.subr.bf16.mxu0 %v3029
  %3180 = vmatpush1.bf16.msra.mxu0 %v3028
  %3181 = vmatprep.subr.bf16.mxu0 %v3027
  %3182 = vmatpush1.bf16.msra.mxu0 %v3026
  %3183 = vmatprep.subr.bf16.mxu0 %v3025
  %3184 = vmatpush1.bf16.msra.mxu0 %v3024
  %3185 = vmatprep.subr.bf16.mxu0 %v3023
  %3186 = vmatpush1.bf16.msra.mxu0 %v3022
  %3187 = vmatprep.subr.bf16.mxu0 %v3021
  %3188 = vmatpush1.bf16.msra.mxu0 %v3020
  %3189 = vmatprep.subr.bf16.mxu0 %v3019
  %3190 = vmatpush1.bf16.msra.mxu0 %v3018
  %3191 = vmatprep.subr.bf16.mxu0 %v3017
  %3192 = vmatpush1.bf16.msra.mxu0 %v3016
  %3193 = vmatprep.subr.bf16.mxu0 0
  %3194 = vmatpush2.bf16.msra.mxu0 0
  %3195 = vmatprep.subr.bf16.mxu0 0
  %3196 = vmatpush2.bf16.msra.mxu0 0
  %3197 = vmatprep.subr.bf16.mxu0 0
  %3198 = vmatpush2.bf16.msra.mxu0 0
  %3199 = vmatprep.subr.bf16.mxu0 0
  %3200 = vmatpush2.bf16.msra.mxu0 0
  %3201 = vmatprep.subr.bf16.mxu0 0
  %3202 = vmatpush2.bf16.msra.mxu0 0
  %3203 = vmatprep.subr.bf16.mxu0 0
  %3204 = vmatpush2.bf16.msra.mxu0 0
  %3205 = vmatprep.subr.bf16.mxu0 %v3035
  %3206 = vmatpush2.bf16.msra.mxu0 %v3034
  %3207 = vmatprep.subr.bf16.mxu0 %v3033
  %3208 = vmatpush2.bf16.msra.mxu0 %v3032
  %3209 = vmatprep.mubr.bf16.mxu0 %v3148
  %3210 = vmatmul.mubr.bf16.gmra.mxu0 %v3117
  %v3211 = vpop.f32.mrf.mxu0
  %v3212 = vadd.f32 0.0, %v3211
  %v3213 = vpop.f32.mrf.mxu0
  %v3214 = vadd.f32 0.0, %v3213
  %v3215 = vpop.f32.mrf.mxu0
  %v3216 = vadd.f32 0.0, %v3215
  %v3217 = vpop.f32.mrf.mxu0
  %v3218 = vadd.f32 0.0, %v3217
  %3219 = vmatprep.mubr.bf16.mxu0 %v3151
  %3220 = vmatmul.mubr.bf16.gmra.mxu0 %v3119
  %v3221 = vpop.f32.mrf.mxu0
  %v3222 = vadd.f32 0.0, %v3221
  %v3223 = vpop.f32.mrf.mxu0
  %v3224 = vadd.f32 0.0, %v3223
  %v3225 = vpop.f32.mrf.mxu0
  %v3226 = vadd.f32 0.0, %v3225
  %v3227 = vpop.f32.mrf.mxu0
  %v3228 = vadd.f32 0.0, %v3227
  %3229 = vmatprep.mubr.bf16.mxu0 %v3154
  %3230 = vmatmul.mubr.bf16.gmra.mxu0 %v3121
  %v3231 = vpop.f32.mrf.mxu0
  %v3232 = vadd.f32 0.0, %v3231
  %v3233 = vpop.f32.mrf.mxu0
  %v3234 = vadd.f32 0.0, %v3233
  %v3235 = vpop.f32.mrf.mxu0
  %v3236 = vadd.f32 0.0, %v3235
  %v3237 = vpop.f32.mrf.mxu0
  %v3238 = vadd.f32 0.0, %v3237
  %3239 = vmatprep.mubr.bf16.mxu0 %v3157
  %3240 = vmatmul.mubr.bf16.gmra.mxu0 %v3123
  %v3241 = vpop.f32.mrf.mxu0
  %v3242 = vadd.f32 0.0, %v3241
  %v3243 = vpop.f32.mrf.mxu0
  %v3244 = vadd.f32 0.0, %v3243
  %v3245 = vpop.f32.mrf.mxu0
  %v3246 = vadd.f32 0.0, %v3245
  %v3247 = vpop.f32.mrf.mxu0
  %v3248 = vadd.f32 0.0, %v3247
  %3249 = vmatprep.mubr.bf16.mxu0 %v3160
  %3250 = vmatmul.mubr.bf16.gmra.mxu0 %v3125
  %v3251 = vpop.f32.mrf.mxu0
  %v3252 = vadd.f32 0.0, %v3251
  %v3253 = vpop.f32.mrf.mxu0
  %v3254 = vadd.f32 0.0, %v3253
  %v3255 = vpop.f32.mrf.mxu0
  %v3256 = vadd.f32 0.0, %v3255
  %v3257 = vpop.f32.mrf.mxu0
  %v3258 = vadd.f32 0.0, %v3257
  %3259 = vmatprep.mubr.bf16.mxu0 %v3163
  %3260 = vmatmul.mubr.bf16.gmra.mxu0 %v3127
  %v3261 = vpop.f32.mrf.mxu0
  %v3262 = vadd.f32 0.0, %v3261
  %v3263 = vpop.f32.mrf.mxu0
  %v3264 = vadd.f32 0.0, %v3263
  %v3265 = vpop.f32.mrf.mxu0
  %v3266 = vadd.f32 0.0, %v3265
  %v3267 = vpop.f32.mrf.mxu0
  %v3268 = vadd.f32 0.0, %v3267
  %3269 = vmatprep.mubr.bf16.mxu0 %v3166
  %3270 = vmatmul.mubr.bf16.gmra.mxu0 %v3129
  %v3271 = vpop.f32.mrf.mxu0
  %v3272 = vadd.f32 0.0, %v3271
  %v3273 = vpop.f32.mrf.mxu0
  %v3274 = vadd.f32 0.0, %v3273
  %v3275 = vpop.f32.mrf.mxu0
  %v3276 = vadd.f32 0.0, %v3275
  %v3277 = vpop.f32.mrf.mxu0
  %v3278 = vadd.f32 0.0, %v3277
  %3279 = vmatprep.mubr.bf16.mxu0 %v3169
  %3280 = vmatmul.mubr.bf16.gmra.mxu0 %v3131
  %v3281 = vpop.f32.mrf.mxu0
  %v3282 = vadd.f32 0.0, %v3281
  %v3283 = vpop.f32.mrf.mxu0
  %v3284 = vadd.f32 0.0, %v3283
  %v3285 = vpop.f32.mrf.mxu0
  %v3286 = vadd.f32 0.0, %v3285
  %v3287 = vpop.f32.mrf.mxu0
  %v3288 = vadd.f32 0.0, %v3287
  %3289 = vmatprep.mubr.bf16.mxu0 %v3172
  %3290 = vmatmul.mubr.bf16.gmra.mxu0 %v3133
  %v3291 = vpop.f32.mrf.mxu0
  %v3292 = vadd.f32 0.0, %v3291
  %v3293 = vpop.f32.mrf.mxu0
  %v3294 = vadd.f32 0.0, %v3293
  %v3295 = vpop.f32.mrf.mxu0
  %v3296 = vadd.f32 0.0, %v3295
  %v3297 = vpop.f32.mrf.mxu0
  %v3298 = vadd.f32 0.0, %v3297
  %3299 = vmatprep.mubr.bf16.mxu0 %v3175
  %3300 = vmatmul.mubr.bf16.gmra.mxu0 %v3135
  %v3301 = vpop.f32.mrf.mxu0
  %v3302 = vadd.f32 0.0, %v3301
  %v3303 = vpop.f32.mrf.mxu0
  %v3304 = vadd.f32 0.0, %v3303
  %v3305 = vpop.f32.mrf.mxu0
  %v3306 = vadd.f32 0.0, %v3305
  %v3307 = vpop.f32.mrf.mxu0
  %v3308 = vadd.f32 0.0, %v3307
  %3309 = vdwg.mxu0
  %v3310 = vadd.f32 %v2734, %v3212
  %v3311 = vadd.f32 %v2735, %v3214
  %v3312 = vadd.f32 %v2736, %v3216
  %v3313 = vadd.f32 %v2737, %v3218
  %v3314 = vadd.f32 %v2738, %v3222
  %v3315 = vadd.f32 %v2739, %v3224
  %v3316 = vadd.f32 %v2740, %v3226
  %v3317 = vadd.f32 %v2741, %v3228
  %v3318 = vadd.f32 %v2742, %v3232
  %v3319 = vadd.f32 %v2743, %v3234
  %v3320 = vadd.f32 %v2744, %v3236
  %v3321 = vadd.f32 %v2745, %v3238
  %v3322 = vadd.f32 %v2746, %v3242
  %v3323 = vadd.f32 %v2747, %v3244
  %v3324 = vadd.f32 %v2748, %v3246
  %v3325 = vadd.f32 %v2749, %v3248
  %v3326 = vadd.f32 %v2750, %v3252
  %v3327 = vadd.f32 %v2751, %v3254
  %v3328 = vadd.f32 %v2752, %v3256
  %v3329 = vadd.f32 %v2753, %v3258
  %v3330 = vadd.f32 %v2754, %v3262
  %v3331 = vadd.f32 %v2755, %v3264
  %v3332 = vadd.f32 %v2756, %v3266
  %v3333 = vadd.f32 %v2757, %v3268
  %v3334 = vadd.f32 %v2758, %v3272
  %v3335 = vadd.f32 %v2759, %v3274
  %v3336 = vadd.f32 %v2760, %v3276
  %v3337 = vadd.f32 %v2761, %v3278
  %v3338 = vadd.f32 %v2762, %v3282
  %v3339 = vadd.f32 %v2763, %v3284
  %v3340 = vadd.f32 %v2764, %v3286
  %v3341 = vadd.f32 %v2765, %v3288
  %v3342 = vadd.f32 %v2766, %v3292
  %v3343 = vadd.f32 %v2767, %v3294
  %v3344 = vadd.f32 %v2768, %v3296
  %v3345 = vadd.f32 %v2769, %v3298
  %v3346 = vadd.f32 %v2770, %v3302
  %v3347 = vadd.f32 %v2771, %v3304
  %v3348 = vadd.f32 %v2772, %v3306
  %v3349 = vadd.f32 %v2773, %v3308
  %s3350 = scalar_lea.vmem %s4, 576
  %v3351 = vld [vmem:[%s3350] sm:$0xff]
  %v3352 = vld [vmem:[%s3350 + $0x8] sm:$0xff]
  %v3353 = vld [vmem:[%s3350 + $0x10] sm:$0xff]
  %v3354 = vld [vmem:[%s3350 + $0x18] sm:$0xff]
  %v3355 = vld [vmem:[%s3350 + $0x20] sm:$0xff]
  %v3356 = vld [vmem:[%s3350 + $0x28] sm:$0xff]
  %v3357 = vld [vmem:[%s3350 + $0x30] sm:$0xff]
  %v3358 = vld [vmem:[%s3350 + $0x38] sm:$0xff]
  %v3359 = vld [vmem:[%s3350 + $0x40] sm:$0xff]
  %v3360 = vld [vmem:[%s3350 + $0x48] sm:$0xff]
  %v3361 = vld [vmem:[%s3350 + $0x50] sm:$0xff]
  %v3362 = vld [vmem:[%s3350 + $0x58] sm:$0xff]
  %v3363 = vld [vmem:[%s3350 + $0x60] sm:$0xff]
  %v3364 = vld [vmem:[%s3350 + $0x68] sm:$0xff]
  %v3365 = vld [vmem:[%s3350 + $0x70] sm:$0xff]
  %v3366 = vld [vmem:[%s3350 + $0x78] sm:$0xff]
  %v3367 = vld [vmem:[%s3350 + $0x80] sm:$0xff]
  %v3368 = vld [vmem:[%s3350 + $0x88] sm:$0xff]
  %v3387 = vunpack.c.l.b16 %v3351
  %v3388 = vunpack.c.h.b16 %v3351
  %v3389 = vunpack.c.l.b16 %v3352
  %v3390 = vunpack.c.h.b16 %v3352
  %v3391 = vunpack.c.l.b16 %v3353
  %v3392 = vunpack.c.h.b16 %v3353
  %v3393 = vunpack.c.l.b16 %v3354
  %v3394 = vunpack.c.h.b16 %v3354
  %v3395 = vunpack.c.l.b16 %v3355
  %v3396 = vunpack.c.h.b16 %v3355
  %v3397 = vunpack.c.l.b16 %v3356
  %v3398 = vunpack.c.h.b16 %v3356
  %v3399 = vunpack.c.l.b16 %v3357
  %v3400 = vunpack.c.h.b16 %v3357
  %v3401 = vunpack.c.l.b16 %v3358
  %v3402 = vunpack.c.h.b16 %v3358
  %v3403 = vunpack.c.l.b16 %v3359
  %v3404 = vunpack.c.h.b16 %v3359
  %v3405 = vunpack.c.l.b16 %v3360
  %v3406 = vunpack.c.h.b16 %v3360
  %v3407 = vunpack.c.l.b16 %v3361
  %v3408 = vunpack.c.h.b16 %v3361
  %v3409 = vunpack.c.l.b16 %v3362
  %v3410 = vunpack.c.h.b16 %v3362
  %v3411 = vunpack.c.l.b16 %v3363
  %v3412 = vunpack.c.h.b16 %v3363
  %v3413 = vunpack.c.l.b16 %v3364
  %v3414 = vunpack.c.h.b16 %v3364
  %v3415 = vunpack.c.l.b16 %v3365
  %v3416 = vunpack.c.h.b16 %v3365
  %v3417 = vunpack.c.l.b16 %v3366
  %v3418 = vunpack.c.h.b16 %v3366
  %v3419 = vunpack.c.l.b16 %v3367
  %v3420 = vunpack.c.h.b16 %v3367
  %v3421 = vunpack.c.l.b16 %v3368
  %v3422 = vunpack.c.h.b16 %v3368
  %v3423 = vpack.c.b16 %v3389, %v3387
  %v3424 = vpack.c.b16 %v3390, %v3388
  %v3425 = vpack.c.b16 %v3393, %v3391
  %v3426 = vpack.c.b16 %v3394, %v3392
  %v3427 = vpack.c.b16 %v3397, %v3395
  %v3428 = vpack.c.b16 %v3398, %v3396
  %v3429 = vpack.c.b16 %v3401, %v3399
  %v3430 = vpack.c.b16 %v3402, %v3400
  %v3431 = vpack.c.b16 %v3405, %v3403
  %v3432 = vpack.c.b16 %v3406, %v3404
  %v3433 = vpack.c.b16 %v3409, %v3407
  %v3434 = vpack.c.b16 %v3410, %v3408
  %v3435 = vpack.c.b16 %v3413, %v3411
  %v3436 = vpack.c.b16 %v3414, %v3412
  %v3437 = vpack.c.b16 %v3417, %v3415
  %v3438 = vpack.c.b16 %v3418, %v3416
  %v3439 = vpack.c.b16 %v3421, %v3419
  %v3440 = vpack.c.b16 %v3422, %v3420
  %3459 = vmatprep.subr.bf16.mxu0 %v3438
  %3460 = vmatpush1.bf16.msra.mxu0 %v3437
  %3461 = vmatprep.subr.bf16.mxu0 %v3436
  %3462 = vmatpush1.bf16.msra.mxu0 %v3435
  %3463 = vmatprep.subr.bf16.mxu0 %v3434
  %3464 = vmatpush1.bf16.msra.mxu0 %v3433
  %3465 = vmatprep.subr.bf16.mxu0 %v3432
  %3466 = vmatpush1.bf16.msra.mxu0 %v3431
  %3467 = vmatprep.subr.bf16.mxu0 %v3430
  %3468 = vmatpush1.bf16.msra.mxu0 %v3429
  %3469 = vmatprep.subr.bf16.mxu0 %v3428
  %3470 = vmatpush1.bf16.msra.mxu0 %v3427
  %3471 = vmatprep.subr.bf16.mxu0 %v3426
  %3472 = vmatpush1.bf16.msra.mxu0 %v3425
  %3473 = vmatprep.subr.bf16.mxu0 %v3424
  %3474 = vmatpush1.bf16.msra.mxu0 %v3423
  %3475 = vmatprep.subr.bf16.mxu0 0
  %3476 = vmatpush2.bf16.msra.mxu0 0
  %3477 = vmatprep.subr.bf16.mxu0 0
  %3478 = vmatpush2.bf16.msra.mxu0 0
  %3479 = vmatprep.subr.bf16.mxu0 0
  %3480 = vmatpush2.bf16.msra.mxu0 0
  %3481 = vmatprep.subr.bf16.mxu0 0
  %3482 = vmatpush2.bf16.msra.mxu0 0
  %3483 = vmatprep.subr.bf16.mxu0 0
  %3484 = vmatpush2.bf16.msra.mxu0 0
  %3485 = vmatprep.subr.bf16.mxu0 0
  %3486 = vmatpush2.bf16.msra.mxu0 0
  %3487 = vmatprep.subr.bf16.mxu0 0
  %3488 = vmatpush2.bf16.msra.mxu0 0
  %3489 = vmatprep.subr.bf16.mxu0 %v3440
  %3490 = vmatpush2.bf16.msra.mxu0 %v3439
  %3491 = vmatprep.mubr.bf16.mxu0 %v892
  %3492 = vmatmul.mubr.bf16.gmra.mxu0 %v763
  %v3493 = vpop.f32.mrf.mxu0
  %v3494 = vadd.f32 0.0, %v3493
  %v3495 = vpop.f32.mrf.mxu0
  %v3496 = vadd.f32 0.0, %v3495
  %v3497 = vpop.f32.mrf.mxu0
  %v3498 = vadd.f32 0.0, %v3497
  %v3499 = vpop.f32.mrf.mxu0
  %v3500 = vadd.f32 0.0, %v3499
  %3501 = vmatprep.mubr.bf16.mxu0 %v895
  %3502 = vmatmul.mubr.bf16.gmra.mxu0 %v765
  %v3503 = vpop.f32.mrf.mxu0
  %v3504 = vadd.f32 0.0, %v3503
  %v3505 = vpop.f32.mrf.mxu0
  %v3506 = vadd.f32 0.0, %v3505
  %v3507 = vpop.f32.mrf.mxu0
  %v3508 = vadd.f32 0.0, %v3507
  %v3509 = vpop.f32.mrf.mxu0
  %v3510 = vadd.f32 0.0, %v3509
  %3511 = vmatprep.mubr.bf16.mxu0 %v898
  %3512 = vmatmul.mubr.bf16.gmra.mxu0 %v767
  %v3513 = vpop.f32.mrf.mxu0
  %v3514 = vadd.f32 0.0, %v3513
  %v3515 = vpop.f32.mrf.mxu0
  %v3516 = vadd.f32 0.0, %v3515
  %v3517 = vpop.f32.mrf.mxu0
  %v3518 = vadd.f32 0.0, %v3517
  %v3519 = vpop.f32.mrf.mxu0
  %v3520 = vadd.f32 0.0, %v3519
  %3521 = vmatprep.mubr.bf16.mxu0 %v901
  %3522 = vmatmul.mubr.bf16.gmra.mxu0 %v769
  %v3523 = vpop.f32.mrf.mxu0
  %v3524 = vadd.f32 0.0, %v3523
  %v3525 = vpop.f32.mrf.mxu0
  %v3526 = vadd.f32 0.0, %v3525
  %v3527 = vpop.f32.mrf.mxu0
  %v3528 = vadd.f32 0.0, %v3527
  %v3529 = vpop.f32.mrf.mxu0
  %v3530 = vadd.f32 0.0, %v3529
  %3531 = vmatprep.mubr.bf16.mxu0 %v904
  %3532 = vmatmul.mubr.bf16.gmra.mxu0 %v771
  %v3533 = vpop.f32.mrf.mxu0
  %v3534 = vadd.f32 0.0, %v3533
  %v3535 = vpop.f32.mrf.mxu0
  %v3536 = vadd.f32 0.0, %v3535
  %v3537 = vpop.f32.mrf.mxu0
  %v3538 = vadd.f32 0.0, %v3537
  %v3539 = vpop.f32.mrf.mxu0
  %v3540 = vadd.f32 0.0, %v3539
  %3541 = vmatprep.mubr.bf16.mxu0 %v907
  %3542 = vmatmul.mubr.bf16.gmra.mxu0 %v773
  %v3543 = vpop.f32.mrf.mxu0
  %v3544 = vadd.f32 0.0, %v3543
  %v3545 = vpop.f32.mrf.mxu0
  %v3546 = vadd.f32 0.0, %v3545
  %v3547 = vpop.f32.mrf.mxu0
  %v3548 = vadd.f32 0.0, %v3547
  %v3549 = vpop.f32.mrf.mxu0
  %v3550 = vadd.f32 0.0, %v3549
  %3551 = vmatprep.mubr.bf16.mxu0 %v910
  %3552 = vmatmul.mubr.bf16.gmra.mxu0 %v775
  %v3553 = vpop.f32.mrf.mxu0
  %v3554 = vadd.f32 0.0, %v3553
  %v3555 = vpop.f32.mrf.mxu0
  %v3556 = vadd.f32 0.0, %v3555
  %v3557 = vpop.f32.mrf.mxu0
  %v3558 = vadd.f32 0.0, %v3557
  %v3559 = vpop.f32.mrf.mxu0
  %v3560 = vadd.f32 0.0, %v3559
  %3561 = vmatprep.mubr.bf16.mxu0 %v913
  %3562 = vmatmul.mubr.bf16.gmra.mxu0 %v777
  %v3563 = vpop.f32.mrf.mxu0
  %v3564 = vadd.f32 0.0, %v3563
  %v3565 = vpop.f32.mrf.mxu0
  %v3566 = vadd.f32 0.0, %v3565
  %v3567 = vpop.f32.mrf.mxu0
  %v3568 = vadd.f32 0.0, %v3567
  %v3569 = vpop.f32.mrf.mxu0
  %v3570 = vadd.f32 0.0, %v3569
  %3571 = vmatprep.mubr.bf16.mxu0 %v916
  %3572 = vmatmul.mubr.bf16.gmra.mxu0 %v779
  %v3573 = vpop.f32.mrf.mxu0
  %v3574 = vadd.f32 0.0, %v3573
  %v3575 = vpop.f32.mrf.mxu0
  %v3576 = vadd.f32 0.0, %v3575
  %v3577 = vpop.f32.mrf.mxu0
  %v3578 = vadd.f32 0.0, %v3577
  %v3579 = vpop.f32.mrf.mxu0
  %v3580 = vadd.f32 0.0, %v3579
  %3581 = vmatprep.mubr.bf16.mxu0 %v919
  %3582 = vmatmul.mubr.bf16.gmra.mxu0 %v781
  %v3583 = vpop.f32.mrf.mxu0
  %v3584 = vadd.f32 0.0, %v3583
  %v3585 = vpop.f32.mrf.mxu0
  %v3586 = vadd.f32 0.0, %v3585
  %v3587 = vpop.f32.mrf.mxu0
  %v3588 = vadd.f32 0.0, %v3587
  %v3589 = vpop.f32.mrf.mxu0
  %v3590 = vadd.f32 0.0, %v3589
  %3591 = vdwg.mxu0
  %v3592 = vpack.c.bf16 %v3498, %v3494
  %v3593 = vpack.c.bf16 %v3500, %v3496
  %v3594 = vpack.c.bf16 %v3508, %v3504
  %v3595 = vpack.c.bf16 %v3510, %v3506
  %v3596 = vpack.c.bf16 %v3518, %v3514
  %v3597 = vpack.c.bf16 %v3520, %v3516
  %v3598 = vpack.c.bf16 %v3528, %v3524
  %v3599 = vpack.c.bf16 %v3530, %v3526
  %v3600 = vpack.c.bf16 %v3538, %v3534
  %v3601 = vpack.c.bf16 %v3540, %v3536
  %v3602 = vpack.c.bf16 %v3548, %v3544
  %v3603 = vpack.c.bf16 %v3550, %v3546
  %v3604 = vpack.c.bf16 %v3558, %v3554
  %v3605 = vpack.c.bf16 %v3560, %v3556
  %v3606 = vpack.c.bf16 %v3568, %v3564
  %v3607 = vpack.c.bf16 %v3570, %v3566
  %v3608 = vpack.c.bf16 %v3578, %v3574
  %v3609 = vpack.c.bf16 %v3580, %v3576
  %v3610 = vpack.c.bf16 %v3588, %v3584
  %v3611 = vpack.c.bf16 %v3590, %v3586
  %s3612 = scalar_lea.vmem %s3, 800
  %v3613 = vld [vmem:[%s3612] sm:$0xff]
  %v3614 = vld [vmem:[%s3612 + $0x8] sm:$0xff]
  %v3615 = vld [vmem:[%s3612 + $0x10] sm:$0xff]
  %v3616 = vld [vmem:[%s3612 + $0x18] sm:$0xff]
  %v3617 = vld [vmem:[%s3612 + $0x20] sm:$0xff]
  %v3618 = vld [vmem:[%s3612 + $0x28] sm:$0xff]
  %v3619 = vld [vmem:[%s3612 + $0x30] sm:$0xff]
  %v3620 = vld [vmem:[%s3612 + $0x38] sm:$0xff]
  %v3621 = vld [vmem:[%s3612 + $0x40] sm:$0xff]
  %v3622 = vld [vmem:[%s3612 + $0x48] sm:$0xff]
  %v3623 = vld [vmem:[%s3612 + $0x50] sm:$0xff]
  %v3624 = vld [vmem:[%s3612 + $0x58] sm:$0xff]
  %v3625 = vld [vmem:[%s3612 + $0x60] sm:$0xff]
  %v3626 = vld [vmem:[%s3612 + $0x68] sm:$0xff]
  %v3627 = vld [vmem:[%s3612 + $0x70] sm:$0xff]
  %v3628 = vld [vmem:[%s3612 + $0x78] sm:$0xff]
  %v3629 = vld [vmem:[%s3612 + $0x80] sm:$0xff]
  %v3630 = vld [vmem:[%s3612 + $0x88] sm:$0xff]
  %v3631 = vld [vmem:[%s3612 + $0x90] sm:$0xff]
  %v3632 = vld [vmem:[%s3612 + $0x98] sm:$0xff]
  %v3653 = vunpack.c.l.b16 %v3613
  %v3654 = vunpack.c.h.b16 %v3613
  %v3655 = vunpack.c.l.b16 %v3614
  %v3656 = vunpack.c.h.b16 %v3614
  %v3657 = vunpack.c.l.b16 %v3615
  %v3658 = vunpack.c.h.b16 %v3615
  %v3659 = vunpack.c.l.b16 %v3616
  %v3660 = vunpack.c.h.b16 %v3616
  %v3661 = vunpack.c.l.b16 %v3617
  %v3662 = vunpack.c.h.b16 %v3617
  %v3663 = vunpack.c.l.b16 %v3618
  %v3664 = vunpack.c.h.b16 %v3618
  %v3665 = vunpack.c.l.b16 %v3619
  %v3666 = vunpack.c.h.b16 %v3619
  %v3667 = vunpack.c.l.b16 %v3620
  %v3668 = vunpack.c.h.b16 %v3620
  %v3669 = vunpack.c.l.b16 %v3621
  %v3670 = vunpack.c.h.b16 %v3621
  %v3671 = vunpack.c.l.b16 %v3622
  %v3672 = vunpack.c.h.b16 %v3622
  %v3673 = vunpack.c.l.b16 %v3623
  %v3674 = vunpack.c.h.b16 %v3623
  %v3675 = vunpack.c.l.b16 %v3624
  %v3676 = vunpack.c.h.b16 %v3624
  %v3677 = vunpack.c.l.b16 %v3625
  %v3678 = vunpack.c.h.b16 %v3625
  %v3679 = vunpack.c.l.b16 %v3626
  %v3680 = vunpack.c.h.b16 %v3626
  %v3681 = vunpack.c.l.b16 %v3627
  %v3682 = vunpack.c.h.b16 %v3627
  %v3683 = vunpack.c.l.b16 %v3628
  %v3684 = vunpack.c.h.b16 %v3628
  %v3685 = vunpack.c.l.b16 %v3629
  %v3686 = vunpack.c.h.b16 %v3629
  %v3687 = vunpack.c.l.b16 %v3630
  %v3688 = vunpack.c.h.b16 %v3630
  %v3689 = vunpack.c.l.b16 %v3631
  %v3690 = vunpack.c.h.b16 %v3631
  %v3691 = vunpack.c.l.b16 %v3632
  %v3692 = vunpack.c.h.b16 %v3632
  %v3693 = vpack.c.b16 %v3655, %v3653
  %v3694 = vpack.c.b16 %v3656, %v3654
  %v3695 = vpack.c.b16 %v3659, %v3657
  %v3696 = vpack.c.b16 %v3660, %v3658
  %v3697 = vpack.c.b16 %v3663, %v3661
  %v3698 = vpack.c.b16 %v3664, %v3662
  %v3699 = vpack.c.b16 %v3667, %v3665
  %v3700 = vpack.c.b16 %v3668, %v3666
  %v3701 = vpack.c.b16 %v3671, %v3669
  %v3702 = vpack.c.b16 %v3672, %v3670
  %v3703 = vpack.c.b16 %v3675, %v3673
  %v3704 = vpack.c.b16 %v3676, %v3674
  %v3705 = vpack.c.b16 %v3679, %v3677
  %v3706 = vpack.c.b16 %v3680, %v3678
  %v3707 = vpack.c.b16 %v3683, %v3681
  %v3708 = vpack.c.b16 %v3684, %v3682
  %v3709 = vpack.c.b16 %v3687, %v3685
  %v3710 = vpack.c.b16 %v3688, %v3686
  %v3711 = vpack.c.b16 %v3691, %v3689
  %v3712 = vpack.c.b16 %v3692, %v3690
  %v3724 = vsel %vm1467, %v3694, 0
  %v3727 = vsel %vm1467, %v3696, 0
  %v3730 = vsel %vm1467, %v3698, 0
  %v3733 = vsel %vm1467, %v3700, 0
  %v3736 = vsel %vm1467, %v3702, 0
  %v3739 = vsel %vm1467, %v3704, 0
  %v3742 = vsel %vm1467, %v3706, 0
  %v3745 = vsel %vm1467, %v3708, 0
  %v3748 = vsel %vm1467, %v3710, 0
  %v3751 = vsel %vm1467, %v3712, 0
  %3753 = vmatprep.subr.bf16.mxu0 %v3607
  %3754 = vmatpush1.bf16.msra.mxu0 %v3606
  %3755 = vmatprep.subr.bf16.mxu0 %v3605
  %3756 = vmatpush1.bf16.msra.mxu0 %v3604
  %3757 = vmatprep.subr.bf16.mxu0 %v3603
  %3758 = vmatpush1.bf16.msra.mxu0 %v3602
  %3759 = vmatprep.subr.bf16.mxu0 %v3601
  %3760 = vmatpush1.bf16.msra.mxu0 %v3600
  %3761 = vmatprep.subr.bf16.mxu0 %v3599
  %3762 = vmatpush1.bf16.msra.mxu0 %v3598
  %3763 = vmatprep.subr.bf16.mxu0 %v3597
  %3764 = vmatpush1.bf16.msra.mxu0 %v3596
  %3765 = vmatprep.subr.bf16.mxu0 %v3595
  %3766 = vmatpush1.bf16.msra.mxu0 %v3594
  %3767 = vmatprep.subr.bf16.mxu0 %v3593
  %3768 = vmatpush1.bf16.msra.mxu0 %v3592
  %3769 = vmatprep.subr.bf16.mxu0 0
  %3770 = vmatpush2.bf16.msra.mxu0 0
  %3771 = vmatprep.subr.bf16.mxu0 0
  %3772 = vmatpush2.bf16.msra.mxu0 0
  %3773 = vmatprep.subr.bf16.mxu0 0
  %3774 = vmatpush2.bf16.msra.mxu0 0
  %3775 = vmatprep.subr.bf16.mxu0 0
  %3776 = vmatpush2.bf16.msra.mxu0 0
  %3777 = vmatprep.subr.bf16.mxu0 0
  %3778 = vmatpush2.bf16.msra.mxu0 0
  %3779 = vmatprep.subr.bf16.mxu0 0
  %3780 = vmatpush2.bf16.msra.mxu0 0
  %3781 = vmatprep.subr.bf16.mxu0 %v3611
  %3782 = vmatpush2.bf16.msra.mxu0 %v3610
  %3783 = vmatprep.subr.bf16.mxu0 %v3609
  %3784 = vmatpush2.bf16.msra.mxu0 %v3608
  %3785 = vmatprep.mubr.bf16.mxu0 %v3724
  %3786 = vmatmul.mubr.bf16.gmra.mxu0 %v3693
  %v3787 = vpop.f32.mrf.mxu0
  %v3788 = vadd.f32 0.0, %v3787
  %v3789 = vpop.f32.mrf.mxu0
  %v3790 = vadd.f32 0.0, %v3789
  %v3791 = vpop.f32.mrf.mxu0
  %v3792 = vadd.f32 0.0, %v3791
  %v3793 = vpop.f32.mrf.mxu0
  %v3794 = vadd.f32 0.0, %v3793
  %3795 = vmatprep.mubr.bf16.mxu0 %v3727
  %3796 = vmatmul.mubr.bf16.gmra.mxu0 %v3695
  %v3797 = vpop.f32.mrf.mxu0
  %v3798 = vadd.f32 0.0, %v3797
  %v3799 = vpop.f32.mrf.mxu0
  %v3800 = vadd.f32 0.0, %v3799
  %v3801 = vpop.f32.mrf.mxu0
  %v3802 = vadd.f32 0.0, %v3801
  %v3803 = vpop.f32.mrf.mxu0
  %v3804 = vadd.f32 0.0, %v3803
  %3805 = vmatprep.mubr.bf16.mxu0 %v3730
  %3806 = vmatmul.mubr.bf16.gmra.mxu0 %v3697
  %v3807 = vpop.f32.mrf.mxu0
  %v3808 = vadd.f32 0.0, %v3807
  %v3809 = vpop.f32.mrf.mxu0
  %v3810 = vadd.f32 0.0, %v3809
  %v3811 = vpop.f32.mrf.mxu0
  %v3812 = vadd.f32 0.0, %v3811
  %v3813 = vpop.f32.mrf.mxu0
  %v3814 = vadd.f32 0.0, %v3813
  %3815 = vmatprep.mubr.bf16.mxu0 %v3733
  %3816 = vmatmul.mubr.bf16.gmra.mxu0 %v3699
  %v3817 = vpop.f32.mrf.mxu0
  %v3818 = vadd.f32 0.0, %v3817
  %v3819 = vpop.f32.mrf.mxu0
  %v3820 = vadd.f32 0.0, %v3819
  %v3821 = vpop.f32.mrf.mxu0
  %v3822 = vadd.f32 0.0, %v3821
  %v3823 = vpop.f32.mrf.mxu0
  %v3824 = vadd.f32 0.0, %v3823
  %3825 = vmatprep.mubr.bf16.mxu0 %v3736
  %3826 = vmatmul.mubr.bf16.gmra.mxu0 %v3701
  %v3827 = vpop.f32.mrf.mxu0
  %v3828 = vadd.f32 0.0, %v3827
  %v3829 = vpop.f32.mrf.mxu0
  %v3830 = vadd.f32 0.0, %v3829
  %v3831 = vpop.f32.mrf.mxu0
  %v3832 = vadd.f32 0.0, %v3831
  %v3833 = vpop.f32.mrf.mxu0
  %v3834 = vadd.f32 0.0, %v3833
  %3835 = vmatprep.mubr.bf16.mxu0 %v3739
  %3836 = vmatmul.mubr.bf16.gmra.mxu0 %v3703
  %v3837 = vpop.f32.mrf.mxu0
  %v3838 = vadd.f32 0.0, %v3837
  %v3839 = vpop.f32.mrf.mxu0
  %v3840 = vadd.f32 0.0, %v3839
  %v3841 = vpop.f32.mrf.mxu0
  %v3842 = vadd.f32 0.0, %v3841
  %v3843 = vpop.f32.mrf.mxu0
  %v3844 = vadd.f32 0.0, %v3843
  %3845 = vmatprep.mubr.bf16.mxu0 %v3742
  %3846 = vmatmul.mubr.bf16.gmra.mxu0 %v3705
  %v3847 = vpop.f32.mrf.mxu0
  %v3848 = vadd.f32 0.0, %v3847
  %v3849 = vpop.f32.mrf.mxu0
  %v3850 = vadd.f32 0.0, %v3849
  %v3851 = vpop.f32.mrf.mxu0
  %v3852 = vadd.f32 0.0, %v3851
  %v3853 = vpop.f32.mrf.mxu0
  %v3854 = vadd.f32 0.0, %v3853
  %3855 = vmatprep.mubr.bf16.mxu0 %v3745
  %3856 = vmatmul.mubr.bf16.gmra.mxu0 %v3707
  %v3857 = vpop.f32.mrf.mxu0
  %v3858 = vadd.f32 0.0, %v3857
  %v3859 = vpop.f32.mrf.mxu0
  %v3860 = vadd.f32 0.0, %v3859
  %v3861 = vpop.f32.mrf.mxu0
  %v3862 = vadd.f32 0.0, %v3861
  %v3863 = vpop.f32.mrf.mxu0
  %v3864 = vadd.f32 0.0, %v3863
  %3865 = vmatprep.mubr.bf16.mxu0 %v3748
  %3866 = vmatmul.mubr.bf16.gmra.mxu0 %v3709
  %v3867 = vpop.f32.mrf.mxu0
  %v3868 = vadd.f32 0.0, %v3867
  %v3869 = vpop.f32.mrf.mxu0
  %v3870 = vadd.f32 0.0, %v3869
  %v3871 = vpop.f32.mrf.mxu0
  %v3872 = vadd.f32 0.0, %v3871
  %v3873 = vpop.f32.mrf.mxu0
  %v3874 = vadd.f32 0.0, %v3873
  %3875 = vmatprep.mubr.bf16.mxu0 %v3751
  %3876 = vmatmul.mubr.bf16.gmra.mxu0 %v3711
  %v3877 = vpop.f32.mrf.mxu0
  %v3878 = vadd.f32 0.0, %v3877
  %v3879 = vpop.f32.mrf.mxu0
  %v3880 = vadd.f32 0.0, %v3879
  %v3881 = vpop.f32.mrf.mxu0
  %v3882 = vadd.f32 0.0, %v3881
  %v3883 = vpop.f32.mrf.mxu0
  %v3884 = vadd.f32 0.0, %v3883
  %3885 = vdwg.mxu0
  %v3886 = vadd.f32 %v3310, %v3788
  %v3887 = vadd.f32 %v3311, %v3790
  %v3888 = vadd.f32 %v3312, %v3792
  %v3889 = vadd.f32 %v3313, %v3794
  %v3890 = vadd.f32 %v3314, %v3798
  %v3891 = vadd.f32 %v3315, %v3800
  %v3892 = vadd.f32 %v3316, %v3802
  %v3893 = vadd.f32 %v3317, %v3804
  %v3894 = vadd.f32 %v3318, %v3808
  %v3895 = vadd.f32 %v3319, %v3810
  %v3896 = vadd.f32 %v3320, %v3812
  %v3897 = vadd.f32 %v3321, %v3814
  %v3898 = vadd.f32 %v3322, %v3818
  %v3899 = vadd.f32 %v3323, %v3820
  %v3900 = vadd.f32 %v3324, %v3822
  %v3901 = vadd.f32 %v3325, %v3824
  %v3902 = vadd.f32 %v3326, %v3828
  %v3903 = vadd.f32 %v3327, %v3830
  %v3904 = vadd.f32 %v3328, %v3832
  %v3905 = vadd.f32 %v3329, %v3834
  %v3906 = vadd.f32 %v3330, %v3838
  %v3907 = vadd.f32 %v3331, %v3840
  %v3908 = vadd.f32 %v3332, %v3842
  %v3909 = vadd.f32 %v3333, %v3844
  %v3910 = vadd.f32 %v3334, %v3848
  %v3911 = vadd.f32 %v3335, %v3850
  %v3912 = vadd.f32 %v3336, %v3852
  %v3913 = vadd.f32 %v3337, %v3854
  %v3914 = vadd.f32 %v3338, %v3858
  %v3915 = vadd.f32 %v3339, %v3860
  %v3916 = vadd.f32 %v3340, %v3862
  %v3917 = vadd.f32 %v3341, %v3864
  %v3918 = vadd.f32 %v3342, %v3868
  %v3919 = vadd.f32 %v3343, %v3870
  %v3920 = vadd.f32 %v3344, %v3872
  %v3921 = vadd.f32 %v3345, %v3874
  %v3922 = vadd.f32 %v3346, %v3878
  %v3923 = vadd.f32 %v3347, %v3880
  %v3924 = vadd.f32 %v3348, %v3882
  %v3925 = vadd.f32 %v3349, %v3884
  %s3926 = scalar_lea.vmem %s4, 720
  %v3927 = vld [vmem:[%s3926] sm:$0xff]
  %v3928 = vld [vmem:[%s3926 + $0x8] sm:$0xff]
  %v3929 = vld [vmem:[%s3926 + $0x10] sm:$0xff]
  %v3930 = vld [vmem:[%s3926 + $0x18] sm:$0xff]
  %v3931 = vld [vmem:[%s3926 + $0x20] sm:$0xff]
  %v3932 = vld [vmem:[%s3926 + $0x28] sm:$0xff]
  %v3933 = vld [vmem:[%s3926 + $0x30] sm:$0xff]
  %v3934 = vld [vmem:[%s3926 + $0x38] sm:$0xff]
  %v3935 = vld [vmem:[%s3926 + $0x40] sm:$0xff]
  %v3936 = vld [vmem:[%s3926 + $0x48] sm:$0xff]
  %v3937 = vld [vmem:[%s3926 + $0x50] sm:$0xff]
  %v3938 = vld [vmem:[%s3926 + $0x58] sm:$0xff]
  %v3939 = vld [vmem:[%s3926 + $0x60] sm:$0xff]
  %v3940 = vld [vmem:[%s3926 + $0x68] sm:$0xff]
  %v3941 = vld [vmem:[%s3926 + $0x70] sm:$0xff]
  %v3942 = vld [vmem:[%s3926 + $0x78] sm:$0xff]
  %v3943 = vld [vmem:[%s3926 + $0x80] sm:$0xff]
  %v3944 = vld [vmem:[%s3926 + $0x88] sm:$0xff]
  %v3963 = vunpack.c.l.b16 %v3927
  %v3964 = vunpack.c.h.b16 %v3927
  %v3965 = vunpack.c.l.b16 %v3928
  %v3966 = vunpack.c.h.b16 %v3928
  %v3967 = vunpack.c.l.b16 %v3929
  %v3968 = vunpack.c.h.b16 %v3929
  %v3969 = vunpack.c.l.b16 %v3930
  %v3970 = vunpack.c.h.b16 %v3930
  %v3971 = vunpack.c.l.b16 %v3931
  %v3972 = vunpack.c.h.b16 %v3931
  %v3973 = vunpack.c.l.b16 %v3932
  %v3974 = vunpack.c.h.b16 %v3932
  %v3975 = vunpack.c.l.b16 %v3933
  %v3976 = vunpack.c.h.b16 %v3933
  %v3977 = vunpack.c.l.b16 %v3934
  %v3978 = vunpack.c.h.b16 %v3934
  %v3979 = vunpack.c.l.b16 %v3935
  %v3980 = vunpack.c.h.b16 %v3935
  %v3981 = vunpack.c.l.b16 %v3936
  %v3982 = vunpack.c.h.b16 %v3936
  %v3983 = vunpack.c.l.b16 %v3937
  %v3984 = vunpack.c.h.b16 %v3937
  %v3985 = vunpack.c.l.b16 %v3938
  %v3986 = vunpack.c.h.b16 %v3938
  %v3987 = vunpack.c.l.b16 %v3939
  %v3988 = vunpack.c.h.b16 %v3939
  %v3989 = vunpack.c.l.b16 %v3940
  %v3990 = vunpack.c.h.b16 %v3940
  %v3991 = vunpack.c.l.b16 %v3941
  %v3992 = vunpack.c.h.b16 %v3941
  %v3993 = vunpack.c.l.b16 %v3942
  %v3994 = vunpack.c.h.b16 %v3942
  %v3995 = vunpack.c.l.b16 %v3943
  %v3996 = vunpack.c.h.b16 %v3943
  %v3997 = vunpack.c.l.b16 %v3944
  %v3998 = vunpack.c.h.b16 %v3944
  %v3999 = vpack.c.b16 %v3965, %v3963
  %v4000 = vpack.c.b16 %v3966, %v3964
  %v4001 = vpack.c.b16 %v3969, %v3967
  %v4002 = vpack.c.b16 %v3970, %v3968
  %v4003 = vpack.c.b16 %v3973, %v3971
  %v4004 = vpack.c.b16 %v3974, %v3972
  %v4005 = vpack.c.b16 %v3977, %v3975
  %v4006 = vpack.c.b16 %v3978, %v3976
  %v4007 = vpack.c.b16 %v3981, %v3979
  %v4008 = vpack.c.b16 %v3982, %v3980
  %v4009 = vpack.c.b16 %v3985, %v3983
  %v4010 = vpack.c.b16 %v3986, %v3984
  %v4011 = vpack.c.b16 %v3989, %v3987
  %v4012 = vpack.c.b16 %v3990, %v3988
  %v4013 = vpack.c.b16 %v3993, %v3991
  %v4014 = vpack.c.b16 %v3994, %v3992
  %v4015 = vpack.c.b16 %v3997, %v3995
  %v4016 = vpack.c.b16 %v3998, %v3996
  %4035 = vmatprep.subr.bf16.mxu0 %v4014
  %4036 = vmatpush1.bf16.msra.mxu0 %v4013
  %4037 = vmatprep.subr.bf16.mxu0 %v4012
  %4038 = vmatpush1.bf16.msra.mxu0 %v4011
  %4039 = vmatprep.subr.bf16.mxu0 %v4010
  %4040 = vmatpush1.bf16.msra.mxu0 %v4009
  %4041 = vmatprep.subr.bf16.mxu0 %v4008
  %4042 = vmatpush1.bf16.msra.mxu0 %v4007
  %4043 = vmatprep.subr.bf16.mxu0 %v4006
  %4044 = vmatpush1.bf16.msra.mxu0 %v4005
  %4045 = vmatprep.subr.bf16.mxu0 %v4004
  %4046 = vmatpush1.bf16.msra.mxu0 %v4003
  %4047 = vmatprep.subr.bf16.mxu0 %v4002
  %4048 = vmatpush1.bf16.msra.mxu0 %v4001
  %4049 = vmatprep.subr.bf16.mxu0 %v4000
  %4050 = vmatpush1.bf16.msra.mxu0 %v3999
  %4051 = vmatprep.subr.bf16.mxu0 0
  %4052 = vmatpush2.bf16.msra.mxu0 0
  %4053 = vmatprep.subr.bf16.mxu0 0
  %4054 = vmatpush2.bf16.msra.mxu0 0
  %4055 = vmatprep.subr.bf16.mxu0 0
  %4056 = vmatpush2.bf16.msra.mxu0 0
  %4057 = vmatprep.subr.bf16.mxu0 0
  %4058 = vmatpush2.bf16.msra.mxu0 0
  %4059 = vmatprep.subr.bf16.mxu0 0
  %4060 = vmatpush2.bf16.msra.mxu0 0
  %4061 = vmatprep.subr.bf16.mxu0 0
  %4062 = vmatpush2.bf16.msra.mxu0 0
  %4063 = vmatprep.subr.bf16.mxu0 0
  %4064 = vmatpush2.bf16.msra.mxu0 0
  %4065 = vmatprep.subr.bf16.mxu0 %v4016
  %4066 = vmatpush2.bf16.msra.mxu0 %v4015
  %4067 = vmatprep.mubr.bf16.mxu0 %v892
  %4068 = vmatmul.mubr.bf16.gmra.mxu0 %v763
  %v4069 = vpop.f32.mrf.mxu0
  %v4070 = vadd.f32 0.0, %v4069
  %v4071 = vpop.f32.mrf.mxu0
  %v4072 = vadd.f32 0.0, %v4071
  %v4073 = vpop.f32.mrf.mxu0
  %v4074 = vadd.f32 0.0, %v4073
  %v4075 = vpop.f32.mrf.mxu0
  %v4076 = vadd.f32 0.0, %v4075
  %4077 = vmatprep.mubr.bf16.mxu0 %v895
  %4078 = vmatmul.mubr.bf16.gmra.mxu0 %v765
  %v4079 = vpop.f32.mrf.mxu0
  %v4080 = vadd.f32 0.0, %v4079
  %v4081 = vpop.f32.mrf.mxu0
  %v4082 = vadd.f32 0.0, %v4081
  %v4083 = vpop.f32.mrf.mxu0
  %v4084 = vadd.f32 0.0, %v4083
  %v4085 = vpop.f32.mrf.mxu0
  %v4086 = vadd.f32 0.0, %v4085
  %4087 = vmatprep.mubr.bf16.mxu0 %v898
  %4088 = vmatmul.mubr.bf16.gmra.mxu0 %v767
  %v4089 = vpop.f32.mrf.mxu0
  %v4090 = vadd.f32 0.0, %v4089
  %v4091 = vpop.f32.mrf.mxu0
  %v4092 = vadd.f32 0.0, %v4091
  %v4093 = vpop.f32.mrf.mxu0
  %v4094 = vadd.f32 0.0, %v4093
  %v4095 = vpop.f32.mrf.mxu0
  %v4096 = vadd.f32 0.0, %v4095
  %4097 = vmatprep.mubr.bf16.mxu0 %v901
  %4098 = vmatmul.mubr.bf16.gmra.mxu0 %v769
  %v4099 = vpop.f32.mrf.mxu0
  %v4100 = vadd.f32 0.0, %v4099
  %v4101 = vpop.f32.mrf.mxu0
  %v4102 = vadd.f32 0.0, %v4101
  %v4103 = vpop.f32.mrf.mxu0
  %v4104 = vadd.f32 0.0, %v4103
  %v4105 = vpop.f32.mrf.mxu0
  %v4106 = vadd.f32 0.0, %v4105
  %4107 = vmatprep.mubr.bf16.mxu0 %v904
  %4108 = vmatmul.mubr.bf16.gmra.mxu0 %v771
  %v4109 = vpop.f32.mrf.mxu0
  %v4110 = vadd.f32 0.0, %v4109
  %v4111 = vpop.f32.mrf.mxu0
  %v4112 = vadd.f32 0.0, %v4111
  %v4113 = vpop.f32.mrf.mxu0
  %v4114 = vadd.f32 0.0, %v4113
  %v4115 = vpop.f32.mrf.mxu0
  %v4116 = vadd.f32 0.0, %v4115
  %4117 = vmatprep.mubr.bf16.mxu0 %v907
  %4118 = vmatmul.mubr.bf16.gmra.mxu0 %v773
  %v4119 = vpop.f32.mrf.mxu0
  %v4120 = vadd.f32 0.0, %v4119
  %v4121 = vpop.f32.mrf.mxu0
  %v4122 = vadd.f32 0.0, %v4121
  %v4123 = vpop.f32.mrf.mxu0
  %v4124 = vadd.f32 0.0, %v4123
  %v4125 = vpop.f32.mrf.mxu0
  %v4126 = vadd.f32 0.0, %v4125
  %4127 = vmatprep.mubr.bf16.mxu0 %v910
  %4128 = vmatmul.mubr.bf16.gmra.mxu0 %v775
  %v4129 = vpop.f32.mrf.mxu0
  %v4130 = vadd.f32 0.0, %v4129
  %v4131 = vpop.f32.mrf.mxu0
  %v4132 = vadd.f32 0.0, %v4131
  %v4133 = vpop.f32.mrf.mxu0
  %v4134 = vadd.f32 0.0, %v4133
  %v4135 = vpop.f32.mrf.mxu0
  %v4136 = vadd.f32 0.0, %v4135
  %4137 = vmatprep.mubr.bf16.mxu0 %v913
  %4138 = vmatmul.mubr.bf16.gmra.mxu0 %v777
  %v4139 = vpop.f32.mrf.mxu0
  %v4140 = vadd.f32 0.0, %v4139
  %v4141 = vpop.f32.mrf.mxu0
  %v4142 = vadd.f32 0.0, %v4141
  %v4143 = vpop.f32.mrf.mxu0
  %v4144 = vadd.f32 0.0, %v4143
  %v4145 = vpop.f32.mrf.mxu0
  %v4146 = vadd.f32 0.0, %v4145
  %4147 = vmatprep.mubr.bf16.mxu0 %v916
  %4148 = vmatmul.mubr.bf16.gmra.mxu0 %v779
  %v4149 = vpop.f32.mrf.mxu0
  %v4150 = vadd.f32 0.0, %v4149
  %v4151 = vpop.f32.mrf.mxu0
  %v4152 = vadd.f32 0.0, %v4151
  %v4153 = vpop.f32.mrf.mxu0
  %v4154 = vadd.f32 0.0, %v4153
  %v4155 = vpop.f32.mrf.mxu0
  %v4156 = vadd.f32 0.0, %v4155
  %4157 = vmatprep.mubr.bf16.mxu0 %v919
  %4158 = vmatmul.mubr.bf16.gmra.mxu0 %v781
  %v4159 = vpop.f32.mrf.mxu0
  %v4160 = vadd.f32 0.0, %v4159
  %v4161 = vpop.f32.mrf.mxu0
  %v4162 = vadd.f32 0.0, %v4161
  %v4163 = vpop.f32.mrf.mxu0
  %v4164 = vadd.f32 0.0, %v4163
  %v4165 = vpop.f32.mrf.mxu0
  %v4166 = vadd.f32 0.0, %v4165
  %4167 = vdwg.mxu0
  %v4168 = vpack.c.bf16 %v4074, %v4070
  %v4169 = vpack.c.bf16 %v4076, %v4072
  %v4170 = vpack.c.bf16 %v4084, %v4080
  %v4171 = vpack.c.bf16 %v4086, %v4082
  %v4172 = vpack.c.bf16 %v4094, %v4090
  %v4173 = vpack.c.bf16 %v4096, %v4092
  %v4174 = vpack.c.bf16 %v4104, %v4100
  %v4175 = vpack.c.bf16 %v4106, %v4102
  %v4176 = vpack.c.bf16 %v4114, %v4110
  %v4177 = vpack.c.bf16 %v4116, %v4112
  %v4178 = vpack.c.bf16 %v4124, %v4120
  %v4179 = vpack.c.bf16 %v4126, %v4122
  %v4180 = vpack.c.bf16 %v4134, %v4130
  %v4181 = vpack.c.bf16 %v4136, %v4132
  %v4182 = vpack.c.bf16 %v4144, %v4140
  %v4183 = vpack.c.bf16 %v4146, %v4142
  %v4184 = vpack.c.bf16 %v4154, %v4150
  %v4185 = vpack.c.bf16 %v4156, %v4152
  %v4186 = vpack.c.bf16 %v4164, %v4160
  %v4187 = vpack.c.bf16 %v4166, %v4162
  %s4188 = scalar_lea.vmem %s3, 960
  %v4189 = vld [vmem:[%s4188] sm:$0xff]
  %v4190 = vld [vmem:[%s4188 + $0x8] sm:$0xff]
  %v4191 = vld [vmem:[%s4188 + $0x10] sm:$0xff]
  %v4192 = vld [vmem:[%s4188 + $0x18] sm:$0xff]
  %v4193 = vld [vmem:[%s4188 + $0x20] sm:$0xff]
  %v4194 = vld [vmem:[%s4188 + $0x28] sm:$0xff]
  %v4195 = vld [vmem:[%s4188 + $0x30] sm:$0xff]
  %v4196 = vld [vmem:[%s4188 + $0x38] sm:$0xff]
  %v4197 = vld [vmem:[%s4188 + $0x40] sm:$0xff]
  %v4198 = vld [vmem:[%s4188 + $0x48] sm:$0xff]
  %v4199 = vld [vmem:[%s4188 + $0x50] sm:$0xff]
  %v4200 = vld [vmem:[%s4188 + $0x58] sm:$0xff]
  %v4201 = vld [vmem:[%s4188 + $0x60] sm:$0xff]
  %v4202 = vld [vmem:[%s4188 + $0x68] sm:$0xff]
  %v4203 = vld [vmem:[%s4188 + $0x70] sm:$0xff]
  %v4204 = vld [vmem:[%s4188 + $0x78] sm:$0xff]
  %v4205 = vld [vmem:[%s4188 + $0x80] sm:$0xff]
  %v4206 = vld [vmem:[%s4188 + $0x88] sm:$0xff]
  %v4207 = vld [vmem:[%s4188 + $0x90] sm:$0xff]
  %v4208 = vld [vmem:[%s4188 + $0x98] sm:$0xff]
  %v4229 = vunpack.c.l.b16 %v4189
  %v4230 = vunpack.c.h.b16 %v4189
  %v4231 = vunpack.c.l.b16 %v4190
  %v4232 = vunpack.c.h.b16 %v4190
  %v4233 = vunpack.c.l.b16 %v4191
  %v4234 = vunpack.c.h.b16 %v4191
  %v4235 = vunpack.c.l.b16 %v4192
  %v4236 = vunpack.c.h.b16 %v4192
  %v4237 = vunpack.c.l.b16 %v4193
  %v4238 = vunpack.c.h.b16 %v4193
  %v4239 = vunpack.c.l.b16 %v4194
  %v4240 = vunpack.c.h.b16 %v4194
  %v4241 = vunpack.c.l.b16 %v4195
  %v4242 = vunpack.c.h.b16 %v4195
  %v4243 = vunpack.c.l.b16 %v4196
  %v4244 = vunpack.c.h.b16 %v4196
  %v4245 = vunpack.c.l.b16 %v4197
  %v4246 = vunpack.c.h.b16 %v4197
  %v4247 = vunpack.c.l.b16 %v4198
  %v4248 = vunpack.c.h.b16 %v4198
  %v4249 = vunpack.c.l.b16 %v4199
  %v4250 = vunpack.c.h.b16 %v4199
  %v4251 = vunpack.c.l.b16 %v4200
  %v4252 = vunpack.c.h.b16 %v4200
  %v4253 = vunpack.c.l.b16 %v4201
  %v4254 = vunpack.c.h.b16 %v4201
  %v4255 = vunpack.c.l.b16 %v4202
  %v4256 = vunpack.c.h.b16 %v4202
  %v4257 = vunpack.c.l.b16 %v4203
  %v4258 = vunpack.c.h.b16 %v4203
  %v4259 = vunpack.c.l.b16 %v4204
  %v4260 = vunpack.c.h.b16 %v4204
  %v4261 = vunpack.c.l.b16 %v4205
  %v4262 = vunpack.c.h.b16 %v4205
  %v4263 = vunpack.c.l.b16 %v4206
  %v4264 = vunpack.c.h.b16 %v4206
  %v4265 = vunpack.c.l.b16 %v4207
  %v4266 = vunpack.c.h.b16 %v4207
  %v4267 = vunpack.c.l.b16 %v4208
  %v4268 = vunpack.c.h.b16 %v4208
  %v4269 = vpack.c.b16 %v4231, %v4229
  %v4270 = vpack.c.b16 %v4232, %v4230
  %v4271 = vpack.c.b16 %v4235, %v4233
  %v4272 = vpack.c.b16 %v4236, %v4234
  %v4273 = vpack.c.b16 %v4239, %v4237
  %v4274 = vpack.c.b16 %v4240, %v4238
  %v4275 = vpack.c.b16 %v4243, %v4241
  %v4276 = vpack.c.b16 %v4244, %v4242
  %v4277 = vpack.c.b16 %v4247, %v4245
  %v4278 = vpack.c.b16 %v4248, %v4246
  %v4279 = vpack.c.b16 %v4251, %v4249
  %v4280 = vpack.c.b16 %v4252, %v4250
  %v4281 = vpack.c.b16 %v4255, %v4253
  %v4282 = vpack.c.b16 %v4256, %v4254
  %v4283 = vpack.c.b16 %v4259, %v4257
  %v4284 = vpack.c.b16 %v4260, %v4258
  %v4285 = vpack.c.b16 %v4263, %v4261
  %v4286 = vpack.c.b16 %v4264, %v4262
  %v4287 = vpack.c.b16 %v4267, %v4265
  %v4288 = vpack.c.b16 %v4268, %v4266
  %v4300 = vsel %vm1467, %v4270, 0
  %v4303 = vsel %vm1467, %v4272, 0
  %v4306 = vsel %vm1467, %v4274, 0
  %v4309 = vsel %vm1467, %v4276, 0
  %v4312 = vsel %vm1467, %v4278, 0
  %v4315 = vsel %vm1467, %v4280, 0
  %v4318 = vsel %vm1467, %v4282, 0
  %v4321 = vsel %vm1467, %v4284, 0
  %v4324 = vsel %vm1467, %v4286, 0
  %v4327 = vsel %vm1467, %v4288, 0
  %4329 = vmatprep.subr.bf16.mxu0 %v4183
  %4330 = vmatpush1.bf16.msra.mxu0 %v4182
  %4331 = vmatprep.subr.bf16.mxu0 %v4181
  %4332 = vmatpush1.bf16.msra.mxu0 %v4180
  %4333 = vmatprep.subr.bf16.mxu0 %v4179
  %4334 = vmatpush1.bf16.msra.mxu0 %v4178
  %4335 = vmatprep.subr.bf16.mxu0 %v4177
  %4336 = vmatpush1.bf16.msra.mxu0 %v4176
  %4337 = vmatprep.subr.bf16.mxu0 %v4175
  %4338 = vmatpush1.bf16.msra.mxu0 %v4174
  %4339 = vmatprep.subr.bf16.mxu0 %v4173
  %4340 = vmatpush1.bf16.msra.mxu0 %v4172
  %4341 = vmatprep.subr.bf16.mxu0 %v4171
  %4342 = vmatpush1.bf16.msra.mxu0 %v4170
  %4343 = vmatprep.subr.bf16.mxu0 %v4169
  %4344 = vmatpush1.bf16.msra.mxu0 %v4168
  %4345 = vmatprep.subr.bf16.mxu0 0
  %4346 = vmatpush2.bf16.msra.mxu0 0
  %4347 = vmatprep.subr.bf16.mxu0 0
  %4348 = vmatpush2.bf16.msra.mxu0 0
  %4349 = vmatprep.subr.bf16.mxu0 0
  %4350 = vmatpush2.bf16.msra.mxu0 0
  %4351 = vmatprep.subr.bf16.mxu0 0
  %4352 = vmatpush2.bf16.msra.mxu0 0
  %4353 = vmatprep.subr.bf16.mxu0 0
  %4354 = vmatpush2.bf16.msra.mxu0 0
  %4355 = vmatprep.subr.bf16.mxu0 0
  %4356 = vmatpush2.bf16.msra.mxu0 0
  %4357 = vmatprep.subr.bf16.mxu0 %v4187
  %4358 = vmatpush2.bf16.msra.mxu0 %v4186
  %4359 = vmatprep.subr.bf16.mxu0 %v4185
  %4360 = vmatpush2.bf16.msra.mxu0 %v4184
  %4361 = vmatprep.mubr.bf16.mxu0 %v4300
  %4362 = vmatmul.mubr.bf16.gmra.mxu0 %v4269
  %v4363 = vpop.f32.mrf.mxu0
  %v4364 = vadd.f32 0.0, %v4363
  %v4365 = vpop.f32.mrf.mxu0
  %v4366 = vadd.f32 0.0, %v4365
  %v4367 = vpop.f32.mrf.mxu0
  %v4368 = vadd.f32 0.0, %v4367
  %v4369 = vpop.f32.mrf.mxu0
  %v4370 = vadd.f32 0.0, %v4369
  %4371 = vmatprep.mubr.bf16.mxu0 %v4303
  %4372 = vmatmul.mubr.bf16.gmra.mxu0 %v4271
  %v4373 = vpop.f32.mrf.mxu0
  %v4374 = vadd.f32 0.0, %v4373
  %v4375 = vpop.f32.mrf.mxu0
  %v4376 = vadd.f32 0.0, %v4375
  %v4377 = vpop.f32.mrf.mxu0
  %v4378 = vadd.f32 0.0, %v4377
  %v4379 = vpop.f32.mrf.mxu0
  %v4380 = vadd.f32 0.0, %v4379
  %4381 = vmatprep.mubr.bf16.mxu0 %v4306
  %4382 = vmatmul.mubr.bf16.gmra.mxu0 %v4273
  %v4383 = vpop.f32.mrf.mxu0
  %v4384 = vadd.f32 0.0, %v4383
  %v4385 = vpop.f32.mrf.mxu0
  %v4386 = vadd.f32 0.0, %v4385
  %v4387 = vpop.f32.mrf.mxu0
  %v4388 = vadd.f32 0.0, %v4387
  %v4389 = vpop.f32.mrf.mxu0
  %v4390 = vadd.f32 0.0, %v4389
  %4391 = vmatprep.mubr.bf16.mxu0 %v4309
  %4392 = vmatmul.mubr.bf16.gmra.mxu0 %v4275
  %v4393 = vpop.f32.mrf.mxu0
  %v4394 = vadd.f32 0.0, %v4393
  %v4395 = vpop.f32.mrf.mxu0
  %v4396 = vadd.f32 0.0, %v4395
  %v4397 = vpop.f32.mrf.mxu0
  %v4398 = vadd.f32 0.0, %v4397
  %v4399 = vpop.f32.mrf.mxu0
  %v4400 = vadd.f32 0.0, %v4399
  %4401 = vmatprep.mubr.bf16.mxu0 %v4312
  %4402 = vmatmul.mubr.bf16.gmra.mxu0 %v4277
  %v4403 = vpop.f32.mrf.mxu0
  %v4404 = vadd.f32 0.0, %v4403
  %v4405 = vpop.f32.mrf.mxu0
  %v4406 = vadd.f32 0.0, %v4405
  %v4407 = vpop.f32.mrf.mxu0
  %v4408 = vadd.f32 0.0, %v4407
  %v4409 = vpop.f32.mrf.mxu0
  %v4410 = vadd.f32 0.0, %v4409
  %4411 = vmatprep.mubr.bf16.mxu0 %v4315
  %4412 = vmatmul.mubr.bf16.gmra.mxu0 %v4279
  %v4413 = vpop.f32.mrf.mxu0
  %v4414 = vadd.f32 0.0, %v4413
  %v4415 = vpop.f32.mrf.mxu0
  %v4416 = vadd.f32 0.0, %v4415
  %v4417 = vpop.f32.mrf.mxu0
  %v4418 = vadd.f32 0.0, %v4417
  %v4419 = vpop.f32.mrf.mxu0
  %v4420 = vadd.f32 0.0, %v4419
  %4421 = vmatprep.mubr.bf16.mxu0 %v4318
  %4422 = vmatmul.mubr.bf16.gmra.mxu0 %v4281
  %v4423 = vpop.f32.mrf.mxu0
  %v4424 = vadd.f32 0.0, %v4423
  %v4425 = vpop.f32.mrf.mxu0
  %v4426 = vadd.f32 0.0, %v4425
  %v4427 = vpop.f32.mrf.mxu0
  %v4428 = vadd.f32 0.0, %v4427
  %v4429 = vpop.f32.mrf.mxu0
  %v4430 = vadd.f32 0.0, %v4429
  %4431 = vmatprep.mubr.bf16.mxu0 %v4321
  %4432 = vmatmul.mubr.bf16.gmra.mxu0 %v4283
  %v4433 = vpop.f32.mrf.mxu0
  %v4434 = vadd.f32 0.0, %v4433
  %v4435 = vpop.f32.mrf.mxu0
  %v4436 = vadd.f32 0.0, %v4435
  %v4437 = vpop.f32.mrf.mxu0
  %v4438 = vadd.f32 0.0, %v4437
  %v4439 = vpop.f32.mrf.mxu0
  %v4440 = vadd.f32 0.0, %v4439
  %4441 = vmatprep.mubr.bf16.mxu0 %v4324
  %4442 = vmatmul.mubr.bf16.gmra.mxu0 %v4285
  %v4443 = vpop.f32.mrf.mxu0
  %v4444 = vadd.f32 0.0, %v4443
  %v4445 = vpop.f32.mrf.mxu0
  %v4446 = vadd.f32 0.0, %v4445
  %v4447 = vpop.f32.mrf.mxu0
  %v4448 = vadd.f32 0.0, %v4447
  %v4449 = vpop.f32.mrf.mxu0
  %v4450 = vadd.f32 0.0, %v4449
  %4451 = vmatprep.mubr.bf16.mxu0 %v4327
  %4452 = vmatmul.mubr.bf16.gmra.mxu0 %v4287
  %v4453 = vpop.f32.mrf.mxu0
  %v4454 = vadd.f32 0.0, %v4453
  %v4455 = vpop.f32.mrf.mxu0
  %v4456 = vadd.f32 0.0, %v4455
  %v4457 = vpop.f32.mrf.mxu0
  %v4458 = vadd.f32 0.0, %v4457
  %v4459 = vpop.f32.mrf.mxu0
  %v4460 = vadd.f32 0.0, %v4459
  %4461 = vdwg.mxu0
  %v4462 = vadd.f32 %v3886, %v4364
  %v4463 = vadd.f32 %v3887, %v4366
  %v4464 = vadd.f32 %v3888, %v4368
  %v4465 = vadd.f32 %v3889, %v4370
  %v4466 = vadd.f32 %v3890, %v4374
  %v4467 = vadd.f32 %v3891, %v4376
  %v4468 = vadd.f32 %v3892, %v4378
  %v4469 = vadd.f32 %v3893, %v4380
  %v4470 = vadd.f32 %v3894, %v4384
  %v4471 = vadd.f32 %v3895, %v4386
  %v4472 = vadd.f32 %v3896, %v4388
  %v4473 = vadd.f32 %v3897, %v4390
  %v4474 = vadd.f32 %v3898, %v4394
  %v4475 = vadd.f32 %v3899, %v4396
  %v4476 = vadd.f32 %v3900, %v4398
  %v4477 = vadd.f32 %v3901, %v4400
  %v4478 = vadd.f32 %v3902, %v4404
  %v4479 = vadd.f32 %v3903, %v4406
  %v4480 = vadd.f32 %v3904, %v4408
  %v4481 = vadd.f32 %v3905, %v4410
  %v4482 = vadd.f32 %v3906, %v4414
  %v4483 = vadd.f32 %v3907, %v4416
  %v4484 = vadd.f32 %v3908, %v4418
  %v4485 = vadd.f32 %v3909, %v4420
  %v4486 = vadd.f32 %v3910, %v4424
  %v4487 = vadd.f32 %v3911, %v4426
  %v4488 = vadd.f32 %v3912, %v4428
  %v4489 = vadd.f32 %v3913, %v4430
  %v4490 = vadd.f32 %v3914, %v4434
  %v4491 = vadd.f32 %v3915, %v4436
  %v4492 = vadd.f32 %v3916, %v4438
  %v4493 = vadd.f32 %v3917, %v4440
  %v4494 = vadd.f32 %v3918, %v4444
  %v4495 = vadd.f32 %v3919, %v4446
  %v4496 = vadd.f32 %v3920, %v4448
  %v4497 = vadd.f32 %v3921, %v4450
  %v4498 = vadd.f32 %v3922, %v4454
  %v4499 = vadd.f32 %v3923, %v4456
  %v4500 = vadd.f32 %v3924, %v4458
  %v4501 = vadd.f32 %v3925, %v4460
  %4502 = vst [vmem:[%s5] sm:$0xff] %v4462
  %4503 = vst.msk [vmem:[%s5 + $0x8] sm:$0xff] %vm61, %v4463
  %4504 = vst [vmem:[%s5 + $0x10] sm:$0xff] %v4464
  %4505 = vst.msk [vmem:[%s5 + $0x18] sm:$0xff] %vm61, %v4465
  %4506 = vst [vmem:[%s5 + $0x20] sm:$0xff] %v4466
  %4507 = vst.msk [vmem:[%s5 + $0x28] sm:$0xff] %vm61, %v4467
  %4508 = vst [vmem:[%s5 + $0x30] sm:$0xff] %v4468
  %4509 = vst.msk [vmem:[%s5 + $0x38] sm:$0xff] %vm61, %v4469
  %4510 = vst [vmem:[%s5 + $0x40] sm:$0xff] %v4470
  %4511 = vst.msk [vmem:[%s5 + $0x48] sm:$0xff] %vm61, %v4471
  %4512 = vst [vmem:[%s5 + $0x50] sm:$0xff] %v4472
  %4513 = vst.msk [vmem:[%s5 + $0x58] sm:$0xff] %vm61, %v4473
  %4514 = vst [vmem:[%s5 + $0x60] sm:$0xff] %v4474
  %4515 = vst.msk [vmem:[%s5 + $0x68] sm:$0xff] %vm61, %v4475
  %4516 = vst [vmem:[%s5 + $0x70] sm:$0xff] %v4476
  %4517 = vst.msk [vmem:[%s5 + $0x78] sm:$0xff] %vm61, %v4477
  %4518 = vst [vmem:[%s5 + $0x80] sm:$0xff] %v4478
  %4519 = vst.msk [vmem:[%s5 + $0x88] sm:$0xff] %vm61, %v4479
  %4520 = vst [vmem:[%s5 + $0x90] sm:$0xff] %v4480
  %4521 = vst.msk [vmem:[%s5 + $0x98] sm:$0xff] %vm61, %v4481
  %4522 = vst [vmem:[%s5 + $0xa0] sm:$0xff] %v4482
  %4523 = vst.msk [vmem:[%s5 + $0xa8] sm:$0xff] %vm61, %v4483
  %4524 = vst [vmem:[%s5 + $0xb0] sm:$0xff] %v4484
  %4525 = vst.msk [vmem:[%s5 + $0xb8] sm:$0xff] %vm61, %v4485
  %4526 = vst [vmem:[%s5 + $0xc0] sm:$0xff] %v4486
  %4527 = vst.msk [vmem:[%s5 + $0xc8] sm:$0xff] %vm61, %v4487
  %4528 = vst [vmem:[%s5 + $0xd0] sm:$0xff] %v4488
  %4529 = vst.msk [vmem:[%s5 + $0xd8] sm:$0xff] %vm61, %v4489
  %4530 = vst [vmem:[%s5 + $0xe0] sm:$0xff] %v4490
  %4531 = vst.msk [vmem:[%s5 + $0xe8] sm:$0xff] %vm61, %v4491
  %4532 = vst [vmem:[%s5 + $0xf0] sm:$0xff] %v4492
  %4533 = vst.msk [vmem:[%s5 + $0xf8] sm:$0xff] %vm61, %v4493
  %4534 = vst [vmem:[%s5 + $0x100] sm:$0xff] %v4494
  %4535 = vst.msk [vmem:[%s5 + $0x108] sm:$0xff] %vm61, %v4495
  %4536 = vst [vmem:[%s5 + $0x110] sm:$0xff] %v4496
  %4537 = vst.msk [vmem:[%s5 + $0x118] sm:$0xff] %vm61, %v4497
  %4538 = vst [vmem:[%s5 + $0x120] sm:$0xff] %v4498
  %4539 = vst.msk [vmem:[%s5 + $0x128] sm:$0xff] %vm61, %v4499
  %4540 = vst [vmem:[%s5 + $0x130] sm:$0xff] %v4500
  %4541 = vst.msk [vmem:[%s5 + $0x138] sm:$0xff] %vm61, %v4501
  // Predicated region
  $region22: #{batchnorm_relu_conv2d.1} parent=0 // pred_check
    _
  $region23: #{batchnorm_relu_conv2d.1} parent=0 // pred_check_branch
    %4543 = sbr.rel (0) target = $region25
  $region24: #{batchnorm_relu_conv2d.1} parent=0 // pred_region
    _
  $region25: #{batchnorm_relu_conv2d.1} parent=0 // pred_fallthru
    _
  // Predicated region
  $region26: #{batchnorm_relu_conv2d.1} parent=0 // pred_check
    _
  $region27: #{batchnorm_relu_conv2d.1} parent=0 // pred_check_branch
    %4545 = sbr.rel (0) target = $region29
  $region28: #{batchnorm_relu_conv2d.1} parent=0 // pred_region
    _
  $region29: #{batchnorm_relu_conv2d.1} parent=0 // pred_fallthru
    _

</llo_original>
